<compile_context>
chip_gen: v7x
topology: tpu7x:2x2x1
jax: 0.10.0
libtpu: 0.0.40
codegen_flags: <defaults>
</compile_context>

<pallas_src>
import math
import jax
import jax.numpy as jnp
from jax.experimental import pallas as pl
from jax.experimental.pallas import tpu as pltpu

DEFAULT_TB = 512   # batch tile (rows); multiple of 128 so inputs/outputs stay aligned


def _ranker_head_kernel(sent_ref, qg_ref, si_ref, d_ref,
                        wcls_ref, catw_ref, bcls_ref, out_ref):
    # sent/qg/si/d: [TB, E] (VMEM)   wcls: [1, E] (VMEM)
    # catw: [3] (SMEM)   bcls: [1] (SMEM)   out: [1, TB] (VMEM, lane-dense)
    emb = sent_ref.shape[-1]
    inv_sqrt = 1.0 / math.sqrt(emb)

    c0 = catw_ref[0] * inv_sqrt       # scalar reads from SMEM
    c1 = catw_ref[1] * inv_sqrt
    c2 = catw_ref[2]

    d = d_ref[...].astype(jnp.float32)
    combined = (c0 * (qg_ref[...].astype(jnp.float32) * d)
                + c1 * (si_ref[...].astype(jnp.float32) * d)
                + c2 * (sent_ref[...].astype(jnp.float32)
                        * wcls_ref[...].astype(jnp.float32)))

    # One cross-lane reduction per tile; store a lane-dense [1, TB] row.
    row = jnp.sum(combined, axis=1)                     # [TB]
    out_ref[...] = row[None, :] + c2 * bcls_ref[0]      # [1, TB]


def ranker_head(sent_rep, q_graph_emb, session_intent, d_emb,
                w_cls, b_cls, cat_w, *, tb=DEFAULT_TB):
    """Fused Ranker head.  Returns y_pred.squeeze(1) -> [B] (float32)."""
    B, E = sent_rep.shape
    assert E % 128 == 0, "emb size must be lane-aligned (multiple of 128)"

    w_cls = jnp.asarray(w_cls).reshape(1, E)
    cat_w = jnp.asarray(cat_w, jnp.float32).reshape(3)
    b_cls = jnp.asarray(b_cls, jnp.float32).reshape(-1)[:1]

    # Large lane-aligned batch tile, clamped so tiny batches don't over-pad.
    b_round = ((B + 127) // 128) * 128
    tb = max(128, (min(tb, b_round) // 128) * 128)
    b_pad = ((B + tb - 1) // tb) * tb
    grid = b_pad // tb

    feats = (sent_rep, q_graph_emb, session_intent, d_emb)
    if b_pad != B:
        # TODO(synk): padding copies the features once; producers could emit
        #             tile-aligned batches to avoid this extra HBM pass.
        feats = tuple(jnp.pad(f, ((0, b_pad - B), (0, 0))) for f in feats)

    feat_spec = pl.BlockSpec((tb, E), lambda i: (i, 0))
    smem_spec = pl.BlockSpec(memory_space=pltpu.MemorySpace.SMEM)

    out = pl.pallas_call(
        _ranker_head_kernel,
        out_shape=jax.ShapeDtypeStruct((1, b_pad), jnp.float32),
        grid=(grid,),
        in_specs=[feat_spec,                               # sent_rep
                  feat_spec,                               # q_graph_emb
                  feat_spec,                               # session_intent
                  feat_spec,                               # d_emb
                  pl.BlockSpec((1, E), lambda i: (0, 0)),  # classifier weight (VMEM)
                  smem_spec,                               # cat weight (SMEM)
                  smem_spec],                              # classifier bias (SMEM)
        out_specs=pl.BlockSpec((1, tb), lambda i: (0, i)),  # lane-dense output row
        compiler_params=pltpu.CompilerParams(
            dimension_semantics=("parallel",)),
    )(*feats, w_cls, cat_w, b_cls)

    return out[0, :B]   # y_pred.squeeze(1)


if __name__ == "__main__":
    key = jax.random.PRNGKey(0)
    B = 1000       # ragged batch -> exercises padding + multi-step grid
    EMB = 128      # config['embsize']
    N_IDS = 64     # size of graph_ember.content_encoder.id2emb table
    ks = jax.random.split(key, 8)

    # Stand-ins for external sub-module outputs (deterministic).
    sent_rep = jax.random.normal(ks[0], (B, EMB), jnp.float32)        # bert_model(...)[1]
    q_graph_emb = jax.random.normal(ks[1], (B, EMB), jnp.float32)     # graph_ember output 1
    session_intent = jax.random.normal(ks[2], (B, EMB), jnp.float32)  # graph_ember output 2
    id2emb = jax.random.normal(ks[3], (N_IDS, EMB), jnp.float32)      # content_encoder.id2emb
    did = jax.random.randint(ks[4], (B,), 1, N_IDS)
    d_emb = jnp.take(id2emb, did, axis=0)                             # id2emb[did] lookup (glue)

    # Deterministic parameter init (nn.Linear default-style uniform).
    bound = 1.0 / math.sqrt(EMB)
    w_cls = jax.random.uniform(ks[5], (1, EMB), jnp.float32, -bound, bound)  # classifier.weight
    b_cls = jax.random.uniform(ks[6], (1,), jnp.float32, -bound, bound)      # classifier.bias
    cat_w = jnp.ones((3,), jnp.float32)                                      # self.cat.weight[:, :] = 1

    y = ranker_head(sent_rep, q_graph_emb, session_intent, d_emb,
                    w_cls, b_cls, cat_w, tb=256)
    jax.block_until_ready(y)

    # Pure-JAX reference check (same semantics as the PyTorch forward).
    s1 = jnp.sum(q_graph_emb * d_emb, axis=1) / math.sqrt(EMB)
    s2 = jnp.sum(session_intent * d_emb, axis=1) / math.sqrt(EMB)
    s3 = sent_rep @ w_cls[0] + b_cls[0]
    ref = cat_w[0] * s1 + cat_w[1] * s2 + cat_w[2] * s3
    assert y.shape == (B,)
    assert jnp.allclose(y, ref, atol=1e-3, rtol=1e-4), "mismatch vs reference"

    print("KERNEL_OK")
</pallas_src>

<mosaic_0001>
module attributes {stable_mosaic.version = 11 : i64} {
  func.func @_ranker_head_kernel(%arg0: i32, %arg1: memref<256x128xf32, #tpu.memory_space<vmem>>, %arg2: memref<256x128xf32, #tpu.memory_space<vmem>>, %arg3: memref<256x128xf32, #tpu.memory_space<vmem>>, %arg4: memref<256x128xf32, #tpu.memory_space<vmem>>, %arg5: memref<1x128xf32, #tpu.memory_space<vmem>>, %arg6: memref<3xf32, #tpu.memory_space<smem>>, %arg7: memref<1xf32, #tpu.memory_space<smem>>, %arg8: memref<1x256xf32, #tpu.memory_space<vmem>>) attributes {dimension_semantics = [#tpu.dimension_semantics<parallel>], iteration_bounds = array<i64: 4>, scalar_prefetch = 0 : i64, scratch_operands = 0 : i64, tpu.core_type = #tpu.core_type<tc>, window_params = [{transform_indices = @transform_0, window_bounds = array<i64: 256, 128>}, {transform_indices = @transform_1, window_bounds = array<i64: 256, 128>}, {transform_indices = @transform_2, window_bounds = array<i64: 256, 128>}, {transform_indices = @transform_3, window_bounds = array<i64: 256, 128>}, {pipeline_mode = #tpu.pipeline_mode<synchronous>, transform_indices = @transform_4, window_bounds = array<i64: 1, 128>}, {transform_indices = @transform_5, window_bounds = array<i64: 3>}, {transform_indices = @transform_6, window_bounds = array<i64: 1>}, {transform_indices = @transform_7, window_bounds = array<i64: 1, 256>}]} {
    %c0 = arith.constant 0 : index
    %0 = memref.load %arg6[%c0] : memref<3xf32, #tpu.memory_space<smem>>
    %cst = arith.constant 0.0883883461 : f32
    %1 = arith.mulf %0, %cst : f32
    %c1 = arith.constant 1 : index
    %2 = memref.load %arg6[%c1] : memref<3xf32, #tpu.memory_space<smem>>
    %cst_0 = arith.constant 0.0883883461 : f32
    %3 = arith.mulf %2, %cst_0 : f32
    %c2 = arith.constant 2 : index
    %4 = memref.load %arg6[%c2] : memref<3xf32, #tpu.memory_space<smem>>
    %c0_1 = arith.constant 0 : index
    %c0_2 = arith.constant 0 : index
    %5 = vector.load %arg4[%c0_1, %c0_2] : memref<256x128xf32, #tpu.memory_space<vmem>>, vector<256x128xf32>
    %c0_3 = arith.constant 0 : index
    %c0_4 = arith.constant 0 : index
    %6 = vector.load %arg2[%c0_3, %c0_4] : memref<256x128xf32, #tpu.memory_space<vmem>>, vector<256x128xf32>
    %7 = arith.mulf %6, %5 : vector<256x128xf32>
    %8 = vector.broadcast %1 : f32 to vector<256x128xf32>
    %9 = arith.mulf %8, %7 : vector<256x128xf32>
    %c0_5 = arith.constant 0 : index
    %c0_6 = arith.constant 0 : index
    %10 = vector.load %arg3[%c0_5, %c0_6] : memref<256x128xf32, #tpu.memory_space<vmem>>, vector<256x128xf32>
    %11 = arith.mulf %10, %5 : vector<256x128xf32>
    %12 = vector.broadcast %3 : f32 to vector<256x128xf32>
    %13 = arith.mulf %12, %11 : vector<256x128xf32>
    %14 = arith.addf %9, %13 : vector<256x128xf32>
    %c0_7 = arith.constant 0 : index
    %c0_8 = arith.constant 0 : index
    %15 = vector.load %arg1[%c0_7, %c0_8] : memref<256x128xf32, #tpu.memory_space<vmem>>, vector<256x128xf32>
    %c0_9 = arith.constant 0 : index
    %c0_10 = arith.constant 0 : index
    %16 = vector.load %arg5[%c0_9, %c0_10] : memref<1x128xf32, #tpu.memory_space<vmem>>, vector<1x128xf32>
    %17 = vector.broadcast %16 : vector<1x128xf32> to vector<256x128xf32>
    %18 = arith.mulf %15, %17 : vector<256x128xf32>
    %19 = vector.broadcast %4 : f32 to vector<256x128xf32>
    %20 = arith.mulf %19, %18 : vector<256x128xf32>
    %21 = arith.addf %14, %20 : vector<256x128xf32>
    %cst_11 = arith.constant dense<0.000000e+00> : vector<256xf32>
    %22 = vector.multi_reduction <add>, %21, %cst_11 [1] : vector<256x128xf32> to vector<256xf32>
    %23 = vector.shape_cast %22 : vector<256xf32> to vector<1x256xf32>
    %c0_12 = arith.constant 0 : index
    %24 = memref.load %arg7[%c0_12] : memref<1xf32, #tpu.memory_space<smem>>
    %25 = arith.mulf %4, %24 : f32
    %26 = vector.broadcast %25 : f32 to vector<1x256xf32>
    %27 = arith.addf %23, %26 : vector<1x256xf32>
    %c0_13 = arith.constant 0 : index
    %c0_14 = arith.constant 0 : index
    %28 = vector.load %arg8[%c0_13, %c0_14] : memref<1x256xf32, #tpu.memory_space<vmem>>, vector<1x256xf32>
    tpu.vector_store %arg8[%c0_13, %c0_14], %27 {strides = array<i32>} : memref<1x256xf32, #tpu.memory_space<vmem>>, vector<1x256xf32>,
    return
  }
  func.func @transform_0(%arg0: i32) -> (i32, i32) {
    %c0_i32 = arith.constant 0 : i32
    %c0_i32_0 = arith.constant 0 : i32
    return %arg0, %c0_i32 : i32, i32
  }
  func.func @transform_1(%arg0: i32) -> (i32, i32) {
    %c0_i32 = arith.constant 0 : i32
    %c0_i32_0 = arith.constant 0 : i32
    return %arg0, %c0_i32 : i32, i32
  }
  func.func @transform_2(%arg0: i32) -> (i32, i32) {
    %c0_i32 = arith.constant 0 : i32
    %c0_i32_0 = arith.constant 0 : i32
    return %arg0, %c0_i32 : i32, i32
  }
  func.func @transform_3(%arg0: i32) -> (i32, i32) {
    %c0_i32 = arith.constant 0 : i32
    %c0_i32_0 = arith.constant 0 : i32
    return %arg0, %c0_i32 : i32, i32
  }
  func.func @transform_4(%arg0: i32) -> (i32, i32) {
    %c0_i32 = arith.constant 0 : i32
    %c0_i32_0 = arith.constant 0 : i32
    %c0_i32_1 = arith.constant 0 : i32
    return %c0_i32, %c0_i32_0 : i32, i32
  }
  func.func @transform_5(%arg0: i32) -> i32 {
    %c0_i32 = arith.constant 0 : i32
    %c0_i32_0 = arith.constant 0 : i32
    return %c0_i32 : i32
  }
  func.func @transform_6(%arg0: i32) -> i32 {
    %c0_i32 = arith.constant 0 : i32
    %c0_i32_0 = arith.constant 0 : i32
    return %c0_i32 : i32
  }
  func.func @transform_7(%arg0: i32) -> (i32, i32) {
    %c0_i32 = arith.constant 0 : i32
    %c0_i32_0 = arith.constant 0 : i32
    return %c0_i32, %arg0 : i32, i32
  }
}

</mosaic_0001>

<llo_original>
// kernel: tpu_custom_call.1
$region0: #{tpu_custom_call.1}
  #allocation0 [shape = 'u32[]', space=smem, size = 0x4, offset = 0x4, fixed_abs, tag = 'smem constant byte address 0x4 - core index']
  #allocation1 [shape = 'u32[144,128]{1,0:T(1,128)}', space=vmem, size = 0x12000, scoped, tag = 'internal scratch']
  #allocation2 [shape = 'f32[1]{0:T(128)S(6)}', space=smem, size = 0x200, scoped, tag = 'scoped memory for tpu_custom_call.1']
  %s0 = inlined_call_operand.hbm [shape: f32[1024,128], index: 0, kind: input, shape index: {}]
  %s1 = inlined_call_operand.hbm [shape: f32[1024,128], index: 1, kind: input, shape index: {}]
  %s2 = inlined_call_operand.hbm [shape: f32[1024,128], index: 2, kind: input, shape index: {}]
  %s3 = inlined_call_operand.hbm [shape: f32[1024,128], index: 3, kind: input, shape index: {}]
  %s4 = inlined_call_operand.vmem [shape: f32[1,128], index: 4, kind: input, shape index: {}]
  %s5 = inlined_call_operand.vmem [shape: f32[3], index: 5, kind: input, shape index: {}]
  %s6 = inlined_call_operand.<no memory space> [shape: f32[1], index: 6, kind: input, shape index: {}]
  %s7 = inlined_call_operand.hbm [shape: f32[1,1024], index: 7, kind: output, shape index: {}]
  %s8 = sld [smem:[#allocation0]]
  $region81: #{tpu_custom_call.1} parent=0
    _
  %s10 = ssub.s32 1, %s8
  %s11 = scalar_select 0, %s10, %s8
  %12 = sst [smem:[#allocation2]] %s6
  $region1: #{tpu_custom_call.1} parent=0
    #allocation3 [shape = 'u8[262144]{0}', space=vmem, size = 0x40000, scoped, tag = 'input window, operand 0']
    #allocation4 [shape = 's32[2]{0}', space=sflag, size = 0x8, scoped, tag = 'scoped memory for tpu_custom_call.1']
    #allocation5 [shape = 's32[2]{0}', space=sflag, size = 0x8, scoped, tag = 'scoped memory for tpu_custom_call.1']
    #allocation6 [shape = 's32[2]{0}', space=sflag, size = 0x8, scoped, tag = 'scoped memory for tpu_custom_call.1']
    #allocation7 [shape = 'u8[262144]{0}', space=vmem, size = 0x40000, scoped, tag = 'input window, operand 1']
    #allocation8 [shape = 's32[2]{0}', space=sflag, size = 0x8, scoped, tag = 'scoped memory for tpu_custom_call.1']
    #allocation9 [shape = 'u8[262144]{0}', space=vmem, size = 0x40000, scoped, tag = 'input window, operand 2']
    #allocation10 [shape = 'u8[262144]{0}', space=vmem, size = 0x40000, scoped, tag = 'input window, operand 3']
    #allocation11 [shape = 's32[2]{0}', space=sflag, size = 0x8, scoped, tag = 'scoped memory for tpu_custom_call.1']
    #allocation12 [shape = 'u8[512]{0}', space=smem, size = 0x200, scoped, tag = 'input window, operand 5, single buffered']
    #allocation13 [shape = 'u8[2048]{0}', space=vmem, size = 0x800, scoped, tag = 'output window, operand 0']
    %13 = vsyncpa [#allocation4], 0
    %s14 = scalar_lea.sflag [#allocation4], 1
    %15 = vsyncpa %s14, 0
    %16 = vsyncpa [#allocation8], 0
    %s17 = scalar_lea.sflag [#allocation8], 1
    %18 = vsyncpa %s17, 0
    %19 = vsyncpa [#allocation11], 0
    %s20 = scalar_lea.sflag [#allocation11], 1
    %21 = vsyncpa %s20, 0
    %22 = vsyncpa [#allocation6], 0
    %23 = vsyncpa [#allocation5], 0
    %s24 = scalar_lea.sflag [#allocation5], 1
    %25 = vsyncpa %s24, 0
    loop: start=0, step=1, limit=6
    $region2: #{tpu_custom_call.1} parent=1 // loop_pre_header
      _
    $region3: #{tpu_custom_call.1} parent=1 // loop_header
      %s27 = sphi 0, %s31
      %p28 = scmp.ge.s32.totalorder %s27, 6
      %s37 = sphi 0, %s39
      %s40 = sphi 0, %s37
      %s41 = sphi 0, %s40
      %s57 = sphi 0, %s41
      %s63 = sphi 0, %s65
      %s66 = sphi 0, %s63
      %s67 = sphi 0, %s66
      %s83 = sphi 0, %s67
      %s89 = sphi 0, %s91
      %s92 = sphi 0, %s89
      %s93 = sphi 0, %s92
      %s109 = sphi 0, %s93
      %s115 = sphi 0, %s117
      %s118 = sphi 0, %s115
      %s119 = sphi 0, %s118
      %s135 = sphi 0, %s119
      %s139 = sphi 0, %s139
      %s141 = sphi 0, %s139
      %s142 = sphi 0, %s141
      %s156 = sphi 0, %s142
      %s160 = sphi 0, %s160
      %s162 = sphi 0, %s160
      %s163 = sphi 0, %s162
      %s177 = sphi 0, %s163
      %s181 = sphi 0, %s181
      %s183 = sphi 0, %s181
      %s184 = sphi 0, %s183
      %s198 = sphi 0, %s184
      %s204 = sphi 0, %s206
      %s207 = sphi 0, %s204
      %s208 = sphi 0, %s207
      %s224 = sphi 0, %s208
    $region4: #{tpu_custom_call.1} parent=1 // loop_header_branch
      %30 = sbr.rel (%p28) target = $region8
    $region5: #{tpu_custom_call.1} parent=1 // loop_body
      %s32 = ssub.s32 %s27, 1
      %s33 = ssub.s32 %s27, 2
      %s34 = sadd.s32 %s27, 1
      %s35 = ssub.s32 %s27, %s34
      %p36 = scmp.eq.s32.totalorder %s35, 0
      %s38 = sadd.s32 %s37, 1
      %s39 = scalar_select %p36, %s37, %s38
      %p42 = pneg %p36
      %p43 = scmp.eq.s32.totalorder %s27, 3
      %p44 = por %p42, %p43
      %p45 = scmp.ne.s32.totalorder %s37, %s40
      %p46 = scmp.eq.s32.totalorder %s27, 0
      %p47 = por %p45, %p46
      %p48 = scmp.ne.s32.totalorder %s37, %s40
      %p49 = scmp.eq.s32.totalorder %s32, 3
      %p50 = por %p48, %p49
      %p51 = scmp.ne.s32.totalorder %s40, %s41
      %p52 = scmp.eq.s32.totalorder %s32, 0
      %p53 = por %p51, %p52
      %p54 = scmp.ne.s32.totalorder %s40, %s41
      %p55 = scmp.eq.s32.totalorder %s33, 3
      %p56 = por %p54, %p55
      %p58 = scmp.ne.s32.totalorder %s41, %s57
      %p59 = scmp.eq.s32.totalorder %s33, 0
      %p60 = por %p58, %p59
      %s61 = ssub.s32 %s27, %s34
      %p62 = scmp.eq.s32.totalorder %s61, 0
      %s64 = sadd.s32 %s63, 1
      %s65 = scalar_select %p62, %s63, %s64
      %p68 = pneg %p62
      %p69 = scmp.eq.s32.totalorder %s27, 3
      %p70 = por %p68, %p69
      %p71 = scmp.ne.s32.totalorder %s63, %s66
      %p72 = scmp.eq.s32.totalorder %s27, 0
      %p73 = por %p71, %p72
      %p74 = scmp.ne.s32.totalorder %s63, %s66
      %p75 = scmp.eq.s32.totalorder %s32, 3
      %p76 = por %p74, %p75
      %p77 = scmp.ne.s32.totalorder %s66, %s67
      %p78 = scmp.eq.s32.totalorder %s32, 0
      %p79 = por %p77, %p78
      %p80 = scmp.ne.s32.totalorder %s66, %s67
      %p81 = scmp.eq.s32.totalorder %s33, 3
      %p82 = por %p80, %p81
      %p84 = scmp.ne.s32.totalorder %s67, %s83
      %p85 = scmp.eq.s32.totalorder %s33, 0
      %p86 = por %p84, %p85
      %s87 = ssub.s32 %s27, %s34
      %p88 = scmp.eq.s32.totalorder %s87, 0
      %s90 = sadd.s32 %s89, 1
      %s91 = scalar_select %p88, %s89, %s90
      %p94 = pneg %p88
      %p95 = scmp.eq.s32.totalorder %s27, 3
      %p96 = por %p94, %p95
      %p97 = scmp.ne.s32.totalorder %s89, %s92
      %p98 = scmp.eq.s32.totalorder %s27, 0
      %p99 = por %p97, %p98
      %p100 = scmp.ne.s32.totalorder %s89, %s92
      %p101 = scmp.eq.s32.totalorder %s32, 3
      %p102 = por %p100, %p101
      %p103 = scmp.ne.s32.totalorder %s92, %s93
      %p104 = scmp.eq.s32.totalorder %s32, 0
      %p105 = por %p103, %p104
      %p106 = scmp.ne.s32.totalorder %s92, %s93
      %p107 = scmp.eq.s32.totalorder %s33, 3
      %p108 = por %p106, %p107
      %p110 = scmp.ne.s32.totalorder %s93, %s109
      %p111 = scmp.eq.s32.totalorder %s33, 0
      %p112 = por %p110, %p111
      %s113 = ssub.s32 %s27, %s34
      %p114 = scmp.eq.s32.totalorder %s113, 0
      %s116 = sadd.s32 %s115, 1
      %s117 = scalar_select %p114, %s115, %s116
      %p120 = pneg %p114
      %p121 = scmp.eq.s32.totalorder %s27, 3
      %p122 = por %p120, %p121
      %p123 = scmp.ne.s32.totalorder %s115, %s118
      %p124 = scmp.eq.s32.totalorder %s27, 0
      %p125 = por %p123, %p124
      %p126 = scmp.ne.s32.totalorder %s115, %s118
      %p127 = scmp.eq.s32.totalorder %s32, 3
      %p128 = por %p126, %p127
      %p129 = scmp.ne.s32.totalorder %s118, %s119
      %p130 = scmp.eq.s32.totalorder %s32, 0
      %p131 = por %p129, %p130
      %p132 = scmp.ne.s32.totalorder %s118, %s119
      %p133 = scmp.eq.s32.totalorder %s33, 3
      %p134 = por %p132, %p133
      %p136 = scmp.ne.s32.totalorder %s119, %s135
      %p137 = scmp.eq.s32.totalorder %s33, 0
      %p138 = por %p136, %p137
      %s140 = sadd.s32 %s139, 1
      %p143 = scmp.eq.s32.totalorder %s27, 3
      %p144 = scmp.ne.s32.totalorder %s139, %s141
      %p145 = scmp.eq.s32.totalorder %s27, 0
      %p146 = por %p144, %p145
      %p147 = scmp.ne.s32.totalorder %s139, %s141
      %p148 = scmp.eq.s32.totalorder %s32, 3
      %p149 = por %p147, %p148
      %p150 = scmp.ne.s32.totalorder %s141, %s142
      %p151 = scmp.eq.s32.totalorder %s32, 0
      %p152 = por %p150, %p151
      %p153 = scmp.ne.s32.totalorder %s141, %s142
      %p154 = scmp.eq.s32.totalorder %s33, 3
      %p155 = por %p153, %p154
      %p157 = scmp.ne.s32.totalorder %s142, %s156
      %p158 = scmp.eq.s32.totalorder %s33, 0
      %p159 = por %p157, %p158
      %s161 = sadd.s32 %s160, 1
      %p164 = scmp.eq.s32.totalorder %s27, 3
      %p165 = scmp.ne.s32.totalorder %s160, %s162
      %p166 = scmp.eq.s32.totalorder %s27, 0
      %p167 = por %p165, %p166
      %p168 = scmp.ne.s32.totalorder %s160, %s162
      %p169 = scmp.eq.s32.totalorder %s32, 3
      %p170 = por %p168, %p169
      %p171 = scmp.ne.s32.totalorder %s162, %s163
      %p172 = scmp.eq.s32.totalorder %s32, 0
      %p173 = por %p171, %p172
      %p174 = scmp.ne.s32.totalorder %s162, %s163
      %p175 = scmp.eq.s32.totalorder %s33, 3
      %p176 = por %p174, %p175
      %p178 = scmp.ne.s32.totalorder %s163, %s177
      %p179 = scmp.eq.s32.totalorder %s33, 0
      %p180 = por %p178, %p179
      %s182 = sadd.s32 %s181, 1
      %p185 = scmp.eq.s32.totalorder %s27, 3
      %p186 = scmp.ne.s32.totalorder %s181, %s183
      %p187 = scmp.eq.s32.totalorder %s27, 0
      %p188 = por %p186, %p187
      %p189 = scmp.ne.s32.totalorder %s181, %s183
      %p190 = scmp.eq.s32.totalorder %s32, 3
      %p191 = por %p189, %p190
      %p192 = scmp.ne.s32.totalorder %s183, %s184
      %p193 = scmp.eq.s32.totalorder %s32, 0
      %p194 = por %p192, %p193
      %p195 = scmp.ne.s32.totalorder %s183, %s184
      %p196 = scmp.eq.s32.totalorder %s33, 3
      %p197 = por %p195, %p196
      %p199 = scmp.ne.s32.totalorder %s184, %s198
      %p200 = scmp.eq.s32.totalorder %s33, 0
      %p201 = por %p199, %p200
      %s202 = ssub.s32 %s27, %s34
      %p203 = scmp.eq.s32.totalorder %s202, 0
      %s205 = sadd.s32 %s204, 1
      %s206 = scalar_select %p203, %s204, %s205
      %p209 = pneg %p203
      %p210 = scmp.eq.s32.totalorder %s27, 3
      %p211 = por %p209, %p210
      %p212 = scmp.ne.s32.totalorder %s204, %s207
      %p213 = scmp.eq.s32.totalorder %s27, 0
      %p214 = por %p212, %p213
      %p215 = scmp.ne.s32.totalorder %s204, %s207
      %p216 = scmp.eq.s32.totalorder %s32, 3
      %p217 = por %p215, %p216
      %p218 = scmp.ne.s32.totalorder %s207, %s208
      %p219 = scmp.eq.s32.totalorder %s32, 0
      %p220 = por %p218, %p219
      %p221 = scmp.ne.s32.totalorder %s207, %s208
      %p222 = scmp.eq.s32.totalorder %s33, 3
      %p223 = por %p221, %p222
      %p225 = scmp.ne.s32.totalorder %s208, %s224
      %p226 = scmp.eq.s32.totalorder %s33, 0
      %p227 = por %p225, %p226
      %p228 = scmp.le.s32.totalorder 1, %s27
      %p229 = scmp.lt.s32.totalorder %s27, 5
      %p230 = pnand %p228, %p229
      %p231 = pneg %p230
      // Predicated region
      $region9: #{tpu_custom_call.1} parent=5 // pred_check
        _
      $region10: #{tpu_custom_call.1} parent=5 // pred_check_branch
        %233 = sbr.rel (%p230) target = $region12
      $region11: #{tpu_custom_call.1} parent=5 // pred_region
        %s234 = ssub.s32 %s27, 1
        // Predicated region
        $region13: #{tpu_custom_call.1} parent=11 // pred_check
          %p235 = pneg %p152
        $region14: #{tpu_custom_call.1} parent=11 // pred_check_branch
          %237 = sbr.rel (%p235) target = $region16
        $region15: #{tpu_custom_call.1} parent=11 // pred_region
          _
        $region16: #{tpu_custom_call.1} parent=11 // pred_fallthru
          _
        // Predicated region
        $region17: #{tpu_custom_call.1} parent=11 // pred_check
          %p238 = pneg %p173
        $region18: #{tpu_custom_call.1} parent=11 // pred_check_branch
          %240 = sbr.rel (%p238) target = $region20
        $region19: #{tpu_custom_call.1} parent=11 // pred_region
          %s242 = ssub.s32 16, 16
          %243 = vsyncadd [#allocation6], %s242
          %s245 = sshll.u32 %s5, 4
          %s246 = int_to_ptr.vmem [resolvable:$true] %s245
          %248 = dma.vmem_to_smem %s246, 16, [#allocation12], [#allocation6]
        $region20: #{tpu_custom_call.1} parent=11 // pred_fallthru
          _
        // Predicated region
        $region21: #{tpu_custom_call.1} parent=11 // pred_check
          %p249 = pneg %p194
        $region22: #{tpu_custom_call.1} parent=11 // pred_check_branch
          %251 = sbr.rel (%p249) target = $region24
        $region23: #{tpu_custom_call.1} parent=11 // pred_region
          _
        $region24: #{tpu_custom_call.1} parent=11 // pred_fallthru
          _
      $region12: #{tpu_custom_call.1} parent=5 // pred_fallthru
        _
      %p252 = scmp.lt.s32.totalorder %s27, 4
      // Predicated region
      $region25: #{tpu_custom_call.1} parent=5 // pred_check
        %p253 = pneg %p252
      $region26: #{tpu_custom_call.1} parent=5 // pred_check_branch
        %255 = sbr.rel (%p253) target = $region28
      $region27: #{tpu_custom_call.1} parent=5 // pred_region
        // Predicated region
        $region29: #{tpu_custom_call.1} parent=27 // pred_check
          %p256 = pneg %p47
        $region30: #{tpu_custom_call.1} parent=27 // pred_check_branch
          %258 = sbr.rel (%p256) target = $region32
        $region31: #{tpu_custom_call.1} parent=27 // pred_region
          %s259 = sand.u32 %s37, 1
          %s260 = scalar_lea.sflag [#allocation4], %s259
          %s261 = sand.u32 %s37, 1
          %s262 = smul.addr %s261, 256
          %s263 = scalar_lea.vmem [#allocation3], %s262
          %s264 = smul.u32 32, %s27
          %s266 = ssub.s32 4096, 4096
          %267 = vsyncadd %s260, %s266
          %s268 = smul.addr %s264, 128
          %s269 = scalar_lea.hbm %s0, %s268
          %s270 = sshll.u32 %s263, 4
          %s271 = int_to_ptr.vmem [resolvable:$true] %s270
          %276 = dma.hbm_to_vmem [thread:$0]  %s269, 4096, %s271, %s260, 128, 128, 8
        $region32: #{tpu_custom_call.1} parent=27 // pred_fallthru
          _
        // Predicated region
        $region33: #{tpu_custom_call.1} parent=27 // pred_check
          %p277 = pneg %p73
        $region34: #{tpu_custom_call.1} parent=27 // pred_check_branch
          %279 = sbr.rel (%p277) target = $region36
        $region35: #{tpu_custom_call.1} parent=27 // pred_region
          %s280 = sand.u32 %s27, 1
          %s281 = scalar_lea.sflag [#allocation8], %s280
          %s282 = sand.u32 %s63, 1
          %s283 = smul.addr %s282, 256
          %s284 = scalar_lea.vmem [#allocation7], %s283
          %s285 = smul.u32 32, %s27
          %s287 = ssub.s32 4096, 4096
          %288 = vsyncadd %s281, %s287
          %s289 = smul.addr %s285, 128
          %s290 = scalar_lea.hbm %s1, %s289
          %s291 = sshll.u32 %s284, 4
          %s292 = int_to_ptr.vmem [resolvable:$true] %s291
          %297 = dma.hbm_to_vmem [thread:$0]  %s290, 4096, %s292, %s281, 128, 128, 8
        $region36: #{tpu_custom_call.1} parent=27 // pred_fallthru
          _
        // Predicated region
        $region37: #{tpu_custom_call.1} parent=27 // pred_check
          %p298 = pneg %p99
        $region38: #{tpu_custom_call.1} parent=27 // pred_check_branch
          %300 = sbr.rel (%p298) target = $region40
        $region39: #{tpu_custom_call.1} parent=27 // pred_region
          %s301 = sand.u32 %s27, 1
          %s302 = scalar_lea.sflag [#allocation8], %s301
          %s303 = sand.u32 %s89, 1
          %s304 = smul.addr %s303, 256
          %s305 = scalar_lea.vmem [#allocation9], %s304
          %s306 = smul.u32 32, %s27
          %s308 = ssub.s32 4096, 4096
          %309 = vsyncadd %s302, %s308
          %s310 = smul.addr %s306, 128
          %s311 = scalar_lea.hbm %s2, %s310
          %s312 = sshll.u32 %s305, 4
          %s313 = int_to_ptr.vmem [resolvable:$true] %s312
          %318 = dma.hbm_to_vmem [thread:$0]  %s311, 4096, %s313, %s302, 128, 128, 8
        $region40: #{tpu_custom_call.1} parent=27 // pred_fallthru
          _
        // Predicated region
        $region41: #{tpu_custom_call.1} parent=27 // pred_check
          %p319 = pneg %p125
        $region42: #{tpu_custom_call.1} parent=27 // pred_check_branch
          %321 = sbr.rel (%p319) target = $region44
        $region43: #{tpu_custom_call.1} parent=27 // pred_region
          %s322 = sand.u32 %s115, 1
          %s323 = scalar_lea.sflag [#allocation11], %s322
          %s324 = sand.u32 %s115, 1
          %s325 = smul.addr %s324, 256
          %s326 = scalar_lea.vmem [#allocation10], %s325
          %s327 = smul.u32 32, %s27
          %s329 = ssub.s32 4096, 4096
          %330 = vsyncadd %s323, %s329
          %s331 = smul.addr %s327, 128
          %s332 = scalar_lea.hbm %s3, %s331
          %s333 = sshll.u32 %s326, 4
          %s334 = int_to_ptr.vmem [resolvable:$true] %s333
          %339 = dma.hbm_to_vmem [thread:$0]  %s332, 4096, %s334, %s323, 128, 128, 8
        $region44: #{tpu_custom_call.1} parent=27 // pred_fallthru
          _
      $region28: #{tpu_custom_call.1} parent=5 // pred_fallthru
        _
      %p340 = scmp.le.s32.totalorder 1, %s27
      %p341 = scmp.lt.s32.totalorder %s27, 5
      %p342 = pnand %p340, %p341
      %p343 = pneg %p342
      // Predicated region
      $region45: #{tpu_custom_call.1} parent=5 // pred_check
        _
      $region46: #{tpu_custom_call.1} parent=5 // pred_check_branch
        %345 = sbr.rel (%p342) target = $region48
      $region47: #{tpu_custom_call.1} parent=5 // pred_region
        %s346 = ssub.s32 %s27, 1
        %s347 = sand.u32 %s40, 1
        %s348 = scalar_lea.sflag [#allocation4], %s347
        %s349 = sand.u32 %s40, 1
        %s350 = smul.addr %s349, 256
        %s351 = scalar_lea.vmem [#allocation3], %s350
        // Predicated region
        $region49: #{tpu_custom_call.1} parent=47 // pred_check
          %p352 = pneg %p53
        $region50: #{tpu_custom_call.1} parent=47 // pred_check_branch
          %354 = sbr.rel (%p352) target = $region52
        $region51: #{tpu_custom_call.1} parent=47 // pred_region
          %355 = dma.done %s348, 4096
        $region52: #{tpu_custom_call.1} parent=47 // pred_fallthru
          _
        %s356 = sand.u32 %s32, 1
        %s357 = scalar_lea.sflag [#allocation8], %s356
        %s358 = sand.u32 %s66, 1
        %s359 = smul.addr %s358, 256
        %s360 = scalar_lea.vmem [#allocation7], %s359
        // Predicated region
        $region53: #{tpu_custom_call.1} parent=47 // pred_check
          %p361 = pneg %p79
        $region54: #{tpu_custom_call.1} parent=47 // pred_check_branch
          %363 = sbr.rel (%p361) target = $region56
        $region55: #{tpu_custom_call.1} parent=47 // pred_region
          %364 = dma.done %s357, 4096
        $region56: #{tpu_custom_call.1} parent=47 // pred_fallthru
          _
        %s365 = sand.u32 %s32, 1
        %s366 = scalar_lea.sflag [#allocation8], %s365
        %s367 = sand.u32 %s92, 1
        %s368 = smul.addr %s367, 256
        %s369 = scalar_lea.vmem [#allocation9], %s368
        // Predicated region
        $region57: #{tpu_custom_call.1} parent=47 // pred_check
          %p370 = pneg %p105
        $region58: #{tpu_custom_call.1} parent=47 // pred_check_branch
          %372 = sbr.rel (%p370) target = $region60
        $region59: #{tpu_custom_call.1} parent=47 // pred_region
          %373 = dma.done %s366, 4096
        $region60: #{tpu_custom_call.1} parent=47 // pred_fallthru
          _
        %s374 = sand.u32 %s118, 1
        %s375 = scalar_lea.sflag [#allocation11], %s374
        %s376 = sand.u32 %s118, 1
        %s377 = smul.addr %s376, 256
        %s378 = scalar_lea.vmem [#allocation10], %s377
        // Predicated region
        $region61: #{tpu_custom_call.1} parent=47 // pred_check
          %p379 = pneg %p131
        $region62: #{tpu_custom_call.1} parent=47 // pred_check_branch
          %381 = sbr.rel (%p379) target = $region64
        $region63: #{tpu_custom_call.1} parent=47 // pred_region
          %382 = dma.done %s375, 4096
        $region64: #{tpu_custom_call.1} parent=47 // pred_fallthru
          _
        // Predicated region
        $region65: #{tpu_custom_call.1} parent=47 // pred_check
          %p383 = pneg %p173
        $region66: #{tpu_custom_call.1} parent=47 // pred_check_branch
          %385 = sbr.rel (%p383) target = $region68
        $region67: #{tpu_custom_call.1} parent=47 // pred_region
          %386 = dma.done [#allocation6], 16
        $region68: #{tpu_custom_call.1} parent=47 // pred_fallthru
          _
        %387 = sfence
        %s388 = sand.u32 %s40, 1
        %s389 = scalar_lea.sflag [#allocation4], %s388
        %s390 = sand.u32 %s40, 1
        %s391 = smul.addr %s390, 256
        %s392 = scalar_lea.vmem [#allocation3], %s391
        %p393 = pneg %p53
        %p394 = pneg %p50
        %s395 = sand.u32 %s32, 1
        %s396 = scalar_lea.sflag [#allocation8], %s395
        %s397 = sand.u32 %s66, 1
        %s398 = smul.addr %s397, 256
        %s399 = scalar_lea.vmem [#allocation7], %s398
        %p400 = pneg %p79
        %p401 = pneg %p76
        %s402 = sand.u32 %s32, 1
        %s403 = scalar_lea.sflag [#allocation8], %s402
        %s404 = sand.u32 %s92, 1
        %s405 = smul.addr %s404, 256
        %s406 = scalar_lea.vmem [#allocation9], %s405
        %p407 = pneg %p105
        %p408 = pneg %p102
        %s409 = sand.u32 %s118, 1
        %s410 = scalar_lea.sflag [#allocation11], %s409
        %s411 = sand.u32 %s118, 1
        %s412 = smul.addr %s411, 256
        %s413 = scalar_lea.vmem [#allocation10], %s412
        %p414 = pneg %p131
        %p415 = pneg %p128
        %p416 = pneg %p152
        %p417 = pneg %p149
        %p418 = pneg %p173
        %p419 = pneg %p170
        %p420 = pneg %p194
        %p421 = pneg %p191
        %p422 = pneg %p220
        %p423 = pneg %p217
        %s424 = sand.u32 %s207, 1
        %s425 = scalar_lea.sflag [#allocation5], %s424
        %s426 = sand.u32 %s207, 1
        %s427 = smul.addr %s426, 2
        %s428 = scalar_lea.vmem [#allocation13], %s427
        %s429 = smul.u32 32, %s32
        %s430 = smul.u32 32, %s32
        %s431 = smul.u32 32, %s32
        %s432 = smul.u32 32, %s32
        %s433 = smul.u32 2, %s32
        %s434 = sld [smem:[#allocation12]]
        %s435 = smul.f32 %s434, 0.088388346
        %s436 = sld [smem:[#allocation12 + $0x1]]
        %s437 = smul.f32 %s436, 0.088388346
        %s438 = sld [smem:[#allocation12 + $0x2]]
        %v439 = vld [vmem:[%s378] sm:$0xff]
        %v440 = vld [vmem:[%s378 + $0x8] sm:$0xff]
        %v441 = vld [vmem:[%s378 + $0x10] sm:$0xff]
        %v442 = vld [vmem:[%s378 + $0x18] sm:$0xff]
        %v443 = vld [vmem:[%s378 + $0x20] sm:$0xff]
        %v444 = vld [vmem:[%s378 + $0x28] sm:$0xff]
        %v445 = vld [vmem:[%s378 + $0x30] sm:$0xff]
        %v446 = vld [vmem:[%s378 + $0x38] sm:$0xff]
        %v447 = vld [vmem:[%s378 + $0x40] sm:$0xff]
        %v448 = vld [vmem:[%s378 + $0x48] sm:$0xff]
        %v449 = vld [vmem:[%s378 + $0x50] sm:$0xff]
        %v450 = vld [vmem:[%s378 + $0x58] sm:$0xff]
        %v451 = vld [vmem:[%s378 + $0x60] sm:$0xff]
        %v452 = vld [vmem:[%s378 + $0x68] sm:$0xff]
        %v453 = vld [vmem:[%s378 + $0x70] sm:$0xff]
        %v454 = vld [vmem:[%s378 + $0x78] sm:$0xff]
        %v455 = vld [vmem:[%s378 + $0x80] sm:$0xff]
        %v456 = vld [vmem:[%s378 + $0x88] sm:$0xff]
        %v457 = vld [vmem:[%s378 + $0x90] sm:$0xff]
        %v458 = vld [vmem:[%s378 + $0x98] sm:$0xff]
        %v459 = vld [vmem:[%s378 + $0xa0] sm:$0xff]
        %v460 = vld [vmem:[%s378 + $0xa8] sm:$0xff]
        %v461 = vld [vmem:[%s378 + $0xb0] sm:$0xff]
        %v462 = vld [vmem:[%s378 + $0xb8] sm:$0xff]
        %v463 = vld [vmem:[%s378 + $0xc0] sm:$0xff]
        %v464 = vld [vmem:[%s378 + $0xc8] sm:$0xff]
        %v465 = vld [vmem:[%s378 + $0xd0] sm:$0xff]
        %v466 = vld [vmem:[%s378 + $0xd8] sm:$0xff]
        %v467 = vld [vmem:[%s378 + $0xe0] sm:$0xff]
        %v468 = vld [vmem:[%s378 + $0xe8] sm:$0xff]
        %v469 = vld [vmem:[%s378 + $0xf0] sm:$0xff]
        %v470 = vld [vmem:[%s378 + $0xf8] sm:$0xff]
        %v471 = vld [vmem:[%s360] sm:$0xff]
        %v472 = vld [vmem:[%s360 + $0x8] sm:$0xff]
        %v473 = vld [vmem:[%s360 + $0x10] sm:$0xff]
        %v474 = vld [vmem:[%s360 + $0x18] sm:$0xff]
        %v475 = vld [vmem:[%s360 + $0x20] sm:$0xff]
        %v476 = vld [vmem:[%s360 + $0x28] sm:$0xff]
        %v477 = vld [vmem:[%s360 + $0x30] sm:$0xff]
        %v478 = vld [vmem:[%s360 + $0x38] sm:$0xff]
        %v479 = vld [vmem:[%s360 + $0x40] sm:$0xff]
        %v480 = vld [vmem:[%s360 + $0x48] sm:$0xff]
        %v481 = vld [vmem:[%s360 + $0x50] sm:$0xff]
        %v482 = vld [vmem:[%s360 + $0x58] sm:$0xff]
        %v483 = vld [vmem:[%s360 + $0x60] sm:$0xff]
        %v484 = vld [vmem:[%s360 + $0x68] sm:$0xff]
        %v485 = vld [vmem:[%s360 + $0x70] sm:$0xff]
        %v486 = vld [vmem:[%s360 + $0x78] sm:$0xff]
        %v487 = vld [vmem:[%s360 + $0x80] sm:$0xff]
        %v488 = vld [vmem:[%s360 + $0x88] sm:$0xff]
        %v489 = vld [vmem:[%s360 + $0x90] sm:$0xff]
        %v490 = vld [vmem:[%s360 + $0x98] sm:$0xff]
        %v491 = vld [vmem:[%s360 + $0xa0] sm:$0xff]
        %v492 = vld [vmem:[%s360 + $0xa8] sm:$0xff]
        %v493 = vld [vmem:[%s360 + $0xb0] sm:$0xff]
        %v494 = vld [vmem:[%s360 + $0xb8] sm:$0xff]
        %v495 = vld [vmem:[%s360 + $0xc0] sm:$0xff]
        %v496 = vld [vmem:[%s360 + $0xc8] sm:$0xff]
        %v497 = vld [vmem:[%s360 + $0xd0] sm:$0xff]
        %v498 = vld [vmem:[%s360 + $0xd8] sm:$0xff]
        %v499 = vld [vmem:[%s360 + $0xe0] sm:$0xff]
        %v500 = vld [vmem:[%s360 + $0xe8] sm:$0xff]
        %v501 = vld [vmem:[%s360 + $0xf0] sm:$0xff]
        %v502 = vld [vmem:[%s360 + $0xf8] sm:$0xff]
        %v503 = vmul.f32 %v471, %v439
        %v504 = vmul.f32 %v472, %v440
        %v505 = vmul.f32 %v473, %v441
        %v506 = vmul.f32 %v474, %v442
        %v507 = vmul.f32 %v475, %v443
        %v508 = vmul.f32 %v476, %v444
        %v509 = vmul.f32 %v477, %v445
        %v510 = vmul.f32 %v478, %v446
        %v511 = vmul.f32 %v479, %v447
        %v512 = vmul.f32 %v480, %v448
        %v513 = vmul.f32 %v481, %v449
        %v514 = vmul.f32 %v482, %v450
        %v515 = vmul.f32 %v483, %v451
        %v516 = vmul.f32 %v484, %v452
        %v517 = vmul.f32 %v485, %v453
        %v518 = vmul.f32 %v486, %v454
        %v519 = vmul.f32 %v487, %v455
        %v520 = vmul.f32 %v488, %v456
        %v521 = vmul.f32 %v489, %v457
        %v522 = vmul.f32 %v490, %v458
        %v523 = vmul.f32 %v491, %v459
        %v524 = vmul.f32 %v492, %v460
        %v525 = vmul.f32 %v493, %v461
        %v526 = vmul.f32 %v494, %v462
        %v527 = vmul.f32 %v495, %v463
        %v528 = vmul.f32 %v496, %v464
        %v529 = vmul.f32 %v497, %v465
        %v530 = vmul.f32 %v498, %v466
        %v531 = vmul.f32 %v499, %v467
        %v532 = vmul.f32 %v500, %v468
        %v533 = vmul.f32 %v501, %v469
        %v534 = vmul.f32 %v502, %v470
        %v535 = vstv %s435
        %v536 = vmul.f32 %v535, %v503
        %v537 = vmul.f32 %v535, %v504
        %v538 = vmul.f32 %v535, %v505
        %v539 = vmul.f32 %v535, %v506
        %v540 = vmul.f32 %v535, %v507
        %v541 = vmul.f32 %v535, %v508
        %v542 = vmul.f32 %v535, %v509
        %v543 = vmul.f32 %v535, %v510
        %v544 = vmul.f32 %v535, %v511
        %v545 = vmul.f32 %v535, %v512
        %v546 = vmul.f32 %v535, %v513
        %v547 = vmul.f32 %v535, %v514
        %v548 = vmul.f32 %v535, %v515
        %v549 = vmul.f32 %v535, %v516
        %v550 = vmul.f32 %v535, %v517
        %v551 = vmul.f32 %v535, %v518
        %v552 = vmul.f32 %v535, %v519
        %v553 = vmul.f32 %v535, %v520
        %v554 = vmul.f32 %v535, %v521
        %v555 = vmul.f32 %v535, %v522
        %v556 = vmul.f32 %v535, %v523
        %v557 = vmul.f32 %v535, %v524
        %v558 = vmul.f32 %v535, %v525
        %v559 = vmul.f32 %v535, %v526
        %v560 = vmul.f32 %v535, %v527
        %v561 = vmul.f32 %v535, %v528
        %v562 = vmul.f32 %v535, %v529
        %v563 = vmul.f32 %v535, %v530
        %v564 = vmul.f32 %v535, %v531
        %v565 = vmul.f32 %v535, %v532
        %v566 = vmul.f32 %v535, %v533
        %v567 = vmul.f32 %v535, %v534
        %v568 = vld [vmem:[%s369] sm:$0xff]
        %v569 = vld [vmem:[%s369 + $0x8] sm:$0xff]
        %v570 = vld [vmem:[%s369 + $0x10] sm:$0xff]
        %v571 = vld [vmem:[%s369 + $0x18] sm:$0xff]
        %v572 = vld [vmem:[%s369 + $0x20] sm:$0xff]
        %v573 = vld [vmem:[%s369 + $0x28] sm:$0xff]
        %v574 = vld [vmem:[%s369 + $0x30] sm:$0xff]
        %v575 = vld [vmem:[%s369 + $0x38] sm:$0xff]
        %v576 = vld [vmem:[%s369 + $0x40] sm:$0xff]
        %v577 = vld [vmem:[%s369 + $0x48] sm:$0xff]
        %v578 = vld [vmem:[%s369 + $0x50] sm:$0xff]
        %v579 = vld [vmem:[%s369 + $0x58] sm:$0xff]
        %v580 = vld [vmem:[%s369 + $0x60] sm:$0xff]
        %v581 = vld [vmem:[%s369 + $0x68] sm:$0xff]
        %v582 = vld [vmem:[%s369 + $0x70] sm:$0xff]
        %v583 = vld [vmem:[%s369 + $0x78] sm:$0xff]
        %v584 = vld [vmem:[%s369 + $0x80] sm:$0xff]
        %v585 = vld [vmem:[%s369 + $0x88] sm:$0xff]
        %v586 = vld [vmem:[%s369 + $0x90] sm:$0xff]
        %v587 = vld [vmem:[%s369 + $0x98] sm:$0xff]
        %v588 = vld [vmem:[%s369 + $0xa0] sm:$0xff]
        %v589 = vld [vmem:[%s369 + $0xa8] sm:$0xff]
        %v590 = vld [vmem:[%s369 + $0xb0] sm:$0xff]
        %v591 = vld [vmem:[%s369 + $0xb8] sm:$0xff]
        %v592 = vld [vmem:[%s369 + $0xc0] sm:$0xff]
        %v593 = vld [vmem:[%s369 + $0xc8] sm:$0xff]
        %v594 = vld [vmem:[%s369 + $0xd0] sm:$0xff]
        %v595 = vld [vmem:[%s369 + $0xd8] sm:$0xff]
        %v596 = vld [vmem:[%s369 + $0xe0] sm:$0xff]
        %v597 = vld [vmem:[%s369 + $0xe8] sm:$0xff]
        %v598 = vld [vmem:[%s369 + $0xf0] sm:$0xff]
        %v599 = vld [vmem:[%s369 + $0xf8] sm:$0xff]
        %v600 = vmul.f32 %v568, %v439
        %v601 = vmul.f32 %v569, %v440
        %v602 = vmul.f32 %v570, %v441
        %v603 = vmul.f32 %v571, %v442
        %v604 = vmul.f32 %v572, %v443
        %v605 = vmul.f32 %v573, %v444
        %v606 = vmul.f32 %v574, %v445
        %v607 = vmul.f32 %v575, %v446
        %v608 = vmul.f32 %v576, %v447
        %v609 = vmul.f32 %v577, %v448
        %v610 = vmul.f32 %v578, %v449
        %v611 = vmul.f32 %v579, %v450
        %v612 = vmul.f32 %v580, %v451
        %v613 = vmul.f32 %v581, %v452
        %v614 = vmul.f32 %v582, %v453
        %v615 = vmul.f32 %v583, %v454
        %v616 = vmul.f32 %v584, %v455
        %v617 = vmul.f32 %v585, %v456
        %v618 = vmul.f32 %v586, %v457
        %v619 = vmul.f32 %v587, %v458
        %v620 = vmul.f32 %v588, %v459
        %v621 = vmul.f32 %v589, %v460
        %v622 = vmul.f32 %v590, %v461
        %v623 = vmul.f32 %v591, %v462
        %v624 = vmul.f32 %v592, %v463
        %v625 = vmul.f32 %v593, %v464
        %v626 = vmul.f32 %v594, %v465
        %v627 = vmul.f32 %v595, %v466
        %v628 = vmul.f32 %v596, %v467
        %v629 = vmul.f32 %v597, %v468
        %v630 = vmul.f32 %v598, %v469
        %v631 = vmul.f32 %v599, %v470
        %v632 = vstv %s437
        %v633 = vmul.f32 %v632, %v600
        %v634 = vmul.f32 %v632, %v601
        %v635 = vmul.f32 %v632, %v602
        %v636 = vmul.f32 %v632, %v603
        %v637 = vmul.f32 %v632, %v604
        %v638 = vmul.f32 %v632, %v605
        %v639 = vmul.f32 %v632, %v606
        %v640 = vmul.f32 %v632, %v607
        %v641 = vmul.f32 %v632, %v608
        %v642 = vmul.f32 %v632, %v609
        %v643 = vmul.f32 %v632, %v610
        %v644 = vmul.f32 %v632, %v611
        %v645 = vmul.f32 %v632, %v612
        %v646 = vmul.f32 %v632, %v613
        %v647 = vmul.f32 %v632, %v614
        %v648 = vmul.f32 %v632, %v615
        %v649 = vmul.f32 %v632, %v616
        %v650 = vmul.f32 %v632, %v617
        %v651 = vmul.f32 %v632, %v618
        %v652 = vmul.f32 %v632, %v619
        %v653 = vmul.f32 %v632, %v620
        %v654 = vmul.f32 %v632, %v621
        %v655 = vmul.f32 %v632, %v622
        %v656 = vmul.f32 %v632, %v623
        %v657 = vmul.f32 %v632, %v624
        %v658 = vmul.f32 %v632, %v625
        %v659 = vmul.f32 %v632, %v626
        %v660 = vmul.f32 %v632, %v627
        %v661 = vmul.f32 %v632, %v628
        %v662 = vmul.f32 %v632, %v629
        %v663 = vmul.f32 %v632, %v630
        %v664 = vmul.f32 %v632, %v631
        %v665 = vadd.f32 %v536, %v633
        %v666 = vadd.f32 %v537, %v634
        %v667 = vadd.f32 %v538, %v635
        %v668 = vadd.f32 %v539, %v636
        %v669 = vadd.f32 %v540, %v637
        %v670 = vadd.f32 %v541, %v638
        %v671 = vadd.f32 %v542, %v639
        %v672 = vadd.f32 %v543, %v640
        %v673 = vadd.f32 %v544, %v641
        %v674 = vadd.f32 %v545, %v642
        %v675 = vadd.f32 %v546, %v643
        %v676 = vadd.f32 %v547, %v644
        %v677 = vadd.f32 %v548, %v645
        %v678 = vadd.f32 %v549, %v646
        %v679 = vadd.f32 %v550, %v647
        %v680 = vadd.f32 %v551, %v648
        %v681 = vadd.f32 %v552, %v649
        %v682 = vadd.f32 %v553, %v650
        %v683 = vadd.f32 %v554, %v651
        %v684 = vadd.f32 %v555, %v652
        %v685 = vadd.f32 %v556, %v653
        %v686 = vadd.f32 %v557, %v654
        %v687 = vadd.f32 %v558, %v655
        %v688 = vadd.f32 %v559, %v656
        %v689 = vadd.f32 %v560, %v657
        %v690 = vadd.f32 %v561, %v658
        %v691 = vadd.f32 %v562, %v659
        %v692 = vadd.f32 %v563, %v660
        %v693 = vadd.f32 %v564, %v661
        %v694 = vadd.f32 %v565, %v662
        %v695 = vadd.f32 %v566, %v663
        %v696 = vadd.f32 %v567, %v664
        %v697 = vld [vmem:[%s351] sm:$0xff]
        %v698 = vld [vmem:[%s351 + $0x8] sm:$0xff]
        %v699 = vld [vmem:[%s351 + $0x10] sm:$0xff]
        %v700 = vld [vmem:[%s351 + $0x18] sm:$0xff]
        %v701 = vld [vmem:[%s351 + $0x20] sm:$0xff]
        %v702 = vld [vmem:[%s351 + $0x28] sm:$0xff]
        %v703 = vld [vmem:[%s351 + $0x30] sm:$0xff]
        %v704 = vld [vmem:[%s351 + $0x38] sm:$0xff]
        %v705 = vld [vmem:[%s351 + $0x40] sm:$0xff]
        %v706 = vld [vmem:[%s351 + $0x48] sm:$0xff]
        %v707 = vld [vmem:[%s351 + $0x50] sm:$0xff]
        %v708 = vld [vmem:[%s351 + $0x58] sm:$0xff]
        %v709 = vld [vmem:[%s351 + $0x60] sm:$0xff]
        %v710 = vld [vmem:[%s351 + $0x68] sm:$0xff]
        %v711 = vld [vmem:[%s351 + $0x70] sm:$0xff]
        %v712 = vld [vmem:[%s351 + $0x78] sm:$0xff]
        %v713 = vld [vmem:[%s351 + $0x80] sm:$0xff]
        %v714 = vld [vmem:[%s351 + $0x88] sm:$0xff]
        %v715 = vld [vmem:[%s351 + $0x90] sm:$0xff]
        %v716 = vld [vmem:[%s351 + $0x98] sm:$0xff]
        %v717 = vld [vmem:[%s351 + $0xa0] sm:$0xff]
        %v718 = vld [vmem:[%s351 + $0xa8] sm:$0xff]
        %v719 = vld [vmem:[%s351 + $0xb0] sm:$0xff]
        %v720 = vld [vmem:[%s351 + $0xb8] sm:$0xff]
        %v721 = vld [vmem:[%s351 + $0xc0] sm:$0xff]
        %v722 = vld [vmem:[%s351 + $0xc8] sm:$0xff]
        %v723 = vld [vmem:[%s351 + $0xd0] sm:$0xff]
        %v724 = vld [vmem:[%s351 + $0xd8] sm:$0xff]
        %v725 = vld [vmem:[%s351 + $0xe0] sm:$0xff]
        %v726 = vld [vmem:[%s351 + $0xe8] sm:$0xff]
        %v727 = vld [vmem:[%s351 + $0xf0] sm:$0xff]
        %v728 = vld [vmem:[%s351 + $0xf8] sm:$0xff]
        %v729 = vld [vmem:[%s4] sm:$0x1]
        %v731 = vlaneseq
        %v732 = vshrl.u32 %v731, 7
        %v733 = vsub.s32 0, %v732
        %v734 = vrot.slane %v729, %v733
        %v736 = vmul.f32 %v697, %v734
        %v737 = vmul.f32 %v698, %v734
        %v738 = vmul.f32 %v699, %v734
        %v739 = vmul.f32 %v700, %v734
        %v740 = vmul.f32 %v701, %v734
        %v741 = vmul.f32 %v702, %v734
        %v742 = vmul.f32 %v703, %v734
        %v743 = vmul.f32 %v704, %v734
        %v744 = vmul.f32 %v705, %v734
        %v745 = vmul.f32 %v706, %v734
        %v746 = vmul.f32 %v707, %v734
        %v747 = vmul.f32 %v708, %v734
        %v748 = vmul.f32 %v709, %v734
        %v749 = vmul.f32 %v710, %v734
        %v750 = vmul.f32 %v711, %v734
        %v751 = vmul.f32 %v712, %v734
        %v752 = vmul.f32 %v713, %v734
        %v753 = vmul.f32 %v714, %v734
        %v754 = vmul.f32 %v715, %v734
        %v755 = vmul.f32 %v716, %v734
        %v756 = vmul.f32 %v717, %v734
        %v757 = vmul.f32 %v718, %v734
        %v758 = vmul.f32 %v719, %v734
        %v759 = vmul.f32 %v720, %v734
        %v760 = vmul.f32 %v721, %v734
        %v761 = vmul.f32 %v722, %v734
        %v762 = vmul.f32 %v723, %v734
        %v763 = vmul.f32 %v724, %v734
        %v764 = vmul.f32 %v725, %v734
        %v765 = vmul.f32 %v726, %v734
        %v766 = vmul.f32 %v727, %v734
        %v767 = vmul.f32 %v728, %v734
        %v768 = vstv %s438
        %v769 = vmul.f32 %v768, %v736
        %v770 = vmul.f32 %v768, %v737
        %v771 = vmul.f32 %v768, %v738
        %v772 = vmul.f32 %v768, %v739
        %v773 = vmul.f32 %v768, %v740
        %v774 = vmul.f32 %v768, %v741
        %v775 = vmul.f32 %v768, %v742
        %v776 = vmul.f32 %v768, %v743
        %v777 = vmul.f32 %v768, %v744
        %v778 = vmul.f32 %v768, %v745
        %v779 = vmul.f32 %v768, %v746
        %v780 = vmul.f32 %v768, %v747
        %v781 = vmul.f32 %v768, %v748
        %v782 = vmul.f32 %v768, %v749
        %v783 = vmul.f32 %v768, %v750
        %v784 = vmul.f32 %v768, %v751
        %v785 = vmul.f32 %v768, %v752
        %v786 = vmul.f32 %v768, %v753
        %v787 = vmul.f32 %v768, %v754
        %v788 = vmul.f32 %v768, %v755
        %v789 = vmul.f32 %v768, %v756
        %v790 = vmul.f32 %v768, %v757
        %v791 = vmul.f32 %v768, %v758
        %v792 = vmul.f32 %v768, %v759
        %v793 = vmul.f32 %v768, %v760
        %v794 = vmul.f32 %v768, %v761
        %v795 = vmul.f32 %v768, %v762
        %v796 = vmul.f32 %v768, %v763
        %v797 = vmul.f32 %v768, %v764
        %v798 = vmul.f32 %v768, %v765
        %v799 = vmul.f32 %v768, %v766
        %v800 = vmul.f32 %v768, %v767
        %v801 = vadd.f32 %v665, %v769
        %v802 = vadd.f32 %v666, %v770
        %v803 = vadd.f32 %v667, %v771
        %v804 = vadd.f32 %v668, %v772
        %v805 = vadd.f32 %v669, %v773
        %v806 = vadd.f32 %v670, %v774
        %v807 = vadd.f32 %v671, %v775
        %v808 = vadd.f32 %v672, %v776
        %v809 = vadd.f32 %v673, %v777
        %v810 = vadd.f32 %v674, %v778
        %v811 = vadd.f32 %v675, %v779
        %v812 = vadd.f32 %v676, %v780
        %v813 = vadd.f32 %v677, %v781
        %v814 = vadd.f32 %v678, %v782
        %v815 = vadd.f32 %v679, %v783
        %v816 = vadd.f32 %v680, %v784
        %v817 = vadd.f32 %v681, %v785
        %v818 = vadd.f32 %v682, %v786
        %v819 = vadd.f32 %v683, %v787
        %v820 = vadd.f32 %v684, %v788
        %v821 = vadd.f32 %v685, %v789
        %v822 = vadd.f32 %v686, %v790
        %v823 = vadd.f32 %v687, %v791
        %v824 = vadd.f32 %v688, %v792
        %v825 = vadd.f32 %v689, %v793
        %v826 = vadd.f32 %v690, %v794
        %v827 = vadd.f32 %v691, %v795
        %v828 = vadd.f32 %v692, %v796
        %v829 = vadd.f32 %v693, %v797
        %v830 = vadd.f32 %v694, %v798
        %v831 = vadd.f32 %v695, %v799
        %v832 = vadd.f32 %v696, %v800
        %833 = vadd.xlane.f32.xlu0 %v801
        %v834 = vpop.xlane.xlu0 %833
        %835 = vadd.xlane.f32.xlu0 %v802
        %v836 = vpop.xlane.xlu0 %835
        %837 = vadd.xlane.f32.xlu0 %v803
        %v838 = vpop.xlane.xlu0 %837
        %839 = vadd.xlane.f32.xlu0 %v804
        %v840 = vpop.xlane.xlu0 %839
        %841 = vadd.xlane.f32.xlu0 %v805
        %v842 = vpop.xlane.xlu0 %841
        %843 = vadd.xlane.f32.xlu0 %v806
        %v844 = vpop.xlane.xlu0 %843
        %845 = vadd.xlane.f32.xlu0 %v807
        %v846 = vpop.xlane.xlu0 %845
        %847 = vadd.xlane.f32.xlu0 %v808
        %v848 = vpop.xlane.xlu0 %847
        %849 = vadd.xlane.f32.xlu0 %v809
        %v850 = vpop.xlane.xlu0 %849
        %851 = vadd.xlane.f32.xlu0 %v810
        %v852 = vpop.xlane.xlu0 %851
        %853 = vadd.xlane.f32.xlu0 %v811
        %v854 = vpop.xlane.xlu0 %853
        %855 = vadd.xlane.f32.xlu0 %v812
        %v856 = vpop.xlane.xlu0 %855
        %857 = vadd.xlane.f32.xlu0 %v813
        %v858 = vpop.xlane.xlu0 %857
        %859 = vadd.xlane.f32.xlu0 %v814
        %v860 = vpop.xlane.xlu0 %859
        %861 = vadd.xlane.f32.xlu0 %v815
        %v862 = vpop.xlane.xlu0 %861
        %863 = vadd.xlane.f32.xlu0 %v816
        %v864 = vpop.xlane.xlu0 %863
        %865 = vadd.xlane.f32.xlu0 %v817
        %v866 = vpop.xlane.xlu0 %865
        %867 = vadd.xlane.f32.xlu0 %v818
        %v868 = vpop.xlane.xlu0 %867
        %869 = vadd.xlane.f32.xlu0 %v819
        %v870 = vpop.xlane.xlu0 %869
        %871 = vadd.xlane.f32.xlu0 %v820
        %v872 = vpop.xlane.xlu0 %871
        %873 = vadd.xlane.f32.xlu0 %v821
        %v874 = vpop.xlane.xlu0 %873
        %875 = vadd.xlane.f32.xlu0 %v822
        %v876 = vpop.xlane.xlu0 %875
        %877 = vadd.xlane.f32.xlu0 %v823
        %v878 = vpop.xlane.xlu0 %877
        %879 = vadd.xlane.f32.xlu0 %v824
        %v880 = vpop.xlane.xlu0 %879
        %881 = vadd.xlane.f32.xlu0 %v825
        %v882 = vpop.xlane.xlu0 %881
        %883 = vadd.xlane.f32.xlu0 %v826
        %v884 = vpop.xlane.xlu0 %883
        %885 = vadd.xlane.f32.xlu0 %v827
        %v886 = vpop.xlane.xlu0 %885
        %887 = vadd.xlane.f32.xlu0 %v828
        %v888 = vpop.xlane.xlu0 %887
        %889 = vadd.xlane.f32.xlu0 %v829
        %v890 = vpop.xlane.xlu0 %889
        %891 = vadd.xlane.f32.xlu0 %v830
        %v892 = vpop.xlane.xlu0 %891
        %893 = vadd.xlane.f32.xlu0 %v831
        %v894 = vpop.xlane.xlu0 %893
        %895 = vadd.xlane.f32.xlu0 %v832
        %v896 = vpop.xlane.xlu0 %895
        %s897 = sld [smem:[#allocation2]]
        %s898 = smul.f32 %s438, %s897
        %v899 = vstv %s898
        %v900 = vadd.f32 %v834, %v899
        %v901 = vadd.f32 %v836, %v899
        %v902 = vadd.f32 %v838, %v899
        %v903 = vadd.f32 %v840, %v899
        %v904 = vadd.f32 %v842, %v899
        %v905 = vadd.f32 %v844, %v899
        %v906 = vadd.f32 %v846, %v899
        %v907 = vadd.f32 %v848, %v899
        %v908 = vadd.f32 %v850, %v899
        %v909 = vadd.f32 %v852, %v899
        %v910 = vadd.f32 %v854, %v899
        %v911 = vadd.f32 %v856, %v899
        %v912 = vadd.f32 %v858, %v899
        %v913 = vadd.f32 %v860, %v899
        %v914 = vadd.f32 %v862, %v899
        %v915 = vadd.f32 %v864, %v899
        %v916 = vadd.f32 %v866, %v899
        %v917 = vadd.f32 %v868, %v899
        %v918 = vadd.f32 %v870, %v899
        %v919 = vadd.f32 %v872, %v899
        %v920 = vadd.f32 %v874, %v899
        %v921 = vadd.f32 %v876, %v899
        %v922 = vadd.f32 %v878, %v899
        %v923 = vadd.f32 %v880, %v899
        %v924 = vadd.f32 %v882, %v899
        %v925 = vadd.f32 %v884, %v899
        %v926 = vadd.f32 %v886, %v899
        %v927 = vadd.f32 %v888, %v899
        %v928 = vadd.f32 %v890, %v899
        %v929 = vadd.f32 %v892, %v899
        %v930 = vadd.f32 %v894, %v899
        %v931 = vadd.f32 %v896, %v899
        %v964 = vlaneseq
        %v965 = vshrl.u32 %v964, 7
        %v966 = vsub.s32 0, %v965
        %v967 = vrot.slane %v900, %v966
        %v968 = vlaneseq
        %v969 = vshrl.u32 %v968, 7
        %v970 = vsub.s32 1, %v969
        %v971 = vrot.slane %v900, %v970
        %v972 = vlaneseq
        %v973 = vshrl.u32 %v972, 7
        %v974 = vsub.s32 2, %v973
        %v975 = vrot.slane %v900, %v974
        %v976 = vlaneseq
        %v977 = vshrl.u32 %v976, 7
        %v978 = vsub.s32 3, %v977
        %v979 = vrot.slane %v900, %v978
        %v980 = vlaneseq
        %v981 = vshrl.u32 %v980, 7
        %v982 = vsub.s32 4, %v981
        %v983 = vrot.slane %v900, %v982
        %v984 = vlaneseq
        %v985 = vshrl.u32 %v984, 7
        %v986 = vsub.s32 5, %v985
        %v987 = vrot.slane %v900, %v986
        %v988 = vlaneseq
        %v989 = vshrl.u32 %v988, 7
        %v990 = vsub.s32 6, %v989
        %v991 = vrot.slane %v900, %v990
        %v992 = vlaneseq
        %v993 = vshrl.u32 %v992, 7
        %v994 = vsub.s32 7, %v993
        %v995 = vrot.slane %v900, %v994
        %v996 = vlaneseq
        %v997 = vshrl.u32 %v996, 7
        %v998 = vsub.s32 0, %v997
        %v999 = vrot.slane %v901, %v998
        %v1000 = vlaneseq
        %v1001 = vshrl.u32 %v1000, 7
        %v1002 = vsub.s32 1, %v1001
        %v1003 = vrot.slane %v901, %v1002
        %v1004 = vlaneseq
        %v1005 = vshrl.u32 %v1004, 7
        %v1006 = vsub.s32 2, %v1005
        %v1007 = vrot.slane %v901, %v1006
        %v1008 = vlaneseq
        %v1009 = vshrl.u32 %v1008, 7
        %v1010 = vsub.s32 3, %v1009
        %v1011 = vrot.slane %v901, %v1010
        %v1012 = vlaneseq
        %v1013 = vshrl.u32 %v1012, 7
        %v1014 = vsub.s32 4, %v1013
        %v1015 = vrot.slane %v901, %v1014
        %v1016 = vlaneseq
        %v1017 = vshrl.u32 %v1016, 7
        %v1018 = vsub.s32 5, %v1017
        %v1019 = vrot.slane %v901, %v1018
        %v1020 = vlaneseq
        %v1021 = vshrl.u32 %v1020, 7
        %v1022 = vsub.s32 6, %v1021
        %v1023 = vrot.slane %v901, %v1022
        %v1024 = vlaneseq
        %v1025 = vshrl.u32 %v1024, 7
        %v1026 = vsub.s32 7, %v1025
        %v1027 = vrot.slane %v901, %v1026
        %v1028 = vlaneseq
        %v1029 = vshrl.u32 %v1028, 7
        %v1030 = vsub.s32 0, %v1029
        %v1031 = vrot.slane %v902, %v1030
        %v1032 = vlaneseq
        %v1033 = vshrl.u32 %v1032, 7
        %v1034 = vsub.s32 1, %v1033
        %v1035 = vrot.slane %v902, %v1034
        %v1036 = vlaneseq
        %v1037 = vshrl.u32 %v1036, 7
        %v1038 = vsub.s32 2, %v1037
        %v1039 = vrot.slane %v902, %v1038
        %v1040 = vlaneseq
        %v1041 = vshrl.u32 %v1040, 7
        %v1042 = vsub.s32 3, %v1041
        %v1043 = vrot.slane %v902, %v1042
        %v1044 = vlaneseq
        %v1045 = vshrl.u32 %v1044, 7
        %v1046 = vsub.s32 4, %v1045
        %v1047 = vrot.slane %v902, %v1046
        %v1048 = vlaneseq
        %v1049 = vshrl.u32 %v1048, 7
        %v1050 = vsub.s32 5, %v1049
        %v1051 = vrot.slane %v902, %v1050
        %v1052 = vlaneseq
        %v1053 = vshrl.u32 %v1052, 7
        %v1054 = vsub.s32 6, %v1053
        %v1055 = vrot.slane %v902, %v1054
        %v1056 = vlaneseq
        %v1057 = vshrl.u32 %v1056, 7
        %v1058 = vsub.s32 7, %v1057
        %v1059 = vrot.slane %v902, %v1058
        %v1060 = vlaneseq
        %v1061 = vshrl.u32 %v1060, 7
        %v1062 = vsub.s32 0, %v1061
        %v1063 = vrot.slane %v903, %v1062
        %v1064 = vlaneseq
        %v1065 = vshrl.u32 %v1064, 7
        %v1066 = vsub.s32 1, %v1065
        %v1067 = vrot.slane %v903, %v1066
        %v1068 = vlaneseq
        %v1069 = vshrl.u32 %v1068, 7
        %v1070 = vsub.s32 2, %v1069
        %v1071 = vrot.slane %v903, %v1070
        %v1072 = vlaneseq
        %v1073 = vshrl.u32 %v1072, 7
        %v1074 = vsub.s32 3, %v1073
        %v1075 = vrot.slane %v903, %v1074
        %v1076 = vlaneseq
        %v1077 = vshrl.u32 %v1076, 7
        %v1078 = vsub.s32 4, %v1077
        %v1079 = vrot.slane %v903, %v1078
        %v1080 = vlaneseq
        %v1081 = vshrl.u32 %v1080, 7
        %v1082 = vsub.s32 5, %v1081
        %v1083 = vrot.slane %v903, %v1082
        %v1084 = vlaneseq
        %v1085 = vshrl.u32 %v1084, 7
        %v1086 = vsub.s32 6, %v1085
        %v1087 = vrot.slane %v903, %v1086
        %v1088 = vlaneseq
        %v1089 = vshrl.u32 %v1088, 7
        %v1090 = vsub.s32 7, %v1089
        %v1091 = vrot.slane %v903, %v1090
        %v1092 = vlaneseq
        %v1093 = vshrl.u32 %v1092, 7
        %v1094 = vsub.s32 0, %v1093
        %v1095 = vrot.slane %v904, %v1094
        %v1096 = vlaneseq
        %v1097 = vshrl.u32 %v1096, 7
        %v1098 = vsub.s32 1, %v1097
        %v1099 = vrot.slane %v904, %v1098
        %v1100 = vlaneseq
        %v1101 = vshrl.u32 %v1100, 7
        %v1102 = vsub.s32 2, %v1101
        %v1103 = vrot.slane %v904, %v1102
        %v1104 = vlaneseq
        %v1105 = vshrl.u32 %v1104, 7
        %v1106 = vsub.s32 3, %v1105
        %v1107 = vrot.slane %v904, %v1106
        %v1108 = vlaneseq
        %v1109 = vshrl.u32 %v1108, 7
        %v1110 = vsub.s32 4, %v1109
        %v1111 = vrot.slane %v904, %v1110
        %v1112 = vlaneseq
        %v1113 = vshrl.u32 %v1112, 7
        %v1114 = vsub.s32 5, %v1113
        %v1115 = vrot.slane %v904, %v1114
        %v1116 = vlaneseq
        %v1117 = vshrl.u32 %v1116, 7
        %v1118 = vsub.s32 6, %v1117
        %v1119 = vrot.slane %v904, %v1118
        %v1120 = vlaneseq
        %v1121 = vshrl.u32 %v1120, 7
        %v1122 = vsub.s32 7, %v1121
        %v1123 = vrot.slane %v904, %v1122
        %v1124 = vlaneseq
        %v1125 = vshrl.u32 %v1124, 7
        %v1126 = vsub.s32 0, %v1125
        %v1127 = vrot.slane %v905, %v1126
        %v1128 = vlaneseq
        %v1129 = vshrl.u32 %v1128, 7
        %v1130 = vsub.s32 1, %v1129
        %v1131 = vrot.slane %v905, %v1130
        %v1132 = vlaneseq
        %v1133 = vshrl.u32 %v1132, 7
        %v1134 = vsub.s32 2, %v1133
        %v1135 = vrot.slane %v905, %v1134
        %v1136 = vlaneseq
        %v1137 = vshrl.u32 %v1136, 7
        %v1138 = vsub.s32 3, %v1137
        %v1139 = vrot.slane %v905, %v1138
        %v1140 = vlaneseq
        %v1141 = vshrl.u32 %v1140, 7
        %v1142 = vsub.s32 4, %v1141
        %v1143 = vrot.slane %v905, %v1142
        %v1144 = vlaneseq
        %v1145 = vshrl.u32 %v1144, 7
        %v1146 = vsub.s32 5, %v1145
        %v1147 = vrot.slane %v905, %v1146
        %v1148 = vlaneseq
        %v1149 = vshrl.u32 %v1148, 7
        %v1150 = vsub.s32 6, %v1149
        %v1151 = vrot.slane %v905, %v1150
        %v1152 = vlaneseq
        %v1153 = vshrl.u32 %v1152, 7
        %v1154 = vsub.s32 7, %v1153
        %v1155 = vrot.slane %v905, %v1154
        %v1156 = vlaneseq
        %v1157 = vshrl.u32 %v1156, 7
        %v1158 = vsub.s32 0, %v1157
        %v1159 = vrot.slane %v906, %v1158
        %v1160 = vlaneseq
        %v1161 = vshrl.u32 %v1160, 7
        %v1162 = vsub.s32 1, %v1161
        %v1163 = vrot.slane %v906, %v1162
        %v1164 = vlaneseq
        %v1165 = vshrl.u32 %v1164, 7
        %v1166 = vsub.s32 2, %v1165
        %v1167 = vrot.slane %v906, %v1166
        %v1168 = vlaneseq
        %v1169 = vshrl.u32 %v1168, 7
        %v1170 = vsub.s32 3, %v1169
        %v1171 = vrot.slane %v906, %v1170
        %v1172 = vlaneseq
        %v1173 = vshrl.u32 %v1172, 7
        %v1174 = vsub.s32 4, %v1173
        %v1175 = vrot.slane %v906, %v1174
        %v1176 = vlaneseq
        %v1177 = vshrl.u32 %v1176, 7
        %v1178 = vsub.s32 5, %v1177
        %v1179 = vrot.slane %v906, %v1178
        %v1180 = vlaneseq
        %v1181 = vshrl.u32 %v1180, 7
        %v1182 = vsub.s32 6, %v1181
        %v1183 = vrot.slane %v906, %v1182
        %v1184 = vlaneseq
        %v1185 = vshrl.u32 %v1184, 7
        %v1186 = vsub.s32 7, %v1185
        %v1187 = vrot.slane %v906, %v1186
        %v1188 = vlaneseq
        %v1189 = vshrl.u32 %v1188, 7
        %v1190 = vsub.s32 0, %v1189
        %v1191 = vrot.slane %v907, %v1190
        %v1192 = vlaneseq
        %v1193 = vshrl.u32 %v1192, 7
        %v1194 = vsub.s32 1, %v1193
        %v1195 = vrot.slane %v907, %v1194
        %v1196 = vlaneseq
        %v1197 = vshrl.u32 %v1196, 7
        %v1198 = vsub.s32 2, %v1197
        %v1199 = vrot.slane %v907, %v1198
        %v1200 = vlaneseq
        %v1201 = vshrl.u32 %v1200, 7
        %v1202 = vsub.s32 3, %v1201
        %v1203 = vrot.slane %v907, %v1202
        %v1204 = vlaneseq
        %v1205 = vshrl.u32 %v1204, 7
        %v1206 = vsub.s32 4, %v1205
        %v1207 = vrot.slane %v907, %v1206
        %v1208 = vlaneseq
        %v1209 = vshrl.u32 %v1208, 7
        %v1210 = vsub.s32 5, %v1209
        %v1211 = vrot.slane %v907, %v1210
        %v1212 = vlaneseq
        %v1213 = vshrl.u32 %v1212, 7
        %v1214 = vsub.s32 6, %v1213
        %v1215 = vrot.slane %v907, %v1214
        %v1216 = vlaneseq
        %v1217 = vshrl.u32 %v1216, 7
        %v1218 = vsub.s32 7, %v1217
        %v1219 = vrot.slane %v907, %v1218
        %v1220 = vlaneseq
        %v1221 = vshrl.u32 %v1220, 7
        %v1222 = vsub.s32 0, %v1221
        %v1223 = vrot.slane %v908, %v1222
        %v1224 = vlaneseq
        %v1225 = vshrl.u32 %v1224, 7
        %v1226 = vsub.s32 1, %v1225
        %v1227 = vrot.slane %v908, %v1226
        %v1228 = vlaneseq
        %v1229 = vshrl.u32 %v1228, 7
        %v1230 = vsub.s32 2, %v1229
        %v1231 = vrot.slane %v908, %v1230
        %v1232 = vlaneseq
        %v1233 = vshrl.u32 %v1232, 7
        %v1234 = vsub.s32 3, %v1233
        %v1235 = vrot.slane %v908, %v1234
        %v1236 = vlaneseq
        %v1237 = vshrl.u32 %v1236, 7
        %v1238 = vsub.s32 4, %v1237
        %v1239 = vrot.slane %v908, %v1238
        %v1240 = vlaneseq
        %v1241 = vshrl.u32 %v1240, 7
        %v1242 = vsub.s32 5, %v1241
        %v1243 = vrot.slane %v908, %v1242
        %v1244 = vlaneseq
        %v1245 = vshrl.u32 %v1244, 7
        %v1246 = vsub.s32 6, %v1245
        %v1247 = vrot.slane %v908, %v1246
        %v1248 = vlaneseq
        %v1249 = vshrl.u32 %v1248, 7
        %v1250 = vsub.s32 7, %v1249
        %v1251 = vrot.slane %v908, %v1250
        %v1252 = vlaneseq
        %v1253 = vshrl.u32 %v1252, 7
        %v1254 = vsub.s32 0, %v1253
        %v1255 = vrot.slane %v909, %v1254
        %v1256 = vlaneseq
        %v1257 = vshrl.u32 %v1256, 7
        %v1258 = vsub.s32 1, %v1257
        %v1259 = vrot.slane %v909, %v1258
        %v1260 = vlaneseq
        %v1261 = vshrl.u32 %v1260, 7
        %v1262 = vsub.s32 2, %v1261
        %v1263 = vrot.slane %v909, %v1262
        %v1264 = vlaneseq
        %v1265 = vshrl.u32 %v1264, 7
        %v1266 = vsub.s32 3, %v1265
        %v1267 = vrot.slane %v909, %v1266
        %v1268 = vlaneseq
        %v1269 = vshrl.u32 %v1268, 7
        %v1270 = vsub.s32 4, %v1269
        %v1271 = vrot.slane %v909, %v1270
        %v1272 = vlaneseq
        %v1273 = vshrl.u32 %v1272, 7
        %v1274 = vsub.s32 5, %v1273
        %v1275 = vrot.slane %v909, %v1274
        %v1276 = vlaneseq
        %v1277 = vshrl.u32 %v1276, 7
        %v1278 = vsub.s32 6, %v1277
        %v1279 = vrot.slane %v909, %v1278
        %v1280 = vlaneseq
        %v1281 = vshrl.u32 %v1280, 7
        %v1282 = vsub.s32 7, %v1281
        %v1283 = vrot.slane %v909, %v1282
        %v1284 = vlaneseq
        %v1285 = vshrl.u32 %v1284, 7
        %v1286 = vsub.s32 0, %v1285
        %v1287 = vrot.slane %v910, %v1286
        %v1288 = vlaneseq
        %v1289 = vshrl.u32 %v1288, 7
        %v1290 = vsub.s32 1, %v1289
        %v1291 = vrot.slane %v910, %v1290
        %v1292 = vlaneseq
        %v1293 = vshrl.u32 %v1292, 7
        %v1294 = vsub.s32 2, %v1293
        %v1295 = vrot.slane %v910, %v1294
        %v1296 = vlaneseq
        %v1297 = vshrl.u32 %v1296, 7
        %v1298 = vsub.s32 3, %v1297
        %v1299 = vrot.slane %v910, %v1298
        %v1300 = vlaneseq
        %v1301 = vshrl.u32 %v1300, 7
        %v1302 = vsub.s32 4, %v1301
        %v1303 = vrot.slane %v910, %v1302
        %v1304 = vlaneseq
        %v1305 = vshrl.u32 %v1304, 7
        %v1306 = vsub.s32 5, %v1305
        %v1307 = vrot.slane %v910, %v1306
        %v1308 = vlaneseq
        %v1309 = vshrl.u32 %v1308, 7
        %v1310 = vsub.s32 6, %v1309
        %v1311 = vrot.slane %v910, %v1310
        %v1312 = vlaneseq
        %v1313 = vshrl.u32 %v1312, 7
        %v1314 = vsub.s32 7, %v1313
        %v1315 = vrot.slane %v910, %v1314
        %v1316 = vlaneseq
        %v1317 = vshrl.u32 %v1316, 7
        %v1318 = vsub.s32 0, %v1317
        %v1319 = vrot.slane %v911, %v1318
        %v1320 = vlaneseq
        %v1321 = vshrl.u32 %v1320, 7
        %v1322 = vsub.s32 1, %v1321
        %v1323 = vrot.slane %v911, %v1322
        %v1324 = vlaneseq
        %v1325 = vshrl.u32 %v1324, 7
        %v1326 = vsub.s32 2, %v1325
        %v1327 = vrot.slane %v911, %v1326
        %v1328 = vlaneseq
        %v1329 = vshrl.u32 %v1328, 7
        %v1330 = vsub.s32 3, %v1329
        %v1331 = vrot.slane %v911, %v1330
        %v1332 = vlaneseq
        %v1333 = vshrl.u32 %v1332, 7
        %v1334 = vsub.s32 4, %v1333
        %v1335 = vrot.slane %v911, %v1334
        %v1336 = vlaneseq
        %v1337 = vshrl.u32 %v1336, 7
        %v1338 = vsub.s32 5, %v1337
        %v1339 = vrot.slane %v911, %v1338
        %v1340 = vlaneseq
        %v1341 = vshrl.u32 %v1340, 7
        %v1342 = vsub.s32 6, %v1341
        %v1343 = vrot.slane %v911, %v1342
        %v1344 = vlaneseq
        %v1345 = vshrl.u32 %v1344, 7
        %v1346 = vsub.s32 7, %v1345
        %v1347 = vrot.slane %v911, %v1346
        %v1348 = vlaneseq
        %v1349 = vshrl.u32 %v1348, 7
        %v1350 = vsub.s32 0, %v1349
        %v1351 = vrot.slane %v912, %v1350
        %v1352 = vlaneseq
        %v1353 = vshrl.u32 %v1352, 7
        %v1354 = vsub.s32 1, %v1353
        %v1355 = vrot.slane %v912, %v1354
        %v1356 = vlaneseq
        %v1357 = vshrl.u32 %v1356, 7
        %v1358 = vsub.s32 2, %v1357
        %v1359 = vrot.slane %v912, %v1358
        %v1360 = vlaneseq
        %v1361 = vshrl.u32 %v1360, 7
        %v1362 = vsub.s32 3, %v1361
        %v1363 = vrot.slane %v912, %v1362
        %v1364 = vlaneseq
        %v1365 = vshrl.u32 %v1364, 7
        %v1366 = vsub.s32 4, %v1365
        %v1367 = vrot.slane %v912, %v1366
        %v1368 = vlaneseq
        %v1369 = vshrl.u32 %v1368, 7
        %v1370 = vsub.s32 5, %v1369
        %v1371 = vrot.slane %v912, %v1370
        %v1372 = vlaneseq
        %v1373 = vshrl.u32 %v1372, 7
        %v1374 = vsub.s32 6, %v1373
        %v1375 = vrot.slane %v912, %v1374
        %v1376 = vlaneseq
        %v1377 = vshrl.u32 %v1376, 7
        %v1378 = vsub.s32 7, %v1377
        %v1379 = vrot.slane %v912, %v1378
        %v1380 = vlaneseq
        %v1381 = vshrl.u32 %v1380, 7
        %v1382 = vsub.s32 0, %v1381
        %v1383 = vrot.slane %v913, %v1382
        %v1384 = vlaneseq
        %v1385 = vshrl.u32 %v1384, 7
        %v1386 = vsub.s32 1, %v1385
        %v1387 = vrot.slane %v913, %v1386
        %v1388 = vlaneseq
        %v1389 = vshrl.u32 %v1388, 7
        %v1390 = vsub.s32 2, %v1389
        %v1391 = vrot.slane %v913, %v1390
        %v1392 = vlaneseq
        %v1393 = vshrl.u32 %v1392, 7
        %v1394 = vsub.s32 3, %v1393
        %v1395 = vrot.slane %v913, %v1394
        %v1396 = vlaneseq
        %v1397 = vshrl.u32 %v1396, 7
        %v1398 = vsub.s32 4, %v1397
        %v1399 = vrot.slane %v913, %v1398
        %v1400 = vlaneseq
        %v1401 = vshrl.u32 %v1400, 7
        %v1402 = vsub.s32 5, %v1401
        %v1403 = vrot.slane %v913, %v1402
        %v1404 = vlaneseq
        %v1405 = vshrl.u32 %v1404, 7
        %v1406 = vsub.s32 6, %v1405
        %v1407 = vrot.slane %v913, %v1406
        %v1408 = vlaneseq
        %v1409 = vshrl.u32 %v1408, 7
        %v1410 = vsub.s32 7, %v1409
        %v1411 = vrot.slane %v913, %v1410
        %v1412 = vlaneseq
        %v1413 = vshrl.u32 %v1412, 7
        %v1414 = vsub.s32 0, %v1413
        %v1415 = vrot.slane %v914, %v1414
        %v1416 = vlaneseq
        %v1417 = vshrl.u32 %v1416, 7
        %v1418 = vsub.s32 1, %v1417
        %v1419 = vrot.slane %v914, %v1418
        %v1420 = vlaneseq
        %v1421 = vshrl.u32 %v1420, 7
        %v1422 = vsub.s32 2, %v1421
        %v1423 = vrot.slane %v914, %v1422
        %v1424 = vlaneseq
        %v1425 = vshrl.u32 %v1424, 7
        %v1426 = vsub.s32 3, %v1425
        %v1427 = vrot.slane %v914, %v1426
        %v1428 = vlaneseq
        %v1429 = vshrl.u32 %v1428, 7
        %v1430 = vsub.s32 4, %v1429
        %v1431 = vrot.slane %v914, %v1430
        %v1432 = vlaneseq
        %v1433 = vshrl.u32 %v1432, 7
        %v1434 = vsub.s32 5, %v1433
        %v1435 = vrot.slane %v914, %v1434
        %v1436 = vlaneseq
        %v1437 = vshrl.u32 %v1436, 7
        %v1438 = vsub.s32 6, %v1437
        %v1439 = vrot.slane %v914, %v1438
        %v1440 = vlaneseq
        %v1441 = vshrl.u32 %v1440, 7
        %v1442 = vsub.s32 7, %v1441
        %v1443 = vrot.slane %v914, %v1442
        %v1444 = vlaneseq
        %v1445 = vshrl.u32 %v1444, 7
        %v1446 = vsub.s32 0, %v1445
        %v1447 = vrot.slane %v915, %v1446
        %v1448 = vlaneseq
        %v1449 = vshrl.u32 %v1448, 7
        %v1450 = vsub.s32 1, %v1449
        %v1451 = vrot.slane %v915, %v1450
        %v1452 = vlaneseq
        %v1453 = vshrl.u32 %v1452, 7
        %v1454 = vsub.s32 2, %v1453
        %v1455 = vrot.slane %v915, %v1454
        %v1456 = vlaneseq
        %v1457 = vshrl.u32 %v1456, 7
        %v1458 = vsub.s32 3, %v1457
        %v1459 = vrot.slane %v915, %v1458
        %v1460 = vlaneseq
        %v1461 = vshrl.u32 %v1460, 7
        %v1462 = vsub.s32 4, %v1461
        %v1463 = vrot.slane %v915, %v1462
        %v1464 = vlaneseq
        %v1465 = vshrl.u32 %v1464, 7
        %v1466 = vsub.s32 5, %v1465
        %v1467 = vrot.slane %v915, %v1466
        %v1468 = vlaneseq
        %v1469 = vshrl.u32 %v1468, 7
        %v1470 = vsub.s32 6, %v1469
        %v1471 = vrot.slane %v915, %v1470
        %v1472 = vlaneseq
        %v1473 = vshrl.u32 %v1472, 7
        %v1474 = vsub.s32 7, %v1473
        %v1475 = vrot.slane %v915, %v1474
        %v1476 = vlaneseq
        %v1477 = vshrl.u32 %v1476, 7
        %v1478 = vsub.s32 0, %v1477
        %v1479 = vrot.slane %v916, %v1478
        %v1480 = vlaneseq
        %v1481 = vshrl.u32 %v1480, 7
        %v1482 = vsub.s32 1, %v1481
        %v1483 = vrot.slane %v916, %v1482
        %v1484 = vlaneseq
        %v1485 = vshrl.u32 %v1484, 7
        %v1486 = vsub.s32 2, %v1485
        %v1487 = vrot.slane %v916, %v1486
        %v1488 = vlaneseq
        %v1489 = vshrl.u32 %v1488, 7
        %v1490 = vsub.s32 3, %v1489
        %v1491 = vrot.slane %v916, %v1490
        %v1492 = vlaneseq
        %v1493 = vshrl.u32 %v1492, 7
        %v1494 = vsub.s32 4, %v1493
        %v1495 = vrot.slane %v916, %v1494
        %v1496 = vlaneseq
        %v1497 = vshrl.u32 %v1496, 7
        %v1498 = vsub.s32 5, %v1497
        %v1499 = vrot.slane %v916, %v1498
        %v1500 = vlaneseq
        %v1501 = vshrl.u32 %v1500, 7
        %v1502 = vsub.s32 6, %v1501
        %v1503 = vrot.slane %v916, %v1502
        %v1504 = vlaneseq
        %v1505 = vshrl.u32 %v1504, 7
        %v1506 = vsub.s32 7, %v1505
        %v1507 = vrot.slane %v916, %v1506
        %v1508 = vlaneseq
        %v1509 = vshrl.u32 %v1508, 7
        %v1510 = vsub.s32 0, %v1509
        %v1511 = vrot.slane %v917, %v1510
        %v1512 = vlaneseq
        %v1513 = vshrl.u32 %v1512, 7
        %v1514 = vsub.s32 1, %v1513
        %v1515 = vrot.slane %v917, %v1514
        %v1516 = vlaneseq
        %v1517 = vshrl.u32 %v1516, 7
        %v1518 = vsub.s32 2, %v1517
        %v1519 = vrot.slane %v917, %v1518
        %v1520 = vlaneseq
        %v1521 = vshrl.u32 %v1520, 7
        %v1522 = vsub.s32 3, %v1521
        %v1523 = vrot.slane %v917, %v1522
        %v1524 = vlaneseq
        %v1525 = vshrl.u32 %v1524, 7
        %v1526 = vsub.s32 4, %v1525
        %v1527 = vrot.slane %v917, %v1526
        %v1528 = vlaneseq
        %v1529 = vshrl.u32 %v1528, 7
        %v1530 = vsub.s32 5, %v1529
        %v1531 = vrot.slane %v917, %v1530
        %v1532 = vlaneseq
        %v1533 = vshrl.u32 %v1532, 7
        %v1534 = vsub.s32 6, %v1533
        %v1535 = vrot.slane %v917, %v1534
        %v1536 = vlaneseq
        %v1537 = vshrl.u32 %v1536, 7
        %v1538 = vsub.s32 7, %v1537
        %v1539 = vrot.slane %v917, %v1538
        %v1540 = vlaneseq
        %v1541 = vshrl.u32 %v1540, 7
        %v1542 = vsub.s32 0, %v1541
        %v1543 = vrot.slane %v918, %v1542
        %v1544 = vlaneseq
        %v1545 = vshrl.u32 %v1544, 7
        %v1546 = vsub.s32 1, %v1545
        %v1547 = vrot.slane %v918, %v1546
        %v1548 = vlaneseq
        %v1549 = vshrl.u32 %v1548, 7
        %v1550 = vsub.s32 2, %v1549
        %v1551 = vrot.slane %v918, %v1550
        %v1552 = vlaneseq
        %v1553 = vshrl.u32 %v1552, 7
        %v1554 = vsub.s32 3, %v1553
        %v1555 = vrot.slane %v918, %v1554
        %v1556 = vlaneseq
        %v1557 = vshrl.u32 %v1556, 7
        %v1558 = vsub.s32 4, %v1557
        %v1559 = vrot.slane %v918, %v1558
        %v1560 = vlaneseq
        %v1561 = vshrl.u32 %v1560, 7
        %v1562 = vsub.s32 5, %v1561
        %v1563 = vrot.slane %v918, %v1562
        %v1564 = vlaneseq
        %v1565 = vshrl.u32 %v1564, 7
        %v1566 = vsub.s32 6, %v1565
        %v1567 = vrot.slane %v918, %v1566
        %v1568 = vlaneseq
        %v1569 = vshrl.u32 %v1568, 7
        %v1570 = vsub.s32 7, %v1569
        %v1571 = vrot.slane %v918, %v1570
        %v1572 = vlaneseq
        %v1573 = vshrl.u32 %v1572, 7
        %v1574 = vsub.s32 0, %v1573
        %v1575 = vrot.slane %v919, %v1574
        %v1576 = vlaneseq
        %v1577 = vshrl.u32 %v1576, 7
        %v1578 = vsub.s32 1, %v1577
        %v1579 = vrot.slane %v919, %v1578
        %v1580 = vlaneseq
        %v1581 = vshrl.u32 %v1580, 7
        %v1582 = vsub.s32 2, %v1581
        %v1583 = vrot.slane %v919, %v1582
        %v1584 = vlaneseq
        %v1585 = vshrl.u32 %v1584, 7
        %v1586 = vsub.s32 3, %v1585
        %v1587 = vrot.slane %v919, %v1586
        %v1588 = vlaneseq
        %v1589 = vshrl.u32 %v1588, 7
        %v1590 = vsub.s32 4, %v1589
        %v1591 = vrot.slane %v919, %v1590
        %v1592 = vlaneseq
        %v1593 = vshrl.u32 %v1592, 7
        %v1594 = vsub.s32 5, %v1593
        %v1595 = vrot.slane %v919, %v1594
        %v1596 = vlaneseq
        %v1597 = vshrl.u32 %v1596, 7
        %v1598 = vsub.s32 6, %v1597
        %v1599 = vrot.slane %v919, %v1598
        %v1600 = vlaneseq
        %v1601 = vshrl.u32 %v1600, 7
        %v1602 = vsub.s32 7, %v1601
        %v1603 = vrot.slane %v919, %v1602
        %v1604 = vlaneseq
        %v1605 = vshrl.u32 %v1604, 7
        %v1606 = vsub.s32 0, %v1605
        %v1607 = vrot.slane %v920, %v1606
        %v1608 = vlaneseq
        %v1609 = vshrl.u32 %v1608, 7
        %v1610 = vsub.s32 1, %v1609
        %v1611 = vrot.slane %v920, %v1610
        %v1612 = vlaneseq
        %v1613 = vshrl.u32 %v1612, 7
        %v1614 = vsub.s32 2, %v1613
        %v1615 = vrot.slane %v920, %v1614
        %v1616 = vlaneseq
        %v1617 = vshrl.u32 %v1616, 7
        %v1618 = vsub.s32 3, %v1617
        %v1619 = vrot.slane %v920, %v1618
        %v1620 = vlaneseq
        %v1621 = vshrl.u32 %v1620, 7
        %v1622 = vsub.s32 4, %v1621
        %v1623 = vrot.slane %v920, %v1622
        %v1624 = vlaneseq
        %v1625 = vshrl.u32 %v1624, 7
        %v1626 = vsub.s32 5, %v1625
        %v1627 = vrot.slane %v920, %v1626
        %v1628 = vlaneseq
        %v1629 = vshrl.u32 %v1628, 7
        %v1630 = vsub.s32 6, %v1629
        %v1631 = vrot.slane %v920, %v1630
        %v1632 = vlaneseq
        %v1633 = vshrl.u32 %v1632, 7
        %v1634 = vsub.s32 7, %v1633
        %v1635 = vrot.slane %v920, %v1634
        %v1636 = vlaneseq
        %v1637 = vshrl.u32 %v1636, 7
        %v1638 = vsub.s32 0, %v1637
        %v1639 = vrot.slane %v921, %v1638
        %v1640 = vlaneseq
        %v1641 = vshrl.u32 %v1640, 7
        %v1642 = vsub.s32 1, %v1641
        %v1643 = vrot.slane %v921, %v1642
        %v1644 = vlaneseq
        %v1645 = vshrl.u32 %v1644, 7
        %v1646 = vsub.s32 2, %v1645
        %v1647 = vrot.slane %v921, %v1646
        %v1648 = vlaneseq
        %v1649 = vshrl.u32 %v1648, 7
        %v1650 = vsub.s32 3, %v1649
        %v1651 = vrot.slane %v921, %v1650
        %v1652 = vlaneseq
        %v1653 = vshrl.u32 %v1652, 7
        %v1654 = vsub.s32 4, %v1653
        %v1655 = vrot.slane %v921, %v1654
        %v1656 = vlaneseq
        %v1657 = vshrl.u32 %v1656, 7
        %v1658 = vsub.s32 5, %v1657
        %v1659 = vrot.slane %v921, %v1658
        %v1660 = vlaneseq
        %v1661 = vshrl.u32 %v1660, 7
        %v1662 = vsub.s32 6, %v1661
        %v1663 = vrot.slane %v921, %v1662
        %v1664 = vlaneseq
        %v1665 = vshrl.u32 %v1664, 7
        %v1666 = vsub.s32 7, %v1665
        %v1667 = vrot.slane %v921, %v1666
        %v1668 = vlaneseq
        %v1669 = vshrl.u32 %v1668, 7
        %v1670 = vsub.s32 0, %v1669
        %v1671 = vrot.slane %v922, %v1670
        %v1672 = vlaneseq
        %v1673 = vshrl.u32 %v1672, 7
        %v1674 = vsub.s32 1, %v1673
        %v1675 = vrot.slane %v922, %v1674
        %v1676 = vlaneseq
        %v1677 = vshrl.u32 %v1676, 7
        %v1678 = vsub.s32 2, %v1677
        %v1679 = vrot.slane %v922, %v1678
        %v1680 = vlaneseq
        %v1681 = vshrl.u32 %v1680, 7
        %v1682 = vsub.s32 3, %v1681
        %v1683 = vrot.slane %v922, %v1682
        %v1684 = vlaneseq
        %v1685 = vshrl.u32 %v1684, 7
        %v1686 = vsub.s32 4, %v1685
        %v1687 = vrot.slane %v922, %v1686
        %v1688 = vlaneseq
        %v1689 = vshrl.u32 %v1688, 7
        %v1690 = vsub.s32 5, %v1689
        %v1691 = vrot.slane %v922, %v1690
        %v1692 = vlaneseq
        %v1693 = vshrl.u32 %v1692, 7
        %v1694 = vsub.s32 6, %v1693
        %v1695 = vrot.slane %v922, %v1694
        %v1696 = vlaneseq
        %v1697 = vshrl.u32 %v1696, 7
        %v1698 = vsub.s32 7, %v1697
        %v1699 = vrot.slane %v922, %v1698
        %v1700 = vlaneseq
        %v1701 = vshrl.u32 %v1700, 7
        %v1702 = vsub.s32 0, %v1701
        %v1703 = vrot.slane %v923, %v1702
        %v1704 = vlaneseq
        %v1705 = vshrl.u32 %v1704, 7
        %v1706 = vsub.s32 1, %v1705
        %v1707 = vrot.slane %v923, %v1706
        %v1708 = vlaneseq
        %v1709 = vshrl.u32 %v1708, 7
        %v1710 = vsub.s32 2, %v1709
        %v1711 = vrot.slane %v923, %v1710
        %v1712 = vlaneseq
        %v1713 = vshrl.u32 %v1712, 7
        %v1714 = vsub.s32 3, %v1713
        %v1715 = vrot.slane %v923, %v1714
        %v1716 = vlaneseq
        %v1717 = vshrl.u32 %v1716, 7
        %v1718 = vsub.s32 4, %v1717
        %v1719 = vrot.slane %v923, %v1718
        %v1720 = vlaneseq
        %v1721 = vshrl.u32 %v1720, 7
        %v1722 = vsub.s32 5, %v1721
        %v1723 = vrot.slane %v923, %v1722
        %v1724 = vlaneseq
        %v1725 = vshrl.u32 %v1724, 7
        %v1726 = vsub.s32 6, %v1725
        %v1727 = vrot.slane %v923, %v1726
        %v1728 = vlaneseq
        %v1729 = vshrl.u32 %v1728, 7
        %v1730 = vsub.s32 7, %v1729
        %v1731 = vrot.slane %v923, %v1730
        %v1732 = vlaneseq
        %v1733 = vshrl.u32 %v1732, 7
        %v1734 = vsub.s32 0, %v1733
        %v1735 = vrot.slane %v924, %v1734
        %v1736 = vlaneseq
        %v1737 = vshrl.u32 %v1736, 7
        %v1738 = vsub.s32 1, %v1737
        %v1739 = vrot.slane %v924, %v1738
        %v1740 = vlaneseq
        %v1741 = vshrl.u32 %v1740, 7
        %v1742 = vsub.s32 2, %v1741
        %v1743 = vrot.slane %v924, %v1742
        %v1744 = vlaneseq
        %v1745 = vshrl.u32 %v1744, 7
        %v1746 = vsub.s32 3, %v1745
        %v1747 = vrot.slane %v924, %v1746
        %v1748 = vlaneseq
        %v1749 = vshrl.u32 %v1748, 7
        %v1750 = vsub.s32 4, %v1749
        %v1751 = vrot.slane %v924, %v1750
        %v1752 = vlaneseq
        %v1753 = vshrl.u32 %v1752, 7
        %v1754 = vsub.s32 5, %v1753
        %v1755 = vrot.slane %v924, %v1754
        %v1756 = vlaneseq
        %v1757 = vshrl.u32 %v1756, 7
        %v1758 = vsub.s32 6, %v1757
        %v1759 = vrot.slane %v924, %v1758
        %v1760 = vlaneseq
        %v1761 = vshrl.u32 %v1760, 7
        %v1762 = vsub.s32 7, %v1761
        %v1763 = vrot.slane %v924, %v1762
        %v1764 = vlaneseq
        %v1765 = vshrl.u32 %v1764, 7
        %v1766 = vsub.s32 0, %v1765
        %v1767 = vrot.slane %v925, %v1766
        %v1768 = vlaneseq
        %v1769 = vshrl.u32 %v1768, 7
        %v1770 = vsub.s32 1, %v1769
        %v1771 = vrot.slane %v925, %v1770
        %v1772 = vlaneseq
        %v1773 = vshrl.u32 %v1772, 7
        %v1774 = vsub.s32 2, %v1773
        %v1775 = vrot.slane %v925, %v1774
        %v1776 = vlaneseq
        %v1777 = vshrl.u32 %v1776, 7
        %v1778 = vsub.s32 3, %v1777
        %v1779 = vrot.slane %v925, %v1778
        %v1780 = vlaneseq
        %v1781 = vshrl.u32 %v1780, 7
        %v1782 = vsub.s32 4, %v1781
        %v1783 = vrot.slane %v925, %v1782
        %v1784 = vlaneseq
        %v1785 = vshrl.u32 %v1784, 7
        %v1786 = vsub.s32 5, %v1785
        %v1787 = vrot.slane %v925, %v1786
        %v1788 = vlaneseq
        %v1789 = vshrl.u32 %v1788, 7
        %v1790 = vsub.s32 6, %v1789
        %v1791 = vrot.slane %v925, %v1790
        %v1792 = vlaneseq
        %v1793 = vshrl.u32 %v1792, 7
        %v1794 = vsub.s32 7, %v1793
        %v1795 = vrot.slane %v925, %v1794
        %v1796 = vlaneseq
        %v1797 = vshrl.u32 %v1796, 7
        %v1798 = vsub.s32 0, %v1797
        %v1799 = vrot.slane %v926, %v1798
        %v1800 = vlaneseq
        %v1801 = vshrl.u32 %v1800, 7
        %v1802 = vsub.s32 1, %v1801
        %v1803 = vrot.slane %v926, %v1802
        %v1804 = vlaneseq
        %v1805 = vshrl.u32 %v1804, 7
        %v1806 = vsub.s32 2, %v1805
        %v1807 = vrot.slane %v926, %v1806
        %v1808 = vlaneseq
        %v1809 = vshrl.u32 %v1808, 7
        %v1810 = vsub.s32 3, %v1809
        %v1811 = vrot.slane %v926, %v1810
        %v1812 = vlaneseq
        %v1813 = vshrl.u32 %v1812, 7
        %v1814 = vsub.s32 4, %v1813
        %v1815 = vrot.slane %v926, %v1814
        %v1816 = vlaneseq
        %v1817 = vshrl.u32 %v1816, 7
        %v1818 = vsub.s32 5, %v1817
        %v1819 = vrot.slane %v926, %v1818
        %v1820 = vlaneseq
        %v1821 = vshrl.u32 %v1820, 7
        %v1822 = vsub.s32 6, %v1821
        %v1823 = vrot.slane %v926, %v1822
        %v1824 = vlaneseq
        %v1825 = vshrl.u32 %v1824, 7
        %v1826 = vsub.s32 7, %v1825
        %v1827 = vrot.slane %v926, %v1826
        %v1828 = vlaneseq
        %v1829 = vshrl.u32 %v1828, 7
        %v1830 = vsub.s32 0, %v1829
        %v1831 = vrot.slane %v927, %v1830
        %v1832 = vlaneseq
        %v1833 = vshrl.u32 %v1832, 7
        %v1834 = vsub.s32 1, %v1833
        %v1835 = vrot.slane %v927, %v1834
        %v1836 = vlaneseq
        %v1837 = vshrl.u32 %v1836, 7
        %v1838 = vsub.s32 2, %v1837
        %v1839 = vrot.slane %v927, %v1838
        %v1840 = vlaneseq
        %v1841 = vshrl.u32 %v1840, 7
        %v1842 = vsub.s32 3, %v1841
        %v1843 = vrot.slane %v927, %v1842
        %v1844 = vlaneseq
        %v1845 = vshrl.u32 %v1844, 7
        %v1846 = vsub.s32 4, %v1845
        %v1847 = vrot.slane %v927, %v1846
        %v1848 = vlaneseq
        %v1849 = vshrl.u32 %v1848, 7
        %v1850 = vsub.s32 5, %v1849
        %v1851 = vrot.slane %v927, %v1850
        %v1852 = vlaneseq
        %v1853 = vshrl.u32 %v1852, 7
        %v1854 = vsub.s32 6, %v1853
        %v1855 = vrot.slane %v927, %v1854
        %v1856 = vlaneseq
        %v1857 = vshrl.u32 %v1856, 7
        %v1858 = vsub.s32 7, %v1857
        %v1859 = vrot.slane %v927, %v1858
        %v1860 = vlaneseq
        %v1861 = vshrl.u32 %v1860, 7
        %v1862 = vsub.s32 0, %v1861
        %v1863 = vrot.slane %v928, %v1862
        %v1864 = vlaneseq
        %v1865 = vshrl.u32 %v1864, 7
        %v1866 = vsub.s32 1, %v1865
        %v1867 = vrot.slane %v928, %v1866
        %v1868 = vlaneseq
        %v1869 = vshrl.u32 %v1868, 7
        %v1870 = vsub.s32 2, %v1869
        %v1871 = vrot.slane %v928, %v1870
        %v1872 = vlaneseq
        %v1873 = vshrl.u32 %v1872, 7
        %v1874 = vsub.s32 3, %v1873
        %v1875 = vrot.slane %v928, %v1874
        %v1876 = vlaneseq
        %v1877 = vshrl.u32 %v1876, 7
        %v1878 = vsub.s32 4, %v1877
        %v1879 = vrot.slane %v928, %v1878
        %v1880 = vlaneseq
        %v1881 = vshrl.u32 %v1880, 7
        %v1882 = vsub.s32 5, %v1881
        %v1883 = vrot.slane %v928, %v1882
        %v1884 = vlaneseq
        %v1885 = vshrl.u32 %v1884, 7
        %v1886 = vsub.s32 6, %v1885
        %v1887 = vrot.slane %v928, %v1886
        %v1888 = vlaneseq
        %v1889 = vshrl.u32 %v1888, 7
        %v1890 = vsub.s32 7, %v1889
        %v1891 = vrot.slane %v928, %v1890
        %v1892 = vlaneseq
        %v1893 = vshrl.u32 %v1892, 7
        %v1894 = vsub.s32 0, %v1893
        %v1895 = vrot.slane %v929, %v1894
        %v1896 = vlaneseq
        %v1897 = vshrl.u32 %v1896, 7
        %v1898 = vsub.s32 1, %v1897
        %v1899 = vrot.slane %v929, %v1898
        %v1900 = vlaneseq
        %v1901 = vshrl.u32 %v1900, 7
        %v1902 = vsub.s32 2, %v1901
        %v1903 = vrot.slane %v929, %v1902
        %v1904 = vlaneseq
        %v1905 = vshrl.u32 %v1904, 7
        %v1906 = vsub.s32 3, %v1905
        %v1907 = vrot.slane %v929, %v1906
        %v1908 = vlaneseq
        %v1909 = vshrl.u32 %v1908, 7
        %v1910 = vsub.s32 4, %v1909
        %v1911 = vrot.slane %v929, %v1910
        %v1912 = vlaneseq
        %v1913 = vshrl.u32 %v1912, 7
        %v1914 = vsub.s32 5, %v1913
        %v1915 = vrot.slane %v929, %v1914
        %v1916 = vlaneseq
        %v1917 = vshrl.u32 %v1916, 7
        %v1918 = vsub.s32 6, %v1917
        %v1919 = vrot.slane %v929, %v1918
        %v1920 = vlaneseq
        %v1921 = vshrl.u32 %v1920, 7
        %v1922 = vsub.s32 7, %v1921
        %v1923 = vrot.slane %v929, %v1922
        %v1924 = vlaneseq
        %v1925 = vshrl.u32 %v1924, 7
        %v1926 = vsub.s32 0, %v1925
        %v1927 = vrot.slane %v930, %v1926
        %v1928 = vlaneseq
        %v1929 = vshrl.u32 %v1928, 7
        %v1930 = vsub.s32 1, %v1929
        %v1931 = vrot.slane %v930, %v1930
        %v1932 = vlaneseq
        %v1933 = vshrl.u32 %v1932, 7
        %v1934 = vsub.s32 2, %v1933
        %v1935 = vrot.slane %v930, %v1934
        %v1936 = vlaneseq
        %v1937 = vshrl.u32 %v1936, 7
        %v1938 = vsub.s32 3, %v1937
        %v1939 = vrot.slane %v930, %v1938
        %v1940 = vlaneseq
        %v1941 = vshrl.u32 %v1940, 7
        %v1942 = vsub.s32 4, %v1941
        %v1943 = vrot.slane %v930, %v1942
        %v1944 = vlaneseq
        %v1945 = vshrl.u32 %v1944, 7
        %v1946 = vsub.s32 5, %v1945
        %v1947 = vrot.slane %v930, %v1946
        %v1948 = vlaneseq
        %v1949 = vshrl.u32 %v1948, 7
        %v1950 = vsub.s32 6, %v1949
        %v1951 = vrot.slane %v930, %v1950
        %v1952 = vlaneseq
        %v1953 = vshrl.u32 %v1952, 7
        %v1954 = vsub.s32 7, %v1953
        %v1955 = vrot.slane %v930, %v1954
        %v1956 = vlaneseq
        %v1957 = vshrl.u32 %v1956, 7
        %v1958 = vsub.s32 0, %v1957
        %v1959 = vrot.slane %v931, %v1958
        %v1960 = vlaneseq
        %v1961 = vshrl.u32 %v1960, 7
        %v1962 = vsub.s32 1, %v1961
        %v1963 = vrot.slane %v931, %v1962
        %v1964 = vlaneseq
        %v1965 = vshrl.u32 %v1964, 7
        %v1966 = vsub.s32 2, %v1965
        %v1967 = vrot.slane %v931, %v1966
        %v1968 = vlaneseq
        %v1969 = vshrl.u32 %v1968, 7
        %v1970 = vsub.s32 3, %v1969
        %v1971 = vrot.slane %v931, %v1970
        %v1972 = vlaneseq
        %v1973 = vshrl.u32 %v1972, 7
        %v1974 = vsub.s32 4, %v1973
        %v1975 = vrot.slane %v931, %v1974
        %v1976 = vlaneseq
        %v1977 = vshrl.u32 %v1976, 7
        %v1978 = vsub.s32 5, %v1977
        %v1979 = vrot.slane %v931, %v1978
        %v1980 = vlaneseq
        %v1981 = vshrl.u32 %v1980, 7
        %v1982 = vsub.s32 6, %v1981
        %v1983 = vrot.slane %v931, %v1982
        %v1984 = vlaneseq
        %v1985 = vshrl.u32 %v1984, 7
        %v1986 = vsub.s32 7, %v1985
        %v1987 = vrot.slane %v931, %v1986
        %v1988 = vcombine.low %v967, %v971
        %v1989 = vcombine.low %v975, %v979
        %v1990 = vcombine.low %v983, %v987
        %v1991 = vcombine.low %v991, %v995
        %v1993 = vunpack.c.l.s4 1966171168
        %v1994 = vunpack.c.0.s8 %v1993
        %v1995 = vlaneseq
        %v1996 = vshrl.u32 %v1995, 7
        %v1997 = vsub.s32 %v1994, %v1996
        %v1998 = vrot.slane %v1988, %v1997
        %v2000 = vunpack.c.l.s4 1966171168
        %v2001 = vunpack.c.0.s8 %v2000
        %v2002 = vlaneseq
        %v2003 = vshrl.u32 %v2002, 7
        %v2004 = vsub.s32 %v2001, %v2003
        %v2005 = vrot.slane %v1989, %v2004
        %v2007 = vunpack.c.l.s4 1966171168
        %v2008 = vunpack.c.0.s8 %v2007
        %v2009 = vlaneseq
        %v2010 = vshrl.u32 %v2009, 7
        %v2011 = vsub.s32 %v2008, %v2010
        %v2012 = vrot.slane %v1990, %v2011
        %v2014 = vunpack.c.l.s4 1966171168
        %v2015 = vunpack.c.0.s8 %v2014
        %v2016 = vlaneseq
        %v2017 = vshrl.u32 %v2016, 7
        %v2018 = vsub.s32 %v2015, %v2017
        %v2019 = vrot.slane %v1991, %v2018
        %v2020 = vcombine.low %v1998, %v2005
        %v2021 = vcombine.low %v2012, %v2019
        %v2023 = vunpack.c.l.s4 1966171168
        %v2024 = vunpack.c.0.s8 %v2023
        %v2025 = vlaneseq
        %v2026 = vshrl.u32 %v2025, 7
        %v2027 = vsub.s32 %v2024, %v2026
        %v2028 = vrot.slane %v2020, %v2027
        %v2030 = vunpack.c.l.s4 1966171168
        %v2031 = vunpack.c.0.s8 %v2030
        %v2032 = vlaneseq
        %v2033 = vshrl.u32 %v2032, 7
        %v2034 = vsub.s32 %v2031, %v2033
        %v2035 = vrot.slane %v2021, %v2034
        %v2036 = vcombine.low %v2028, %v2035
        %v2037 = vcombine.low %v999, %v1003
        %v2038 = vcombine.low %v1007, %v1011
        %v2039 = vcombine.low %v1015, %v1019
        %v2040 = vcombine.low %v1023, %v1027
        %v2042 = vunpack.c.l.s4 1966171168
        %v2043 = vunpack.c.0.s8 %v2042
        %v2044 = vlaneseq
        %v2045 = vshrl.u32 %v2044, 7
        %v2046 = vsub.s32 %v2043, %v2045
        %v2047 = vrot.slane %v2037, %v2046
        %v2049 = vunpack.c.l.s4 1966171168
        %v2050 = vunpack.c.0.s8 %v2049
        %v2051 = vlaneseq
        %v2052 = vshrl.u32 %v2051, 7
        %v2053 = vsub.s32 %v2050, %v2052
        %v2054 = vrot.slane %v2038, %v2053
        %v2056 = vunpack.c.l.s4 1966171168
        %v2057 = vunpack.c.0.s8 %v2056
        %v2058 = vlaneseq
        %v2059 = vshrl.u32 %v2058, 7
        %v2060 = vsub.s32 %v2057, %v2059
        %v2061 = vrot.slane %v2039, %v2060
        %v2063 = vunpack.c.l.s4 1966171168
        %v2064 = vunpack.c.0.s8 %v2063
        %v2065 = vlaneseq
        %v2066 = vshrl.u32 %v2065, 7
        %v2067 = vsub.s32 %v2064, %v2066
        %v2068 = vrot.slane %v2040, %v2067
        %v2069 = vcombine.low %v2047, %v2054
        %v2070 = vcombine.low %v2061, %v2068
        %v2072 = vunpack.c.l.s4 1966171168
        %v2073 = vunpack.c.0.s8 %v2072
        %v2074 = vlaneseq
        %v2075 = vshrl.u32 %v2074, 7
        %v2076 = vsub.s32 %v2073, %v2075
        %v2077 = vrot.slane %v2069, %v2076
        %v2079 = vunpack.c.l.s4 1966171168
        %v2080 = vunpack.c.0.s8 %v2079
        %v2081 = vlaneseq
        %v2082 = vshrl.u32 %v2081, 7
        %v2083 = vsub.s32 %v2080, %v2082
        %v2084 = vrot.slane %v2070, %v2083
        %v2085 = vcombine.low %v2077, %v2084
        %v2086 = vcombine.low %v1031, %v1035
        %v2087 = vcombine.low %v1039, %v1043
        %v2088 = vcombine.low %v1047, %v1051
        %v2089 = vcombine.low %v1055, %v1059
        %v2091 = vunpack.c.l.s4 1966171168
        %v2092 = vunpack.c.0.s8 %v2091
        %v2093 = vlaneseq
        %v2094 = vshrl.u32 %v2093, 7
        %v2095 = vsub.s32 %v2092, %v2094
        %v2096 = vrot.slane %v2086, %v2095
        %v2098 = vunpack.c.l.s4 1966171168
        %v2099 = vunpack.c.0.s8 %v2098
        %v2100 = vlaneseq
        %v2101 = vshrl.u32 %v2100, 7
        %v2102 = vsub.s32 %v2099, %v2101
        %v2103 = vrot.slane %v2087, %v2102
        %v2105 = vunpack.c.l.s4 1966171168
        %v2106 = vunpack.c.0.s8 %v2105
        %v2107 = vlaneseq
        %v2108 = vshrl.u32 %v2107, 7
        %v2109 = vsub.s32 %v2106, %v2108
        %v2110 = vrot.slane %v2088, %v2109
        %v2112 = vunpack.c.l.s4 1966171168
        %v2113 = vunpack.c.0.s8 %v2112
        %v2114 = vlaneseq
        %v2115 = vshrl.u32 %v2114, 7
        %v2116 = vsub.s32 %v2113, %v2115
        %v2117 = vrot.slane %v2089, %v2116
        %v2118 = vcombine.low %v2096, %v2103
        %v2119 = vcombine.low %v2110, %v2117
        %v2121 = vunpack.c.l.s4 1966171168
        %v2122 = vunpack.c.0.s8 %v2121
        %v2123 = vlaneseq
        %v2124 = vshrl.u32 %v2123, 7
        %v2125 = vsub.s32 %v2122, %v2124
        %v2126 = vrot.slane %v2118, %v2125
        %v2128 = vunpack.c.l.s4 1966171168
        %v2129 = vunpack.c.0.s8 %v2128
        %v2130 = vlaneseq
        %v2131 = vshrl.u32 %v2130, 7
        %v2132 = vsub.s32 %v2129, %v2131
        %v2133 = vrot.slane %v2119, %v2132
        %v2134 = vcombine.low %v2126, %v2133
        %v2135 = vcombine.low %v1063, %v1067
        %v2136 = vcombine.low %v1071, %v1075
        %v2137 = vcombine.low %v1079, %v1083
        %v2138 = vcombine.low %v1087, %v1091
        %v2140 = vunpack.c.l.s4 1966171168
        %v2141 = vunpack.c.0.s8 %v2140
        %v2142 = vlaneseq
        %v2143 = vshrl.u32 %v2142, 7
        %v2144 = vsub.s32 %v2141, %v2143
        %v2145 = vrot.slane %v2135, %v2144
        %v2147 = vunpack.c.l.s4 1966171168
        %v2148 = vunpack.c.0.s8 %v2147
        %v2149 = vlaneseq
        %v2150 = vshrl.u32 %v2149, 7
        %v2151 = vsub.s32 %v2148, %v2150
        %v2152 = vrot.slane %v2136, %v2151
        %v2154 = vunpack.c.l.s4 1966171168
        %v2155 = vunpack.c.0.s8 %v2154
        %v2156 = vlaneseq
        %v2157 = vshrl.u32 %v2156, 7
        %v2158 = vsub.s32 %v2155, %v2157
        %v2159 = vrot.slane %v2137, %v2158
        %v2161 = vunpack.c.l.s4 1966171168
        %v2162 = vunpack.c.0.s8 %v2161
        %v2163 = vlaneseq
        %v2164 = vshrl.u32 %v2163, 7
        %v2165 = vsub.s32 %v2162, %v2164
        %v2166 = vrot.slane %v2138, %v2165
        %v2167 = vcombine.low %v2145, %v2152
        %v2168 = vcombine.low %v2159, %v2166
        %v2170 = vunpack.c.l.s4 1966171168
        %v2171 = vunpack.c.0.s8 %v2170
        %v2172 = vlaneseq
        %v2173 = vshrl.u32 %v2172, 7
        %v2174 = vsub.s32 %v2171, %v2173
        %v2175 = vrot.slane %v2167, %v2174
        %v2177 = vunpack.c.l.s4 1966171168
        %v2178 = vunpack.c.0.s8 %v2177
        %v2179 = vlaneseq
        %v2180 = vshrl.u32 %v2179, 7
        %v2181 = vsub.s32 %v2178, %v2180
        %v2182 = vrot.slane %v2168, %v2181
        %v2183 = vcombine.low %v2175, %v2182
        %v2184 = vcombine.low %v1095, %v1099
        %v2185 = vcombine.low %v1103, %v1107
        %v2186 = vcombine.low %v1111, %v1115
        %v2187 = vcombine.low %v1119, %v1123
        %v2189 = vunpack.c.l.s4 1966171168
        %v2190 = vunpack.c.0.s8 %v2189
        %v2191 = vlaneseq
        %v2192 = vshrl.u32 %v2191, 7
        %v2193 = vsub.s32 %v2190, %v2192
        %v2194 = vrot.slane %v2184, %v2193
        %v2196 = vunpack.c.l.s4 1966171168
        %v2197 = vunpack.c.0.s8 %v2196
        %v2198 = vlaneseq
        %v2199 = vshrl.u32 %v2198, 7
        %v2200 = vsub.s32 %v2197, %v2199
        %v2201 = vrot.slane %v2185, %v2200
        %v2203 = vunpack.c.l.s4 1966171168
        %v2204 = vunpack.c.0.s8 %v2203
        %v2205 = vlaneseq
        %v2206 = vshrl.u32 %v2205, 7
        %v2207 = vsub.s32 %v2204, %v2206
        %v2208 = vrot.slane %v2186, %v2207
        %v2210 = vunpack.c.l.s4 1966171168
        %v2211 = vunpack.c.0.s8 %v2210
        %v2212 = vlaneseq
        %v2213 = vshrl.u32 %v2212, 7
        %v2214 = vsub.s32 %v2211, %v2213
        %v2215 = vrot.slane %v2187, %v2214
        %v2216 = vcombine.low %v2194, %v2201
        %v2217 = vcombine.low %v2208, %v2215
        %v2219 = vunpack.c.l.s4 1966171168
        %v2220 = vunpack.c.0.s8 %v2219
        %v2221 = vlaneseq
        %v2222 = vshrl.u32 %v2221, 7
        %v2223 = vsub.s32 %v2220, %v2222
        %v2224 = vrot.slane %v2216, %v2223
        %v2226 = vunpack.c.l.s4 1966171168
        %v2227 = vunpack.c.0.s8 %v2226
        %v2228 = vlaneseq
        %v2229 = vshrl.u32 %v2228, 7
        %v2230 = vsub.s32 %v2227, %v2229
        %v2231 = vrot.slane %v2217, %v2230
        %v2232 = vcombine.low %v2224, %v2231
        %v2233 = vcombine.low %v1127, %v1131
        %v2234 = vcombine.low %v1135, %v1139
        %v2235 = vcombine.low %v1143, %v1147
        %v2236 = vcombine.low %v1151, %v1155
        %v2238 = vunpack.c.l.s4 1966171168
        %v2239 = vunpack.c.0.s8 %v2238
        %v2240 = vlaneseq
        %v2241 = vshrl.u32 %v2240, 7
        %v2242 = vsub.s32 %v2239, %v2241
        %v2243 = vrot.slane %v2233, %v2242
        %v2245 = vunpack.c.l.s4 1966171168
        %v2246 = vunpack.c.0.s8 %v2245
        %v2247 = vlaneseq
        %v2248 = vshrl.u32 %v2247, 7
        %v2249 = vsub.s32 %v2246, %v2248
        %v2250 = vrot.slane %v2234, %v2249
        %v2252 = vunpack.c.l.s4 1966171168
        %v2253 = vunpack.c.0.s8 %v2252
        %v2254 = vlaneseq
        %v2255 = vshrl.u32 %v2254, 7
        %v2256 = vsub.s32 %v2253, %v2255
        %v2257 = vrot.slane %v2235, %v2256
        %v2259 = vunpack.c.l.s4 1966171168
        %v2260 = vunpack.c.0.s8 %v2259
        %v2261 = vlaneseq
        %v2262 = vshrl.u32 %v2261, 7
        %v2263 = vsub.s32 %v2260, %v2262
        %v2264 = vrot.slane %v2236, %v2263
        %v2265 = vcombine.low %v2243, %v2250
        %v2266 = vcombine.low %v2257, %v2264
        %v2268 = vunpack.c.l.s4 1966171168
        %v2269 = vunpack.c.0.s8 %v2268
        %v2270 = vlaneseq
        %v2271 = vshrl.u32 %v2270, 7
        %v2272 = vsub.s32 %v2269, %v2271
        %v2273 = vrot.slane %v2265, %v2272
        %v2275 = vunpack.c.l.s4 1966171168
        %v2276 = vunpack.c.0.s8 %v2275
        %v2277 = vlaneseq
        %v2278 = vshrl.u32 %v2277, 7
        %v2279 = vsub.s32 %v2276, %v2278
        %v2280 = vrot.slane %v2266, %v2279
        %v2281 = vcombine.low %v2273, %v2280
        %v2282 = vcombine.low %v1159, %v1163
        %v2283 = vcombine.low %v1167, %v1171
        %v2284 = vcombine.low %v1175, %v1179
        %v2285 = vcombine.low %v1183, %v1187
        %v2287 = vunpack.c.l.s4 1966171168
        %v2288 = vunpack.c.0.s8 %v2287
        %v2289 = vlaneseq
        %v2290 = vshrl.u32 %v2289, 7
        %v2291 = vsub.s32 %v2288, %v2290
        %v2292 = vrot.slane %v2282, %v2291
        %v2294 = vunpack.c.l.s4 1966171168
        %v2295 = vunpack.c.0.s8 %v2294
        %v2296 = vlaneseq
        %v2297 = vshrl.u32 %v2296, 7
        %v2298 = vsub.s32 %v2295, %v2297
        %v2299 = vrot.slane %v2283, %v2298
        %v2301 = vunpack.c.l.s4 1966171168
        %v2302 = vunpack.c.0.s8 %v2301
        %v2303 = vlaneseq
        %v2304 = vshrl.u32 %v2303, 7
        %v2305 = vsub.s32 %v2302, %v2304
        %v2306 = vrot.slane %v2284, %v2305
        %v2308 = vunpack.c.l.s4 1966171168
        %v2309 = vunpack.c.0.s8 %v2308
        %v2310 = vlaneseq
        %v2311 = vshrl.u32 %v2310, 7
        %v2312 = vsub.s32 %v2309, %v2311
        %v2313 = vrot.slane %v2285, %v2312
        %v2314 = vcombine.low %v2292, %v2299
        %v2315 = vcombine.low %v2306, %v2313
        %v2317 = vunpack.c.l.s4 1966171168
        %v2318 = vunpack.c.0.s8 %v2317
        %v2319 = vlaneseq
        %v2320 = vshrl.u32 %v2319, 7
        %v2321 = vsub.s32 %v2318, %v2320
        %v2322 = vrot.slane %v2314, %v2321
        %v2324 = vunpack.c.l.s4 1966171168
        %v2325 = vunpack.c.0.s8 %v2324
        %v2326 = vlaneseq
        %v2327 = vshrl.u32 %v2326, 7
        %v2328 = vsub.s32 %v2325, %v2327
        %v2329 = vrot.slane %v2315, %v2328
        %v2330 = vcombine.low %v2322, %v2329
        %v2331 = vcombine.low %v1191, %v1195
        %v2332 = vcombine.low %v1199, %v1203
        %v2333 = vcombine.low %v1207, %v1211
        %v2334 = vcombine.low %v1215, %v1219
        %v2336 = vunpack.c.l.s4 1966171168
        %v2337 = vunpack.c.0.s8 %v2336
        %v2338 = vlaneseq
        %v2339 = vshrl.u32 %v2338, 7
        %v2340 = vsub.s32 %v2337, %v2339
        %v2341 = vrot.slane %v2331, %v2340
        %v2343 = vunpack.c.l.s4 1966171168
        %v2344 = vunpack.c.0.s8 %v2343
        %v2345 = vlaneseq
        %v2346 = vshrl.u32 %v2345, 7
        %v2347 = vsub.s32 %v2344, %v2346
        %v2348 = vrot.slane %v2332, %v2347
        %v2350 = vunpack.c.l.s4 1966171168
        %v2351 = vunpack.c.0.s8 %v2350
        %v2352 = vlaneseq
        %v2353 = vshrl.u32 %v2352, 7
        %v2354 = vsub.s32 %v2351, %v2353
        %v2355 = vrot.slane %v2333, %v2354
        %v2357 = vunpack.c.l.s4 1966171168
        %v2358 = vunpack.c.0.s8 %v2357
        %v2359 = vlaneseq
        %v2360 = vshrl.u32 %v2359, 7
        %v2361 = vsub.s32 %v2358, %v2360
        %v2362 = vrot.slane %v2334, %v2361
        %v2363 = vcombine.low %v2341, %v2348
        %v2364 = vcombine.low %v2355, %v2362
        %v2366 = vunpack.c.l.s4 1966171168
        %v2367 = vunpack.c.0.s8 %v2366
        %v2368 = vlaneseq
        %v2369 = vshrl.u32 %v2368, 7
        %v2370 = vsub.s32 %v2367, %v2369
        %v2371 = vrot.slane %v2363, %v2370
        %v2373 = vunpack.c.l.s4 1966171168
        %v2374 = vunpack.c.0.s8 %v2373
        %v2375 = vlaneseq
        %v2376 = vshrl.u32 %v2375, 7
        %v2377 = vsub.s32 %v2374, %v2376
        %v2378 = vrot.slane %v2364, %v2377
        %v2379 = vcombine.low %v2371, %v2378
        %v2380 = vcombine.low %v1223, %v1227
        %v2381 = vcombine.low %v1231, %v1235
        %v2382 = vcombine.low %v1239, %v1243
        %v2383 = vcombine.low %v1247, %v1251
        %v2385 = vunpack.c.l.s4 1966171168
        %v2386 = vunpack.c.0.s8 %v2385
        %v2387 = vlaneseq
        %v2388 = vshrl.u32 %v2387, 7
        %v2389 = vsub.s32 %v2386, %v2388
        %v2390 = vrot.slane %v2380, %v2389
        %v2392 = vunpack.c.l.s4 1966171168
        %v2393 = vunpack.c.0.s8 %v2392
        %v2394 = vlaneseq
        %v2395 = vshrl.u32 %v2394, 7
        %v2396 = vsub.s32 %v2393, %v2395
        %v2397 = vrot.slane %v2381, %v2396
        %v2399 = vunpack.c.l.s4 1966171168
        %v2400 = vunpack.c.0.s8 %v2399
        %v2401 = vlaneseq
        %v2402 = vshrl.u32 %v2401, 7
        %v2403 = vsub.s32 %v2400, %v2402
        %v2404 = vrot.slane %v2382, %v2403
        %v2406 = vunpack.c.l.s4 1966171168
        %v2407 = vunpack.c.0.s8 %v2406
        %v2408 = vlaneseq
        %v2409 = vshrl.u32 %v2408, 7
        %v2410 = vsub.s32 %v2407, %v2409
        %v2411 = vrot.slane %v2383, %v2410
        %v2412 = vcombine.low %v2390, %v2397
        %v2413 = vcombine.low %v2404, %v2411
        %v2415 = vunpack.c.l.s4 1966171168
        %v2416 = vunpack.c.0.s8 %v2415
        %v2417 = vlaneseq
        %v2418 = vshrl.u32 %v2417, 7
        %v2419 = vsub.s32 %v2416, %v2418
        %v2420 = vrot.slane %v2412, %v2419
        %v2422 = vunpack.c.l.s4 1966171168
        %v2423 = vunpack.c.0.s8 %v2422
        %v2424 = vlaneseq
        %v2425 = vshrl.u32 %v2424, 7
        %v2426 = vsub.s32 %v2423, %v2425
        %v2427 = vrot.slane %v2413, %v2426
        %v2428 = vcombine.low %v2420, %v2427
        %v2429 = vcombine.low %v1255, %v1259
        %v2430 = vcombine.low %v1263, %v1267
        %v2431 = vcombine.low %v1271, %v1275
        %v2432 = vcombine.low %v1279, %v1283
        %v2434 = vunpack.c.l.s4 1966171168
        %v2435 = vunpack.c.0.s8 %v2434
        %v2436 = vlaneseq
        %v2437 = vshrl.u32 %v2436, 7
        %v2438 = vsub.s32 %v2435, %v2437
        %v2439 = vrot.slane %v2429, %v2438
        %v2441 = vunpack.c.l.s4 1966171168
        %v2442 = vunpack.c.0.s8 %v2441
        %v2443 = vlaneseq
        %v2444 = vshrl.u32 %v2443, 7
        %v2445 = vsub.s32 %v2442, %v2444
        %v2446 = vrot.slane %v2430, %v2445
        %v2448 = vunpack.c.l.s4 1966171168
        %v2449 = vunpack.c.0.s8 %v2448
        %v2450 = vlaneseq
        %v2451 = vshrl.u32 %v2450, 7
        %v2452 = vsub.s32 %v2449, %v2451
        %v2453 = vrot.slane %v2431, %v2452
        %v2455 = vunpack.c.l.s4 1966171168
        %v2456 = vunpack.c.0.s8 %v2455
        %v2457 = vlaneseq
        %v2458 = vshrl.u32 %v2457, 7
        %v2459 = vsub.s32 %v2456, %v2458
        %v2460 = vrot.slane %v2432, %v2459
        %v2461 = vcombine.low %v2439, %v2446
        %v2462 = vcombine.low %v2453, %v2460
        %v2464 = vunpack.c.l.s4 1966171168
        %v2465 = vunpack.c.0.s8 %v2464
        %v2466 = vlaneseq
        %v2467 = vshrl.u32 %v2466, 7
        %v2468 = vsub.s32 %v2465, %v2467
        %v2469 = vrot.slane %v2461, %v2468
        %v2471 = vunpack.c.l.s4 1966171168
        %v2472 = vunpack.c.0.s8 %v2471
        %v2473 = vlaneseq
        %v2474 = vshrl.u32 %v2473, 7
        %v2475 = vsub.s32 %v2472, %v2474
        %v2476 = vrot.slane %v2462, %v2475
        %v2477 = vcombine.low %v2469, %v2476
        %v2478 = vcombine.low %v1287, %v1291
        %v2479 = vcombine.low %v1295, %v1299
        %v2480 = vcombine.low %v1303, %v1307
        %v2481 = vcombine.low %v1311, %v1315
        %v2483 = vunpack.c.l.s4 1966171168
        %v2484 = vunpack.c.0.s8 %v2483
        %v2485 = vlaneseq
        %v2486 = vshrl.u32 %v2485, 7
        %v2487 = vsub.s32 %v2484, %v2486
        %v2488 = vrot.slane %v2478, %v2487
        %v2490 = vunpack.c.l.s4 1966171168
        %v2491 = vunpack.c.0.s8 %v2490
        %v2492 = vlaneseq
        %v2493 = vshrl.u32 %v2492, 7
        %v2494 = vsub.s32 %v2491, %v2493
        %v2495 = vrot.slane %v2479, %v2494
        %v2497 = vunpack.c.l.s4 1966171168
        %v2498 = vunpack.c.0.s8 %v2497
        %v2499 = vlaneseq
        %v2500 = vshrl.u32 %v2499, 7
        %v2501 = vsub.s32 %v2498, %v2500
        %v2502 = vrot.slane %v2480, %v2501
        %v2504 = vunpack.c.l.s4 1966171168
        %v2505 = vunpack.c.0.s8 %v2504
        %v2506 = vlaneseq
        %v2507 = vshrl.u32 %v2506, 7
        %v2508 = vsub.s32 %v2505, %v2507
        %v2509 = vrot.slane %v2481, %v2508
        %v2510 = vcombine.low %v2488, %v2495
        %v2511 = vcombine.low %v2502, %v2509
        %v2513 = vunpack.c.l.s4 1966171168
        %v2514 = vunpack.c.0.s8 %v2513
        %v2515 = vlaneseq
        %v2516 = vshrl.u32 %v2515, 7
        %v2517 = vsub.s32 %v2514, %v2516
        %v2518 = vrot.slane %v2510, %v2517
        %v2520 = vunpack.c.l.s4 1966171168
        %v2521 = vunpack.c.0.s8 %v2520
        %v2522 = vlaneseq
        %v2523 = vshrl.u32 %v2522, 7
        %v2524 = vsub.s32 %v2521, %v2523
        %v2525 = vrot.slane %v2511, %v2524
        %v2526 = vcombine.low %v2518, %v2525
        %v2527 = vcombine.low %v1319, %v1323
        %v2528 = vcombine.low %v1327, %v1331
        %v2529 = vcombine.low %v1335, %v1339
        %v2530 = vcombine.low %v1343, %v1347
        %v2532 = vunpack.c.l.s4 1966171168
        %v2533 = vunpack.c.0.s8 %v2532
        %v2534 = vlaneseq
        %v2535 = vshrl.u32 %v2534, 7
        %v2536 = vsub.s32 %v2533, %v2535
        %v2537 = vrot.slane %v2527, %v2536
        %v2539 = vunpack.c.l.s4 1966171168
        %v2540 = vunpack.c.0.s8 %v2539
        %v2541 = vlaneseq
        %v2542 = vshrl.u32 %v2541, 7
        %v2543 = vsub.s32 %v2540, %v2542
        %v2544 = vrot.slane %v2528, %v2543
        %v2546 = vunpack.c.l.s4 1966171168
        %v2547 = vunpack.c.0.s8 %v2546
        %v2548 = vlaneseq
        %v2549 = vshrl.u32 %v2548, 7
        %v2550 = vsub.s32 %v2547, %v2549
        %v2551 = vrot.slane %v2529, %v2550
        %v2553 = vunpack.c.l.s4 1966171168
        %v2554 = vunpack.c.0.s8 %v2553
        %v2555 = vlaneseq
        %v2556 = vshrl.u32 %v2555, 7
        %v2557 = vsub.s32 %v2554, %v2556
        %v2558 = vrot.slane %v2530, %v2557
        %v2559 = vcombine.low %v2537, %v2544
        %v2560 = vcombine.low %v2551, %v2558
        %v2562 = vunpack.c.l.s4 1966171168
        %v2563 = vunpack.c.0.s8 %v2562
        %v2564 = vlaneseq
        %v2565 = vshrl.u32 %v2564, 7
        %v2566 = vsub.s32 %v2563, %v2565
        %v2567 = vrot.slane %v2559, %v2566
        %v2569 = vunpack.c.l.s4 1966171168
        %v2570 = vunpack.c.0.s8 %v2569
        %v2571 = vlaneseq
        %v2572 = vshrl.u32 %v2571, 7
        %v2573 = vsub.s32 %v2570, %v2572
        %v2574 = vrot.slane %v2560, %v2573
        %v2575 = vcombine.low %v2567, %v2574
        %v2576 = vcombine.low %v1351, %v1355
        %v2577 = vcombine.low %v1359, %v1363
        %v2578 = vcombine.low %v1367, %v1371
        %v2579 = vcombine.low %v1375, %v1379
        %v2581 = vunpack.c.l.s4 1966171168
        %v2582 = vunpack.c.0.s8 %v2581
        %v2583 = vlaneseq
        %v2584 = vshrl.u32 %v2583, 7
        %v2585 = vsub.s32 %v2582, %v2584
        %v2586 = vrot.slane %v2576, %v2585
        %v2588 = vunpack.c.l.s4 1966171168
        %v2589 = vunpack.c.0.s8 %v2588
        %v2590 = vlaneseq
        %v2591 = vshrl.u32 %v2590, 7
        %v2592 = vsub.s32 %v2589, %v2591
        %v2593 = vrot.slane %v2577, %v2592
        %v2595 = vunpack.c.l.s4 1966171168
        %v2596 = vunpack.c.0.s8 %v2595
        %v2597 = vlaneseq
        %v2598 = vshrl.u32 %v2597, 7
        %v2599 = vsub.s32 %v2596, %v2598
        %v2600 = vrot.slane %v2578, %v2599
        %v2602 = vunpack.c.l.s4 1966171168
        %v2603 = vunpack.c.0.s8 %v2602
        %v2604 = vlaneseq
        %v2605 = vshrl.u32 %v2604, 7
        %v2606 = vsub.s32 %v2603, %v2605
        %v2607 = vrot.slane %v2579, %v2606
        %v2608 = vcombine.low %v2586, %v2593
        %v2609 = vcombine.low %v2600, %v2607
        %v2611 = vunpack.c.l.s4 1966171168
        %v2612 = vunpack.c.0.s8 %v2611
        %v2613 = vlaneseq
        %v2614 = vshrl.u32 %v2613, 7
        %v2615 = vsub.s32 %v2612, %v2614
        %v2616 = vrot.slane %v2608, %v2615
        %v2618 = vunpack.c.l.s4 1966171168
        %v2619 = vunpack.c.0.s8 %v2618
        %v2620 = vlaneseq
        %v2621 = vshrl.u32 %v2620, 7
        %v2622 = vsub.s32 %v2619, %v2621
        %v2623 = vrot.slane %v2609, %v2622
        %v2624 = vcombine.low %v2616, %v2623
        %v2625 = vcombine.low %v1383, %v1387
        %v2626 = vcombine.low %v1391, %v1395
        %v2627 = vcombine.low %v1399, %v1403
        %v2628 = vcombine.low %v1407, %v1411
        %v2630 = vunpack.c.l.s4 1966171168
        %v2631 = vunpack.c.0.s8 %v2630
        %v2632 = vlaneseq
        %v2633 = vshrl.u32 %v2632, 7
        %v2634 = vsub.s32 %v2631, %v2633
        %v2635 = vrot.slane %v2625, %v2634
        %v2637 = vunpack.c.l.s4 1966171168
        %v2638 = vunpack.c.0.s8 %v2637
        %v2639 = vlaneseq
        %v2640 = vshrl.u32 %v2639, 7
        %v2641 = vsub.s32 %v2638, %v2640
        %v2642 = vrot.slane %v2626, %v2641
        %v2644 = vunpack.c.l.s4 1966171168
        %v2645 = vunpack.c.0.s8 %v2644
        %v2646 = vlaneseq
        %v2647 = vshrl.u32 %v2646, 7
        %v2648 = vsub.s32 %v2645, %v2647
        %v2649 = vrot.slane %v2627, %v2648
        %v2651 = vunpack.c.l.s4 1966171168
        %v2652 = vunpack.c.0.s8 %v2651
        %v2653 = vlaneseq
        %v2654 = vshrl.u32 %v2653, 7
        %v2655 = vsub.s32 %v2652, %v2654
        %v2656 = vrot.slane %v2628, %v2655
        %v2657 = vcombine.low %v2635, %v2642
        %v2658 = vcombine.low %v2649, %v2656
        %v2660 = vunpack.c.l.s4 1966171168
        %v2661 = vunpack.c.0.s8 %v2660
        %v2662 = vlaneseq
        %v2663 = vshrl.u32 %v2662, 7
        %v2664 = vsub.s32 %v2661, %v2663
        %v2665 = vrot.slane %v2657, %v2664
        %v2667 = vunpack.c.l.s4 1966171168
        %v2668 = vunpack.c.0.s8 %v2667
        %v2669 = vlaneseq
        %v2670 = vshrl.u32 %v2669, 7
        %v2671 = vsub.s32 %v2668, %v2670
        %v2672 = vrot.slane %v2658, %v2671
        %v2673 = vcombine.low %v2665, %v2672
        %v2674 = vcombine.low %v1415, %v1419
        %v2675 = vcombine.low %v1423, %v1427
        %v2676 = vcombine.low %v1431, %v1435
        %v2677 = vcombine.low %v1439, %v1443
        %v2679 = vunpack.c.l.s4 1966171168
        %v2680 = vunpack.c.0.s8 %v2679
        %v2681 = vlaneseq
        %v2682 = vshrl.u32 %v2681, 7
        %v2683 = vsub.s32 %v2680, %v2682
        %v2684 = vrot.slane %v2674, %v2683
        %v2686 = vunpack.c.l.s4 1966171168
        %v2687 = vunpack.c.0.s8 %v2686
        %v2688 = vlaneseq
        %v2689 = vshrl.u32 %v2688, 7
        %v2690 = vsub.s32 %v2687, %v2689
        %v2691 = vrot.slane %v2675, %v2690
        %v2693 = vunpack.c.l.s4 1966171168
        %v2694 = vunpack.c.0.s8 %v2693
        %v2695 = vlaneseq
        %v2696 = vshrl.u32 %v2695, 7
        %v2697 = vsub.s32 %v2694, %v2696
        %v2698 = vrot.slane %v2676, %v2697
        %v2700 = vunpack.c.l.s4 1966171168
        %v2701 = vunpack.c.0.s8 %v2700
        %v2702 = vlaneseq
        %v2703 = vshrl.u32 %v2702, 7
        %v2704 = vsub.s32 %v2701, %v2703
        %v2705 = vrot.slane %v2677, %v2704
        %v2706 = vcombine.low %v2684, %v2691
        %v2707 = vcombine.low %v2698, %v2705
        %v2709 = vunpack.c.l.s4 1966171168
        %v2710 = vunpack.c.0.s8 %v2709
        %v2711 = vlaneseq
        %v2712 = vshrl.u32 %v2711, 7
        %v2713 = vsub.s32 %v2710, %v2712
        %v2714 = vrot.slane %v2706, %v2713
        %v2716 = vunpack.c.l.s4 1966171168
        %v2717 = vunpack.c.0.s8 %v2716
        %v2718 = vlaneseq
        %v2719 = vshrl.u32 %v2718, 7
        %v2720 = vsub.s32 %v2717, %v2719
        %v2721 = vrot.slane %v2707, %v2720
        %v2722 = vcombine.low %v2714, %v2721
        %v2723 = vcombine.low %v1447, %v1451
        %v2724 = vcombine.low %v1455, %v1459
        %v2725 = vcombine.low %v1463, %v1467
        %v2726 = vcombine.low %v1471, %v1475
        %v2728 = vunpack.c.l.s4 1966171168
        %v2729 = vunpack.c.0.s8 %v2728
        %v2730 = vlaneseq
        %v2731 = vshrl.u32 %v2730, 7
        %v2732 = vsub.s32 %v2729, %v2731
        %v2733 = vrot.slane %v2723, %v2732
        %v2735 = vunpack.c.l.s4 1966171168
        %v2736 = vunpack.c.0.s8 %v2735
        %v2737 = vlaneseq
        %v2738 = vshrl.u32 %v2737, 7
        %v2739 = vsub.s32 %v2736, %v2738
        %v2740 = vrot.slane %v2724, %v2739
        %v2742 = vunpack.c.l.s4 1966171168
        %v2743 = vunpack.c.0.s8 %v2742
        %v2744 = vlaneseq
        %v2745 = vshrl.u32 %v2744, 7
        %v2746 = vsub.s32 %v2743, %v2745
        %v2747 = vrot.slane %v2725, %v2746
        %v2749 = vunpack.c.l.s4 1966171168
        %v2750 = vunpack.c.0.s8 %v2749
        %v2751 = vlaneseq
        %v2752 = vshrl.u32 %v2751, 7
        %v2753 = vsub.s32 %v2750, %v2752
        %v2754 = vrot.slane %v2726, %v2753
        %v2755 = vcombine.low %v2733, %v2740
        %v2756 = vcombine.low %v2747, %v2754
        %v2758 = vunpack.c.l.s4 1966171168
        %v2759 = vunpack.c.0.s8 %v2758
        %v2760 = vlaneseq
        %v2761 = vshrl.u32 %v2760, 7
        %v2762 = vsub.s32 %v2759, %v2761
        %v2763 = vrot.slane %v2755, %v2762
        %v2765 = vunpack.c.l.s4 1966171168
        %v2766 = vunpack.c.0.s8 %v2765
        %v2767 = vlaneseq
        %v2768 = vshrl.u32 %v2767, 7
        %v2769 = vsub.s32 %v2766, %v2768
        %v2770 = vrot.slane %v2756, %v2769
        %v2771 = vcombine.low %v2763, %v2770
        %v2772 = vcombine.low %v1479, %v1483
        %v2773 = vcombine.low %v1487, %v1491
        %v2774 = vcombine.low %v1495, %v1499
        %v2775 = vcombine.low %v1503, %v1507
        %v2777 = vunpack.c.l.s4 1966171168
        %v2778 = vunpack.c.0.s8 %v2777
        %v2779 = vlaneseq
        %v2780 = vshrl.u32 %v2779, 7
        %v2781 = vsub.s32 %v2778, %v2780
        %v2782 = vrot.slane %v2772, %v2781
        %v2784 = vunpack.c.l.s4 1966171168
        %v2785 = vunpack.c.0.s8 %v2784
        %v2786 = vlaneseq
        %v2787 = vshrl.u32 %v2786, 7
        %v2788 = vsub.s32 %v2785, %v2787
        %v2789 = vrot.slane %v2773, %v2788
        %v2791 = vunpack.c.l.s4 1966171168
        %v2792 = vunpack.c.0.s8 %v2791
        %v2793 = vlaneseq
        %v2794 = vshrl.u32 %v2793, 7
        %v2795 = vsub.s32 %v2792, %v2794
        %v2796 = vrot.slane %v2774, %v2795
        %v2798 = vunpack.c.l.s4 1966171168
        %v2799 = vunpack.c.0.s8 %v2798
        %v2800 = vlaneseq
        %v2801 = vshrl.u32 %v2800, 7
        %v2802 = vsub.s32 %v2799, %v2801
        %v2803 = vrot.slane %v2775, %v2802
        %v2804 = vcombine.low %v2782, %v2789
        %v2805 = vcombine.low %v2796, %v2803
        %v2807 = vunpack.c.l.s4 1966171168
        %v2808 = vunpack.c.0.s8 %v2807
        %v2809 = vlaneseq
        %v2810 = vshrl.u32 %v2809, 7
        %v2811 = vsub.s32 %v2808, %v2810
        %v2812 = vrot.slane %v2804, %v2811
        %v2814 = vunpack.c.l.s4 1966171168
        %v2815 = vunpack.c.0.s8 %v2814
        %v2816 = vlaneseq
        %v2817 = vshrl.u32 %v2816, 7
        %v2818 = vsub.s32 %v2815, %v2817
        %v2819 = vrot.slane %v2805, %v2818
        %v2820 = vcombine.low %v2812, %v2819
        %v2821 = vcombine.low %v1511, %v1515
        %v2822 = vcombine.low %v1519, %v1523
        %v2823 = vcombine.low %v1527, %v1531
        %v2824 = vcombine.low %v1535, %v1539
        %v2826 = vunpack.c.l.s4 1966171168
        %v2827 = vunpack.c.0.s8 %v2826
        %v2828 = vlaneseq
        %v2829 = vshrl.u32 %v2828, 7
        %v2830 = vsub.s32 %v2827, %v2829
        %v2831 = vrot.slane %v2821, %v2830
        %v2833 = vunpack.c.l.s4 1966171168
        %v2834 = vunpack.c.0.s8 %v2833
        %v2835 = vlaneseq
        %v2836 = vshrl.u32 %v2835, 7
        %v2837 = vsub.s32 %v2834, %v2836
        %v2838 = vrot.slane %v2822, %v2837
        %v2840 = vunpack.c.l.s4 1966171168
        %v2841 = vunpack.c.0.s8 %v2840
        %v2842 = vlaneseq
        %v2843 = vshrl.u32 %v2842, 7
        %v2844 = vsub.s32 %v2841, %v2843
        %v2845 = vrot.slane %v2823, %v2844
        %v2847 = vunpack.c.l.s4 1966171168
        %v2848 = vunpack.c.0.s8 %v2847
        %v2849 = vlaneseq
        %v2850 = vshrl.u32 %v2849, 7
        %v2851 = vsub.s32 %v2848, %v2850
        %v2852 = vrot.slane %v2824, %v2851
        %v2853 = vcombine.low %v2831, %v2838
        %v2854 = vcombine.low %v2845, %v2852
        %v2856 = vunpack.c.l.s4 1966171168
        %v2857 = vunpack.c.0.s8 %v2856
        %v2858 = vlaneseq
        %v2859 = vshrl.u32 %v2858, 7
        %v2860 = vsub.s32 %v2857, %v2859
        %v2861 = vrot.slane %v2853, %v2860
        %v2863 = vunpack.c.l.s4 1966171168
        %v2864 = vunpack.c.0.s8 %v2863
        %v2865 = vlaneseq
        %v2866 = vshrl.u32 %v2865, 7
        %v2867 = vsub.s32 %v2864, %v2866
        %v2868 = vrot.slane %v2854, %v2867
        %v2869 = vcombine.low %v2861, %v2868
        %v2870 = vcombine.low %v1543, %v1547
        %v2871 = vcombine.low %v1551, %v1555
        %v2872 = vcombine.low %v1559, %v1563
        %v2873 = vcombine.low %v1567, %v1571
        %v2875 = vunpack.c.l.s4 1966171168
        %v2876 = vunpack.c.0.s8 %v2875
        %v2877 = vlaneseq
        %v2878 = vshrl.u32 %v2877, 7
        %v2879 = vsub.s32 %v2876, %v2878
        %v2880 = vrot.slane %v2870, %v2879
        %v2882 = vunpack.c.l.s4 1966171168
        %v2883 = vunpack.c.0.s8 %v2882
        %v2884 = vlaneseq
        %v2885 = vshrl.u32 %v2884, 7
        %v2886 = vsub.s32 %v2883, %v2885
        %v2887 = vrot.slane %v2871, %v2886
        %v2889 = vunpack.c.l.s4 1966171168
        %v2890 = vunpack.c.0.s8 %v2889
        %v2891 = vlaneseq
        %v2892 = vshrl.u32 %v2891, 7
        %v2893 = vsub.s32 %v2890, %v2892
        %v2894 = vrot.slane %v2872, %v2893
        %v2896 = vunpack.c.l.s4 1966171168
        %v2897 = vunpack.c.0.s8 %v2896
        %v2898 = vlaneseq
        %v2899 = vshrl.u32 %v2898, 7
        %v2900 = vsub.s32 %v2897, %v2899
        %v2901 = vrot.slane %v2873, %v2900
        %v2902 = vcombine.low %v2880, %v2887
        %v2903 = vcombine.low %v2894, %v2901
        %v2905 = vunpack.c.l.s4 1966171168
        %v2906 = vunpack.c.0.s8 %v2905
        %v2907 = vlaneseq
        %v2908 = vshrl.u32 %v2907, 7
        %v2909 = vsub.s32 %v2906, %v2908
        %v2910 = vrot.slane %v2902, %v2909
        %v2912 = vunpack.c.l.s4 1966171168
        %v2913 = vunpack.c.0.s8 %v2912
        %v2914 = vlaneseq
        %v2915 = vshrl.u32 %v2914, 7
        %v2916 = vsub.s32 %v2913, %v2915
        %v2917 = vrot.slane %v2903, %v2916
        %v2918 = vcombine.low %v2910, %v2917
        %v2919 = vcombine.low %v1575, %v1579
        %v2920 = vcombine.low %v1583, %v1587
        %v2921 = vcombine.low %v1591, %v1595
        %v2922 = vcombine.low %v1599, %v1603
        %v2924 = vunpack.c.l.s4 1966171168
        %v2925 = vunpack.c.0.s8 %v2924
        %v2926 = vlaneseq
        %v2927 = vshrl.u32 %v2926, 7
        %v2928 = vsub.s32 %v2925, %v2927
        %v2929 = vrot.slane %v2919, %v2928
        %v2931 = vunpack.c.l.s4 1966171168
        %v2932 = vunpack.c.0.s8 %v2931
        %v2933 = vlaneseq
        %v2934 = vshrl.u32 %v2933, 7
        %v2935 = vsub.s32 %v2932, %v2934
        %v2936 = vrot.slane %v2920, %v2935
        %v2938 = vunpack.c.l.s4 1966171168
        %v2939 = vunpack.c.0.s8 %v2938
        %v2940 = vlaneseq
        %v2941 = vshrl.u32 %v2940, 7
        %v2942 = vsub.s32 %v2939, %v2941
        %v2943 = vrot.slane %v2921, %v2942
        %v2945 = vunpack.c.l.s4 1966171168
        %v2946 = vunpack.c.0.s8 %v2945
        %v2947 = vlaneseq
        %v2948 = vshrl.u32 %v2947, 7
        %v2949 = vsub.s32 %v2946, %v2948
        %v2950 = vrot.slane %v2922, %v2949
        %v2951 = vcombine.low %v2929, %v2936
        %v2952 = vcombine.low %v2943, %v2950
        %v2954 = vunpack.c.l.s4 1966171168
        %v2955 = vunpack.c.0.s8 %v2954
        %v2956 = vlaneseq
        %v2957 = vshrl.u32 %v2956, 7
        %v2958 = vsub.s32 %v2955, %v2957
        %v2959 = vrot.slane %v2951, %v2958
        %v2961 = vunpack.c.l.s4 1966171168
        %v2962 = vunpack.c.0.s8 %v2961
        %v2963 = vlaneseq
        %v2964 = vshrl.u32 %v2963, 7
        %v2965 = vsub.s32 %v2962, %v2964
        %v2966 = vrot.slane %v2952, %v2965
        %v2967 = vcombine.low %v2959, %v2966
        %v2968 = vcombine.low %v1607, %v1611
        %v2969 = vcombine.low %v1615, %v1619
        %v2970 = vcombine.low %v1623, %v1627
        %v2971 = vcombine.low %v1631, %v1635
        %v2973 = vunpack.c.l.s4 1966171168
        %v2974 = vunpack.c.0.s8 %v2973
        %v2975 = vlaneseq
        %v2976 = vshrl.u32 %v2975, 7
        %v2977 = vsub.s32 %v2974, %v2976
        %v2978 = vrot.slane %v2968, %v2977
        %v2980 = vunpack.c.l.s4 1966171168
        %v2981 = vunpack.c.0.s8 %v2980
        %v2982 = vlaneseq
        %v2983 = vshrl.u32 %v2982, 7
        %v2984 = vsub.s32 %v2981, %v2983
        %v2985 = vrot.slane %v2969, %v2984
        %v2987 = vunpack.c.l.s4 1966171168
        %v2988 = vunpack.c.0.s8 %v2987
        %v2989 = vlaneseq
        %v2990 = vshrl.u32 %v2989, 7
        %v2991 = vsub.s32 %v2988, %v2990
        %v2992 = vrot.slane %v2970, %v2991
        %v2994 = vunpack.c.l.s4 1966171168
        %v2995 = vunpack.c.0.s8 %v2994
        %v2996 = vlaneseq
        %v2997 = vshrl.u32 %v2996, 7
        %v2998 = vsub.s32 %v2995, %v2997
        %v2999 = vrot.slane %v2971, %v2998
        %v3000 = vcombine.low %v2978, %v2985
        %v3001 = vcombine.low %v2992, %v2999
        %v3003 = vunpack.c.l.s4 1966171168
        %v3004 = vunpack.c.0.s8 %v3003
        %v3005 = vlaneseq
        %v3006 = vshrl.u32 %v3005, 7
        %v3007 = vsub.s32 %v3004, %v3006
        %v3008 = vrot.slane %v3000, %v3007
        %v3010 = vunpack.c.l.s4 1966171168
        %v3011 = vunpack.c.0.s8 %v3010
        %v3012 = vlaneseq
        %v3013 = vshrl.u32 %v3012, 7
        %v3014 = vsub.s32 %v3011, %v3013
        %v3015 = vrot.slane %v3001, %v3014
        %v3016 = vcombine.low %v3008, %v3015
        %v3017 = vcombine.low %v1639, %v1643
        %v3018 = vcombine.low %v1647, %v1651
        %v3019 = vcombine.low %v1655, %v1659
        %v3020 = vcombine.low %v1663, %v1667
        %v3022 = vunpack.c.l.s4 1966171168
        %v3023 = vunpack.c.0.s8 %v3022
        %v3024 = vlaneseq
        %v3025 = vshrl.u32 %v3024, 7
        %v3026 = vsub.s32 %v3023, %v3025
        %v3027 = vrot.slane %v3017, %v3026
        %v3029 = vunpack.c.l.s4 1966171168
        %v3030 = vunpack.c.0.s8 %v3029
        %v3031 = vlaneseq
        %v3032 = vshrl.u32 %v3031, 7
        %v3033 = vsub.s32 %v3030, %v3032
        %v3034 = vrot.slane %v3018, %v3033
        %v3036 = vunpack.c.l.s4 1966171168
        %v3037 = vunpack.c.0.s8 %v3036
        %v3038 = vlaneseq
        %v3039 = vshrl.u32 %v3038, 7
        %v3040 = vsub.s32 %v3037, %v3039
        %v3041 = vrot.slane %v3019, %v3040
        %v3043 = vunpack.c.l.s4 1966171168
        %v3044 = vunpack.c.0.s8 %v3043
        %v3045 = vlaneseq
        %v3046 = vshrl.u32 %v3045, 7
        %v3047 = vsub.s32 %v3044, %v3046
        %v3048 = vrot.slane %v3020, %v3047
        %v3049 = vcombine.low %v3027, %v3034
        %v3050 = vcombine.low %v3041, %v3048
        %v3052 = vunpack.c.l.s4 1966171168
        %v3053 = vunpack.c.0.s8 %v3052
        %v3054 = vlaneseq
        %v3055 = vshrl.u32 %v3054, 7
        %v3056 = vsub.s32 %v3053, %v3055
        %v3057 = vrot.slane %v3049, %v3056
        %v3059 = vunpack.c.l.s4 1966171168
        %v3060 = vunpack.c.0.s8 %v3059
        %v3061 = vlaneseq
        %v3062 = vshrl.u32 %v3061, 7
        %v3063 = vsub.s32 %v3060, %v3062
        %v3064 = vrot.slane %v3050, %v3063
        %v3065 = vcombine.low %v3057, %v3064
        %v3066 = vcombine.low %v1671, %v1675
        %v3067 = vcombine.low %v1679, %v1683
        %v3068 = vcombine.low %v1687, %v1691
        %v3069 = vcombine.low %v1695, %v1699
        %v3071 = vunpack.c.l.s4 1966171168
        %v3072 = vunpack.c.0.s8 %v3071
        %v3073 = vlaneseq
        %v3074 = vshrl.u32 %v3073, 7
        %v3075 = vsub.s32 %v3072, %v3074
        %v3076 = vrot.slane %v3066, %v3075
        %v3078 = vunpack.c.l.s4 1966171168
        %v3079 = vunpack.c.0.s8 %v3078
        %v3080 = vlaneseq
        %v3081 = vshrl.u32 %v3080, 7
        %v3082 = vsub.s32 %v3079, %v3081
        %v3083 = vrot.slane %v3067, %v3082
        %v3085 = vunpack.c.l.s4 1966171168
        %v3086 = vunpack.c.0.s8 %v3085
        %v3087 = vlaneseq
        %v3088 = vshrl.u32 %v3087, 7
        %v3089 = vsub.s32 %v3086, %v3088
        %v3090 = vrot.slane %v3068, %v3089
        %v3092 = vunpack.c.l.s4 1966171168
        %v3093 = vunpack.c.0.s8 %v3092
        %v3094 = vlaneseq
        %v3095 = vshrl.u32 %v3094, 7
        %v3096 = vsub.s32 %v3093, %v3095
        %v3097 = vrot.slane %v3069, %v3096
        %v3098 = vcombine.low %v3076, %v3083
        %v3099 = vcombine.low %v3090, %v3097
        %v3101 = vunpack.c.l.s4 1966171168
        %v3102 = vunpack.c.0.s8 %v3101
        %v3103 = vlaneseq
        %v3104 = vshrl.u32 %v3103, 7
        %v3105 = vsub.s32 %v3102, %v3104
        %v3106 = vrot.slane %v3098, %v3105
        %v3108 = vunpack.c.l.s4 1966171168
        %v3109 = vunpack.c.0.s8 %v3108
        %v3110 = vlaneseq
        %v3111 = vshrl.u32 %v3110, 7
        %v3112 = vsub.s32 %v3109, %v3111
        %v3113 = vrot.slane %v3099, %v3112
        %v3114 = vcombine.low %v3106, %v3113
        %v3115 = vcombine.low %v1703, %v1707
        %v3116 = vcombine.low %v1711, %v1715
        %v3117 = vcombine.low %v1719, %v1723
        %v3118 = vcombine.low %v1727, %v1731
        %v3120 = vunpack.c.l.s4 1966171168
        %v3121 = vunpack.c.0.s8 %v3120
        %v3122 = vlaneseq
        %v3123 = vshrl.u32 %v3122, 7
        %v3124 = vsub.s32 %v3121, %v3123
        %v3125 = vrot.slane %v3115, %v3124
        %v3127 = vunpack.c.l.s4 1966171168
        %v3128 = vunpack.c.0.s8 %v3127
        %v3129 = vlaneseq
        %v3130 = vshrl.u32 %v3129, 7
        %v3131 = vsub.s32 %v3128, %v3130
        %v3132 = vrot.slane %v3116, %v3131
        %v3134 = vunpack.c.l.s4 1966171168
        %v3135 = vunpack.c.0.s8 %v3134
        %v3136 = vlaneseq
        %v3137 = vshrl.u32 %v3136, 7
        %v3138 = vsub.s32 %v3135, %v3137
        %v3139 = vrot.slane %v3117, %v3138
        %v3141 = vunpack.c.l.s4 1966171168
        %v3142 = vunpack.c.0.s8 %v3141
        %v3143 = vlaneseq
        %v3144 = vshrl.u32 %v3143, 7
        %v3145 = vsub.s32 %v3142, %v3144
        %v3146 = vrot.slane %v3118, %v3145
        %v3147 = vcombine.low %v3125, %v3132
        %v3148 = vcombine.low %v3139, %v3146
        %v3150 = vunpack.c.l.s4 1966171168
        %v3151 = vunpack.c.0.s8 %v3150
        %v3152 = vlaneseq
        %v3153 = vshrl.u32 %v3152, 7
        %v3154 = vsub.s32 %v3151, %v3153
        %v3155 = vrot.slane %v3147, %v3154
        %v3157 = vunpack.c.l.s4 1966171168
        %v3158 = vunpack.c.0.s8 %v3157
        %v3159 = vlaneseq
        %v3160 = vshrl.u32 %v3159, 7
        %v3161 = vsub.s32 %v3158, %v3160
        %v3162 = vrot.slane %v3148, %v3161
        %v3163 = vcombine.low %v3155, %v3162
        %v3164 = vcombine.low %v1735, %v1739
        %v3165 = vcombine.low %v1743, %v1747
        %v3166 = vcombine.low %v1751, %v1755
        %v3167 = vcombine.low %v1759, %v1763
        %v3169 = vunpack.c.l.s4 1966171168
        %v3170 = vunpack.c.0.s8 %v3169
        %v3171 = vlaneseq
        %v3172 = vshrl.u32 %v3171, 7
        %v3173 = vsub.s32 %v3170, %v3172
        %v3174 = vrot.slane %v3164, %v3173
        %v3176 = vunpack.c.l.s4 1966171168
        %v3177 = vunpack.c.0.s8 %v3176
        %v3178 = vlaneseq
        %v3179 = vshrl.u32 %v3178, 7
        %v3180 = vsub.s32 %v3177, %v3179
        %v3181 = vrot.slane %v3165, %v3180
        %v3183 = vunpack.c.l.s4 1966171168
        %v3184 = vunpack.c.0.s8 %v3183
        %v3185 = vlaneseq
        %v3186 = vshrl.u32 %v3185, 7
        %v3187 = vsub.s32 %v3184, %v3186
        %v3188 = vrot.slane %v3166, %v3187
        %v3190 = vunpack.c.l.s4 1966171168
        %v3191 = vunpack.c.0.s8 %v3190
        %v3192 = vlaneseq
        %v3193 = vshrl.u32 %v3192, 7
        %v3194 = vsub.s32 %v3191, %v3193
        %v3195 = vrot.slane %v3167, %v3194
        %v3196 = vcombine.low %v3174, %v3181
        %v3197 = vcombine.low %v3188, %v3195
        %v3199 = vunpack.c.l.s4 1966171168
        %v3200 = vunpack.c.0.s8 %v3199
        %v3201 = vlaneseq
        %v3202 = vshrl.u32 %v3201, 7
        %v3203 = vsub.s32 %v3200, %v3202
        %v3204 = vrot.slane %v3196, %v3203
        %v3206 = vunpack.c.l.s4 1966171168
        %v3207 = vunpack.c.0.s8 %v3206
        %v3208 = vlaneseq
        %v3209 = vshrl.u32 %v3208, 7
        %v3210 = vsub.s32 %v3207, %v3209
        %v3211 = vrot.slane %v3197, %v3210
        %v3212 = vcombine.low %v3204, %v3211
        %v3213 = vcombine.low %v1767, %v1771
        %v3214 = vcombine.low %v1775, %v1779
        %v3215 = vcombine.low %v1783, %v1787
        %v3216 = vcombine.low %v1791, %v1795
        %v3218 = vunpack.c.l.s4 1966171168
        %v3219 = vunpack.c.0.s8 %v3218
        %v3220 = vlaneseq
        %v3221 = vshrl.u32 %v3220, 7
        %v3222 = vsub.s32 %v3219, %v3221
        %v3223 = vrot.slane %v3213, %v3222
        %v3225 = vunpack.c.l.s4 1966171168
        %v3226 = vunpack.c.0.s8 %v3225
        %v3227 = vlaneseq
        %v3228 = vshrl.u32 %v3227, 7
        %v3229 = vsub.s32 %v3226, %v3228
        %v3230 = vrot.slane %v3214, %v3229
        %v3232 = vunpack.c.l.s4 1966171168
        %v3233 = vunpack.c.0.s8 %v3232
        %v3234 = vlaneseq
        %v3235 = vshrl.u32 %v3234, 7
        %v3236 = vsub.s32 %v3233, %v3235
        %v3237 = vrot.slane %v3215, %v3236
        %v3239 = vunpack.c.l.s4 1966171168
        %v3240 = vunpack.c.0.s8 %v3239
        %v3241 = vlaneseq
        %v3242 = vshrl.u32 %v3241, 7
        %v3243 = vsub.s32 %v3240, %v3242
        %v3244 = vrot.slane %v3216, %v3243
        %v3245 = vcombine.low %v3223, %v3230
        %v3246 = vcombine.low %v3237, %v3244
        %v3248 = vunpack.c.l.s4 1966171168
        %v3249 = vunpack.c.0.s8 %v3248
        %v3250 = vlaneseq
        %v3251 = vshrl.u32 %v3250, 7
        %v3252 = vsub.s32 %v3249, %v3251
        %v3253 = vrot.slane %v3245, %v3252
        %v3255 = vunpack.c.l.s4 1966171168
        %v3256 = vunpack.c.0.s8 %v3255
        %v3257 = vlaneseq
        %v3258 = vshrl.u32 %v3257, 7
        %v3259 = vsub.s32 %v3256, %v3258
        %v3260 = vrot.slane %v3246, %v3259
        %v3261 = vcombine.low %v3253, %v3260
        %v3262 = vcombine.low %v1799, %v1803
        %v3263 = vcombine.low %v1807, %v1811
        %v3264 = vcombine.low %v1815, %v1819
        %v3265 = vcombine.low %v1823, %v1827
        %v3267 = vunpack.c.l.s4 1966171168
        %v3268 = vunpack.c.0.s8 %v3267
        %v3269 = vlaneseq
        %v3270 = vshrl.u32 %v3269, 7
        %v3271 = vsub.s32 %v3268, %v3270
        %v3272 = vrot.slane %v3262, %v3271
        %v3274 = vunpack.c.l.s4 1966171168
        %v3275 = vunpack.c.0.s8 %v3274
        %v3276 = vlaneseq
        %v3277 = vshrl.u32 %v3276, 7
        %v3278 = vsub.s32 %v3275, %v3277
        %v3279 = vrot.slane %v3263, %v3278
        %v3281 = vunpack.c.l.s4 1966171168
        %v3282 = vunpack.c.0.s8 %v3281
        %v3283 = vlaneseq
        %v3284 = vshrl.u32 %v3283, 7
        %v3285 = vsub.s32 %v3282, %v3284
        %v3286 = vrot.slane %v3264, %v3285
        %v3288 = vunpack.c.l.s4 1966171168
        %v3289 = vunpack.c.0.s8 %v3288
        %v3290 = vlaneseq
        %v3291 = vshrl.u32 %v3290, 7
        %v3292 = vsub.s32 %v3289, %v3291
        %v3293 = vrot.slane %v3265, %v3292
        %v3294 = vcombine.low %v3272, %v3279
        %v3295 = vcombine.low %v3286, %v3293
        %v3297 = vunpack.c.l.s4 1966171168
        %v3298 = vunpack.c.0.s8 %v3297
        %v3299 = vlaneseq
        %v3300 = vshrl.u32 %v3299, 7
        %v3301 = vsub.s32 %v3298, %v3300
        %v3302 = vrot.slane %v3294, %v3301
        %v3304 = vunpack.c.l.s4 1966171168
        %v3305 = vunpack.c.0.s8 %v3304
        %v3306 = vlaneseq
        %v3307 = vshrl.u32 %v3306, 7
        %v3308 = vsub.s32 %v3305, %v3307
        %v3309 = vrot.slane %v3295, %v3308
        %v3310 = vcombine.low %v3302, %v3309
        %v3311 = vcombine.low %v1831, %v1835
        %v3312 = vcombine.low %v1839, %v1843
        %v3313 = vcombine.low %v1847, %v1851
        %v3314 = vcombine.low %v1855, %v1859
        %v3316 = vunpack.c.l.s4 1966171168
        %v3317 = vunpack.c.0.s8 %v3316
        %v3318 = vlaneseq
        %v3319 = vshrl.u32 %v3318, 7
        %v3320 = vsub.s32 %v3317, %v3319
        %v3321 = vrot.slane %v3311, %v3320
        %v3323 = vunpack.c.l.s4 1966171168
        %v3324 = vunpack.c.0.s8 %v3323
        %v3325 = vlaneseq
        %v3326 = vshrl.u32 %v3325, 7
        %v3327 = vsub.s32 %v3324, %v3326
        %v3328 = vrot.slane %v3312, %v3327
        %v3330 = vunpack.c.l.s4 1966171168
        %v3331 = vunpack.c.0.s8 %v3330
        %v3332 = vlaneseq
        %v3333 = vshrl.u32 %v3332, 7
        %v3334 = vsub.s32 %v3331, %v3333
        %v3335 = vrot.slane %v3313, %v3334
        %v3337 = vunpack.c.l.s4 1966171168
        %v3338 = vunpack.c.0.s8 %v3337
        %v3339 = vlaneseq
        %v3340 = vshrl.u32 %v3339, 7
        %v3341 = vsub.s32 %v3338, %v3340
        %v3342 = vrot.slane %v3314, %v3341
        %v3343 = vcombine.low %v3321, %v3328
        %v3344 = vcombine.low %v3335, %v3342
        %v3346 = vunpack.c.l.s4 1966171168
        %v3347 = vunpack.c.0.s8 %v3346
        %v3348 = vlaneseq
        %v3349 = vshrl.u32 %v3348, 7
        %v3350 = vsub.s32 %v3347, %v3349
        %v3351 = vrot.slane %v3343, %v3350
        %v3353 = vunpack.c.l.s4 1966171168
        %v3354 = vunpack.c.0.s8 %v3353
        %v3355 = vlaneseq
        %v3356 = vshrl.u32 %v3355, 7
        %v3357 = vsub.s32 %v3354, %v3356
        %v3358 = vrot.slane %v3344, %v3357
        %v3359 = vcombine.low %v3351, %v3358
        %v3360 = vcombine.low %v1863, %v1867
        %v3361 = vcombine.low %v1871, %v1875
        %v3362 = vcombine.low %v1879, %v1883
        %v3363 = vcombine.low %v1887, %v1891
        %v3365 = vunpack.c.l.s4 1966171168
        %v3366 = vunpack.c.0.s8 %v3365
        %v3367 = vlaneseq
        %v3368 = vshrl.u32 %v3367, 7
        %v3369 = vsub.s32 %v3366, %v3368
        %v3370 = vrot.slane %v3360, %v3369
        %v3372 = vunpack.c.l.s4 1966171168
        %v3373 = vunpack.c.0.s8 %v3372
        %v3374 = vlaneseq
        %v3375 = vshrl.u32 %v3374, 7
        %v3376 = vsub.s32 %v3373, %v3375
        %v3377 = vrot.slane %v3361, %v3376
        %v3379 = vunpack.c.l.s4 1966171168
        %v3380 = vunpack.c.0.s8 %v3379
        %v3381 = vlaneseq
        %v3382 = vshrl.u32 %v3381, 7
        %v3383 = vsub.s32 %v3380, %v3382
        %v3384 = vrot.slane %v3362, %v3383
        %v3386 = vunpack.c.l.s4 1966171168
        %v3387 = vunpack.c.0.s8 %v3386
        %v3388 = vlaneseq
        %v3389 = vshrl.u32 %v3388, 7
        %v3390 = vsub.s32 %v3387, %v3389
        %v3391 = vrot.slane %v3363, %v3390
        %v3392 = vcombine.low %v3370, %v3377
        %v3393 = vcombine.low %v3384, %v3391
        %v3395 = vunpack.c.l.s4 1966171168
        %v3396 = vunpack.c.0.s8 %v3395
        %v3397 = vlaneseq
        %v3398 = vshrl.u32 %v3397, 7
        %v3399 = vsub.s32 %v3396, %v3398
        %v3400 = vrot.slane %v3392, %v3399
        %v3402 = vunpack.c.l.s4 1966171168
        %v3403 = vunpack.c.0.s8 %v3402
        %v3404 = vlaneseq
        %v3405 = vshrl.u32 %v3404, 7
        %v3406 = vsub.s32 %v3403, %v3405
        %v3407 = vrot.slane %v3393, %v3406
        %v3408 = vcombine.low %v3400, %v3407
        %v3409 = vcombine.low %v1895, %v1899
        %v3410 = vcombine.low %v1903, %v1907
        %v3411 = vcombine.low %v1911, %v1915
        %v3412 = vcombine.low %v1919, %v1923
        %v3414 = vunpack.c.l.s4 1966171168
        %v3415 = vunpack.c.0.s8 %v3414
        %v3416 = vlaneseq
        %v3417 = vshrl.u32 %v3416, 7
        %v3418 = vsub.s32 %v3415, %v3417
        %v3419 = vrot.slane %v3409, %v3418
        %v3421 = vunpack.c.l.s4 1966171168
        %v3422 = vunpack.c.0.s8 %v3421
        %v3423 = vlaneseq
        %v3424 = vshrl.u32 %v3423, 7
        %v3425 = vsub.s32 %v3422, %v3424
        %v3426 = vrot.slane %v3410, %v3425
        %v3428 = vunpack.c.l.s4 1966171168
        %v3429 = vunpack.c.0.s8 %v3428
        %v3430 = vlaneseq
        %v3431 = vshrl.u32 %v3430, 7
        %v3432 = vsub.s32 %v3429, %v3431
        %v3433 = vrot.slane %v3411, %v3432
        %v3435 = vunpack.c.l.s4 1966171168
        %v3436 = vunpack.c.0.s8 %v3435
        %v3437 = vlaneseq
        %v3438 = vshrl.u32 %v3437, 7
        %v3439 = vsub.s32 %v3436, %v3438
        %v3440 = vrot.slane %v3412, %v3439
        %v3441 = vcombine.low %v3419, %v3426
        %v3442 = vcombine.low %v3433, %v3440
        %v3444 = vunpack.c.l.s4 1966171168
        %v3445 = vunpack.c.0.s8 %v3444
        %v3446 = vlaneseq
        %v3447 = vshrl.u32 %v3446, 7
        %v3448 = vsub.s32 %v3445, %v3447
        %v3449 = vrot.slane %v3441, %v3448
        %v3451 = vunpack.c.l.s4 1966171168
        %v3452 = vunpack.c.0.s8 %v3451
        %v3453 = vlaneseq
        %v3454 = vshrl.u32 %v3453, 7
        %v3455 = vsub.s32 %v3452, %v3454
        %v3456 = vrot.slane %v3442, %v3455
        %v3457 = vcombine.low %v3449, %v3456
        %v3458 = vcombine.low %v1927, %v1931
        %v3459 = vcombine.low %v1935, %v1939
        %v3460 = vcombine.low %v1943, %v1947
        %v3461 = vcombine.low %v1951, %v1955
        %v3463 = vunpack.c.l.s4 1966171168
        %v3464 = vunpack.c.0.s8 %v3463
        %v3465 = vlaneseq
        %v3466 = vshrl.u32 %v3465, 7
        %v3467 = vsub.s32 %v3464, %v3466
        %v3468 = vrot.slane %v3458, %v3467
        %v3470 = vunpack.c.l.s4 1966171168
        %v3471 = vunpack.c.0.s8 %v3470
        %v3472 = vlaneseq
        %v3473 = vshrl.u32 %v3472, 7
        %v3474 = vsub.s32 %v3471, %v3473
        %v3475 = vrot.slane %v3459, %v3474
        %v3477 = vunpack.c.l.s4 1966171168
        %v3478 = vunpack.c.0.s8 %v3477
        %v3479 = vlaneseq
        %v3480 = vshrl.u32 %v3479, 7
        %v3481 = vsub.s32 %v3478, %v3480
        %v3482 = vrot.slane %v3460, %v3481
        %v3484 = vunpack.c.l.s4 1966171168
        %v3485 = vunpack.c.0.s8 %v3484
        %v3486 = vlaneseq
        %v3487 = vshrl.u32 %v3486, 7
        %v3488 = vsub.s32 %v3485, %v3487
        %v3489 = vrot.slane %v3461, %v3488
        %v3490 = vcombine.low %v3468, %v3475
        %v3491 = vcombine.low %v3482, %v3489
        %v3493 = vunpack.c.l.s4 1966171168
        %v3494 = vunpack.c.0.s8 %v3493
        %v3495 = vlaneseq
        %v3496 = vshrl.u32 %v3495, 7
        %v3497 = vsub.s32 %v3494, %v3496
        %v3498 = vrot.slane %v3490, %v3497
        %v3500 = vunpack.c.l.s4 1966171168
        %v3501 = vunpack.c.0.s8 %v3500
        %v3502 = vlaneseq
        %v3503 = vshrl.u32 %v3502, 7
        %v3504 = vsub.s32 %v3501, %v3503
        %v3505 = vrot.slane %v3491, %v3504
        %v3506 = vcombine.low %v3498, %v3505
        %v3507 = vcombine.low %v1959, %v1963
        %v3508 = vcombine.low %v1967, %v1971
        %v3509 = vcombine.low %v1975, %v1979
        %v3510 = vcombine.low %v1983, %v1987
        %v3512 = vunpack.c.l.s4 1966171168
        %v3513 = vunpack.c.0.s8 %v3512
        %v3514 = vlaneseq
        %v3515 = vshrl.u32 %v3514, 7
        %v3516 = vsub.s32 %v3513, %v3515
        %v3517 = vrot.slane %v3507, %v3516
        %v3519 = vunpack.c.l.s4 1966171168
        %v3520 = vunpack.c.0.s8 %v3519
        %v3521 = vlaneseq
        %v3522 = vshrl.u32 %v3521, 7
        %v3523 = vsub.s32 %v3520, %v3522
        %v3524 = vrot.slane %v3508, %v3523
        %v3526 = vunpack.c.l.s4 1966171168
        %v3527 = vunpack.c.0.s8 %v3526
        %v3528 = vlaneseq
        %v3529 = vshrl.u32 %v3528, 7
        %v3530 = vsub.s32 %v3527, %v3529
        %v3531 = vrot.slane %v3509, %v3530
        %v3533 = vunpack.c.l.s4 1966171168
        %v3534 = vunpack.c.0.s8 %v3533
        %v3535 = vlaneseq
        %v3536 = vshrl.u32 %v3535, 7
        %v3537 = vsub.s32 %v3534, %v3536
        %v3538 = vrot.slane %v3510, %v3537
        %v3539 = vcombine.low %v3517, %v3524
        %v3540 = vcombine.low %v3531, %v3538
        %v3542 = vunpack.c.l.s4 1966171168
        %v3543 = vunpack.c.0.s8 %v3542
        %v3544 = vlaneseq
        %v3545 = vshrl.u32 %v3544, 7
        %v3546 = vsub.s32 %v3543, %v3545
        %v3547 = vrot.slane %v3539, %v3546
        %v3549 = vunpack.c.l.s4 1966171168
        %v3550 = vunpack.c.0.s8 %v3549
        %v3551 = vlaneseq
        %v3552 = vshrl.u32 %v3551, 7
        %v3553 = vsub.s32 %v3550, %v3552
        %v3554 = vrot.slane %v3540, %v3553
        %v3555 = vcombine.low %v3547, %v3554
        %3556 = vset.pattern.permute.xlu0 0
        %3557 = vperm.xlu0 %3556, %v2036
        %v3558 = vpop.permute.xlu0 %3557
        %3559 = vset.pattern.permute.xlu0 0
        %3560 = vperm.xlu0 %3559, %v2085
        %v3561 = vpop.permute.xlu0 %3560
        %3562 = vset.pattern.permute.xlu0 0
        %3563 = vperm.xlu0 %3562, %v2134
        %v3564 = vpop.permute.xlu0 %3563
        %3565 = vset.pattern.permute.xlu0 0
        %3566 = vperm.xlu0 %3565, %v2183
        %v3567 = vpop.permute.xlu0 %3566
        %3568 = vset.pattern.permute.xlu0 0
        %3569 = vperm.xlu0 %3568, %v2232
        %v3570 = vpop.permute.xlu0 %3569
        %3571 = vset.pattern.permute.xlu0 0
        %3572 = vperm.xlu0 %3571, %v2281
        %v3573 = vpop.permute.xlu0 %3572
        %3574 = vset.pattern.permute.xlu0 0
        %3575 = vperm.xlu0 %3574, %v2330
        %v3576 = vpop.permute.xlu0 %3575
        %3577 = vset.pattern.permute.xlu0 0
        %3578 = vperm.xlu0 %3577, %v2379
        %v3579 = vpop.permute.xlu0 %3578
        %3580 = vset.pattern.permute.xlu0 0
        %3581 = vperm.xlu0 %3580, %v2428
        %v3582 = vpop.permute.xlu0 %3581
        %3583 = vset.pattern.permute.xlu0 0
        %3584 = vperm.xlu0 %3583, %v2477
        %v3585 = vpop.permute.xlu0 %3584
        %3586 = vset.pattern.permute.xlu0 0
        %3587 = vperm.xlu0 %3586, %v2526
        %v3588 = vpop.permute.xlu0 %3587
        %3589 = vset.pattern.permute.xlu0 0
        %3590 = vperm.xlu0 %3589, %v2575
        %v3591 = vpop.permute.xlu0 %3590
        %3592 = vset.pattern.permute.xlu0 0
        %3593 = vperm.xlu0 %3592, %v2624
        %v3594 = vpop.permute.xlu0 %3593
        %3595 = vset.pattern.permute.xlu0 0
        %3596 = vperm.xlu0 %3595, %v2673
        %v3597 = vpop.permute.xlu0 %3596
        %3598 = vset.pattern.permute.xlu0 0
        %3599 = vperm.xlu0 %3598, %v2722
        %v3600 = vpop.permute.xlu0 %3599
        %3601 = vset.pattern.permute.xlu0 0
        %3602 = vperm.xlu0 %3601, %v2771
        %v3603 = vpop.permute.xlu0 %3602
        %3604 = vset.pattern.permute.xlu0 0
        %3605 = vperm.xlu0 %3604, %v2820
        %v3606 = vpop.permute.xlu0 %3605
        %3607 = vset.pattern.permute.xlu0 0
        %3608 = vperm.xlu0 %3607, %v2869
        %v3609 = vpop.permute.xlu0 %3608
        %3610 = vset.pattern.permute.xlu0 0
        %3611 = vperm.xlu0 %3610, %v2918
        %v3612 = vpop.permute.xlu0 %3611
        %3613 = vset.pattern.permute.xlu0 0
        %3614 = vperm.xlu0 %3613, %v2967
        %v3615 = vpop.permute.xlu0 %3614
        %3616 = vset.pattern.permute.xlu0 0
        %3617 = vperm.xlu0 %3616, %v3016
        %v3618 = vpop.permute.xlu0 %3617
        %3619 = vset.pattern.permute.xlu0 0
        %3620 = vperm.xlu0 %3619, %v3065
        %v3621 = vpop.permute.xlu0 %3620
        %3622 = vset.pattern.permute.xlu0 0
        %3623 = vperm.xlu0 %3622, %v3114
        %v3624 = vpop.permute.xlu0 %3623
        %3625 = vset.pattern.permute.xlu0 0
        %3626 = vperm.xlu0 %3625, %v3163
        %v3627 = vpop.permute.xlu0 %3626
        %3628 = vset.pattern.permute.xlu0 0
        %3629 = vperm.xlu0 %3628, %v3212
        %v3630 = vpop.permute.xlu0 %3629
        %3631 = vset.pattern.permute.xlu0 0
        %3632 = vperm.xlu0 %3631, %v3261
        %v3633 = vpop.permute.xlu0 %3632
        %3634 = vset.pattern.permute.xlu0 0
        %3635 = vperm.xlu0 %3634, %v3310
        %v3636 = vpop.permute.xlu0 %3635
        %3637 = vset.pattern.permute.xlu0 0
        %3638 = vperm.xlu0 %3637, %v3359
        %v3639 = vpop.permute.xlu0 %3638
        %3640 = vset.pattern.permute.xlu0 0
        %3641 = vperm.xlu0 %3640, %v3408
        %v3642 = vpop.permute.xlu0 %3641
        %3643 = vset.pattern.permute.xlu0 0
        %3644 = vperm.xlu0 %3643, %v3457
        %v3645 = vpop.permute.xlu0 %3644
        %3646 = vset.pattern.permute.xlu0 0
        %3647 = vperm.xlu0 %3646, %v3506
        %v3648 = vpop.permute.xlu0 %3647
        %3649 = vset.pattern.permute.xlu0 0
        %3650 = vperm.xlu0 %3649, %v3555
        %v3651 = vpop.permute.xlu0 %3650
        %v3652 = vlaneseq
        %v3653 = vand.u32 %v3652, 127
        %v3654 = vlaneseq
        %v3655 = vshrl.u32 %v3654, 7
        %v3656 = vsub.s32 %v3653, %v3655
        %v3657 = vrot.slane %v3558, %v3656
        %v3658 = vadd.s32 %v3653, 4294967288
        %v3659 = vlaneseq
        %v3660 = vshrl.u32 %v3659, 7
        %v3661 = vsub.s32 %v3658, %v3660
        %v3662 = vrot.slane %v3561, %v3661
        %vm3663 = vcmask 130112
        %v3664 = vsel %vm3663, %v3662, %v3657
        %v3665 = vadd.s32 %v3653, 4294967280
        %v3666 = vlaneseq
        %v3667 = vshrl.u32 %v3666, 7
        %v3668 = vsub.s32 %v3665, %v3667
        %v3669 = vrot.slane %v3564, %v3668
        %vm3670 = vcmask 195712
        %v3671 = vsel %vm3670, %v3669, %v3664
        %v3672 = vadd.s32 %v3653, 4294967272
        %v3673 = vlaneseq
        %v3674 = vshrl.u32 %v3673, 7
        %v3675 = vsub.s32 %v3672, %v3674
        %v3676 = vrot.slane %v3567, %v3675
        %vm3677 = vcmask 261312
        %v3678 = vsel %vm3677, %v3676, %v3671
        %v3679 = vadd.s32 %v3653, 4294967264
        %v3680 = vlaneseq
        %v3681 = vshrl.u32 %v3680, 7
        %v3682 = vsub.s32 %v3679, %v3681
        %v3683 = vrot.slane %v3570, %v3682
        %vm3684 = vcmask 326912
        %v3685 = vsel %vm3684, %v3683, %v3678
        %v3686 = vadd.s32 %v3653, 4294967256
        %v3687 = vlaneseq
        %v3688 = vshrl.u32 %v3687, 7
        %v3689 = vsub.s32 %v3686, %v3688
        %v3690 = vrot.slane %v3573, %v3689
        %vm3691 = vcmask 392512
        %v3692 = vsel %vm3691, %v3690, %v3685
        %v3693 = vadd.s32 %v3653, 4294967248
        %v3694 = vlaneseq
        %v3695 = vshrl.u32 %v3694, 7
        %v3696 = vsub.s32 %v3693, %v3695
        %v3697 = vrot.slane %v3576, %v3696
        %vm3698 = vcmask 458112
        %v3699 = vsel %vm3698, %v3697, %v3692
        %v3700 = vadd.s32 %v3653, 4294967240
        %v3701 = vlaneseq
        %v3702 = vshrl.u32 %v3701, 7
        %v3703 = vsub.s32 %v3700, %v3702
        %v3704 = vrot.slane %v3579, %v3703
        %vm3705 = vcmask 523712
        %v3706 = vsel %vm3705, %v3704, %v3699
        %v3707 = vadd.s32 %v3653, 4294967232
        %v3708 = vlaneseq
        %v3709 = vshrl.u32 %v3708, 7
        %v3710 = vsub.s32 %v3707, %v3709
        %v3711 = vrot.slane %v3582, %v3710
        %vm3712 = vcmask 589312
        %v3713 = vsel %vm3712, %v3711, %v3706
        %v3714 = vadd.s32 %v3653, 4294967224
        %v3715 = vlaneseq
        %v3716 = vshrl.u32 %v3715, 7
        %v3717 = vsub.s32 %v3714, %v3716
        %v3718 = vrot.slane %v3585, %v3717
        %vm3719 = vcmask 654912
        %v3720 = vsel %vm3719, %v3718, %v3713
        %v3721 = vadd.s32 %v3653, 4294967216
        %v3722 = vlaneseq
        %v3723 = vshrl.u32 %v3722, 7
        %v3724 = vsub.s32 %v3721, %v3723
        %v3725 = vrot.slane %v3588, %v3724
        %vm3726 = vcmask 720512
        %v3727 = vsel %vm3726, %v3725, %v3720
        %v3728 = vadd.s32 %v3653, 4294967208
        %v3729 = vlaneseq
        %v3730 = vshrl.u32 %v3729, 7
        %v3731 = vsub.s32 %v3728, %v3730
        %v3732 = vrot.slane %v3591, %v3731
        %vm3733 = vcmask 786112
        %v3734 = vsel %vm3733, %v3732, %v3727
        %v3735 = vadd.s32 %v3653, 4294967200
        %v3736 = vlaneseq
        %v3737 = vshrl.u32 %v3736, 7
        %v3738 = vsub.s32 %v3735, %v3737
        %v3739 = vrot.slane %v3594, %v3738
        %vm3740 = vcmask 851712
        %v3741 = vsel %vm3740, %v3739, %v3734
        %v3742 = vadd.s32 %v3653, 4294967192
        %v3743 = vlaneseq
        %v3744 = vshrl.u32 %v3743, 7
        %v3745 = vsub.s32 %v3742, %v3744
        %v3746 = vrot.slane %v3597, %v3745
        %vm3747 = vcmask 917312
        %v3748 = vsel %vm3747, %v3746, %v3741
        %v3749 = vadd.s32 %v3653, 4294967184
        %v3750 = vlaneseq
        %v3751 = vshrl.u32 %v3750, 7
        %v3752 = vsub.s32 %v3749, %v3751
        %v3753 = vrot.slane %v3600, %v3752
        %vm3754 = vcmask 982912
        %v3755 = vsel %vm3754, %v3753, %v3748
        %v3756 = vadd.s32 %v3653, 4294967176
        %v3757 = vlaneseq
        %v3758 = vshrl.u32 %v3757, 7
        %v3759 = vsub.s32 %v3756, %v3758
        %v3760 = vrot.slane %v3603, %v3759
        %vm3761 = vcmask 1048512
        %v3762 = vsel %vm3761, %v3760, %v3755
        %v3763 = vlaneseq
        %v3764 = vshrl.u32 %v3763, 7
        %v3765 = vsub.s32 %v3653, %v3764
        %v3766 = vrot.slane %v3606, %v3765
        %v3767 = vlaneseq
        %v3768 = vshrl.u32 %v3767, 7
        %v3769 = vsub.s32 %v3658, %v3768
        %v3770 = vrot.slane %v3609, %v3769
        %v3771 = vsel %vm3663, %v3770, %v3766
        %v3772 = vlaneseq
        %v3773 = vshrl.u32 %v3772, 7
        %v3774 = vsub.s32 %v3665, %v3773
        %v3775 = vrot.slane %v3612, %v3774
        %v3776 = vsel %vm3670, %v3775, %v3771
        %v3777 = vlaneseq
        %v3778 = vshrl.u32 %v3777, 7
        %v3779 = vsub.s32 %v3672, %v3778
        %v3780 = vrot.slane %v3615, %v3779
        %v3781 = vsel %vm3677, %v3780, %v3776
        %v3782 = vlaneseq
        %v3783 = vshrl.u32 %v3782, 7
        %v3784 = vsub.s32 %v3679, %v3783
        %v3785 = vrot.slane %v3618, %v3784
        %v3786 = vsel %vm3684, %v3785, %v3781
        %v3787 = vlaneseq
        %v3788 = vshrl.u32 %v3787, 7
        %v3789 = vsub.s32 %v3686, %v3788
        %v3790 = vrot.slane %v3621, %v3789
        %v3791 = vsel %vm3691, %v3790, %v3786
        %v3792 = vlaneseq
        %v3793 = vshrl.u32 %v3792, 7
        %v3794 = vsub.s32 %v3693, %v3793
        %v3795 = vrot.slane %v3624, %v3794
        %v3796 = vsel %vm3698, %v3795, %v3791
        %v3797 = vlaneseq
        %v3798 = vshrl.u32 %v3797, 7
        %v3799 = vsub.s32 %v3700, %v3798
        %v3800 = vrot.slane %v3627, %v3799
        %v3801 = vsel %vm3705, %v3800, %v3796
        %v3802 = vlaneseq
        %v3803 = vshrl.u32 %v3802, 7
        %v3804 = vsub.s32 %v3707, %v3803
        %v3805 = vrot.slane %v3630, %v3804
        %v3806 = vsel %vm3712, %v3805, %v3801
        %v3807 = vlaneseq
        %v3808 = vshrl.u32 %v3807, 7
        %v3809 = vsub.s32 %v3714, %v3808
        %v3810 = vrot.slane %v3633, %v3809
        %v3811 = vsel %vm3719, %v3810, %v3806
        %v3812 = vlaneseq
        %v3813 = vshrl.u32 %v3812, 7
        %v3814 = vsub.s32 %v3721, %v3813
        %v3815 = vrot.slane %v3636, %v3814
        %v3816 = vsel %vm3726, %v3815, %v3811
        %v3817 = vlaneseq
        %v3818 = vshrl.u32 %v3817, 7
        %v3819 = vsub.s32 %v3728, %v3818
        %v3820 = vrot.slane %v3639, %v3819
        %v3821 = vsel %vm3733, %v3820, %v3816
        %v3822 = vlaneseq
        %v3823 = vshrl.u32 %v3822, 7
        %v3824 = vsub.s32 %v3735, %v3823
        %v3825 = vrot.slane %v3642, %v3824
        %v3826 = vsel %vm3740, %v3825, %v3821
        %v3827 = vlaneseq
        %v3828 = vshrl.u32 %v3827, 7
        %v3829 = vsub.s32 %v3742, %v3828
        %v3830 = vrot.slane %v3645, %v3829
        %v3831 = vsel %vm3747, %v3830, %v3826
        %v3832 = vlaneseq
        %v3833 = vshrl.u32 %v3832, 7
        %v3834 = vsub.s32 %v3749, %v3833
        %v3835 = vrot.slane %v3648, %v3834
        %v3836 = vsel %vm3754, %v3835, %v3831
        %v3837 = vlaneseq
        %v3838 = vshrl.u32 %v3837, 7
        %v3839 = vsub.s32 %v3756, %v3838
        %v3840 = vrot.slane %v3651, %v3839
        %v3841 = vsel %vm3761, %v3840, %v3836
        %v3842 = vcombine.low %v3762, %v3841
        %v3844 = vunpack.c.l.s4 1966171168
        %v3845 = vunpack.c.0.s8 %v3844
        %v3846 = vlaneseq
        %v3847 = vshrl.u32 %v3846, 7
        %v3848 = vsub.s32 %v3845, %v3847
        %v3849 = vrot.slane %v3842, %v3848
        %v3851 = vunpack.c.l.s4 1966171168
        %v3852 = vunpack.c.0.s8 %v3851
        %v3853 = vlaneseq
        %v3854 = vshrl.u32 %v3853, 7
        %v3855 = vsub.s32 %v3852, %v3854
        %v3856 = vrot.slane %v3849, %v3855
        %v3858 = vlaneseq
        %vm3859 = vcmp.ge.s32.totalorder %v3858, 0
        %vm3860 = vcmp.lt.s32.totalorder %v3858, 256
        %vm3861 = vmand %vm3859, %vm3860
        %3862 = vst.msk [vmem:[%s428] sm:$0x3] %vm3861, %v3856
        %s3863 = sand.u32 %s207, 1
        %s3864 = scalar_lea.sflag [#allocation5], %s3863
        %s3865 = sand.u32 %s207, 1
        %s3866 = smul.addr %s3865, 2
        %s3867 = scalar_lea.vmem [#allocation13], %s3866
        // Predicated region
        $region69: #{tpu_custom_call.1} parent=47 // pred_check
          %p3868 = pneg %p217
        $region70: #{tpu_custom_call.1} parent=47 // pred_check_branch
          %3870 = sbr.rel (%p3868) target = $region72
        $region71: #{tpu_custom_call.1} parent=47 // pred_region
          %s3871 = smul.u32 2, %s32
          %s3873 = ssub.s32 32, 32
          %3874 = vsyncadd %s3864, %s3873
          %s3875 = smul.addr %s3871, 16
          %s3876 = scalar_lea.hbm %s7, %s3875
          %s3878 = sshll.u32 %s3867, 4
          %s3879 = int_to_ptr.vmem [resolvable:$true] %s3878
          %3881 = dma.vmem_to_hbm [thread:$0]  %s3879, 32, %s3876, %s3864
        $region72: #{tpu_custom_call.1} parent=47 // pred_fallthru
          _
      $region48: #{tpu_custom_call.1} parent=5 // pred_fallthru
        _
      %p3882 = scmp.le.s32.totalorder 2, %s27
      // Predicated region
      $region73: #{tpu_custom_call.1} parent=5 // pred_check
        %p3883 = pneg %p3882
      $region74: #{tpu_custom_call.1} parent=5 // pred_check_branch
        %3885 = sbr.rel (%p3883) target = $region76
      $region75: #{tpu_custom_call.1} parent=5 // pred_region
        %s3886 = ssub.s32 %s27, 2
        // Predicated region
        $region77: #{tpu_custom_call.1} parent=75 // pred_check
          %p3887 = pneg %p223
        $region78: #{tpu_custom_call.1} parent=75 // pred_check_branch
          %3889 = sbr.rel (%p3887) target = $region80
        $region79: #{tpu_custom_call.1} parent=75 // pred_region
          %s3890 = sand.u32 %s208, 1
          %s3891 = scalar_lea.sflag [#allocation5], %s3890
          %s3892 = sand.u32 %s208, 1
          %s3893 = smul.addr %s3892, 2
          %s3894 = scalar_lea.vmem [#allocation13], %s3893
          %3895 = dma.done %s3891, 32
        $region80: #{tpu_custom_call.1} parent=75 // pred_fallthru
          _
      $region76: #{tpu_custom_call.1} parent=5 // pred_fallthru
        _
    $region6: #{tpu_custom_call.1} parent=1 // loop_footer
      %s31 = sadd.s32 1, %s27
    $region7: #{tpu_custom_call.1} parent=1 // loop_footer_branch
      %26 = sbr.rel target = $region3
    $region8: #{tpu_custom_call.1} parent=1 // loop_exit
      _
    %3896 = vsyncpa [#allocation4], 1
    %s3897 = scalar_lea.sflag [#allocation4], 1
    %3898 = vsyncpa %s3897, 1
    %3899 = vsyncpa [#allocation8], 1
    %s3900 = scalar_lea.sflag [#allocation8], 1
    %3901 = vsyncpa %s3900, 1
    %3902 = vsyncpa [#allocation11], 1
    %s3903 = scalar_lea.sflag [#allocation11], 1
    %3904 = vsyncpa %s3903, 1
    %3905 = vsyncpa [#allocation5], 1
    %s3906 = scalar_lea.sflag [#allocation5], 1
    %3907 = vsyncpa %s3906, 1
    %3908 = vsyncpa [#allocation6], 1
    %s3909 = scalar_lea.sflag [#allocation6], 1
    %3910 = vsyncpa %s3909, 1

</llo_original>
